<compile_context>
chip_gen: v6e
topology: v6e:2x2x1
jax: 0.10.0
libtpu: 0.0.40
codegen_flags: <defaults>
</compile_context>

<pallas_src>
import functools

import jax
import jax.numpy as jnp
from jax import lax
from jax.experimental import pallas as pl
from jax.experimental.pallas import tpu as pltpu

INPUT_SIZE = 8   # "input_size" (13 in the reference; small synthetic size here)
HIDDEN = 32      # "hidden_size"
B = 2
TX = 8           # encoder (source) sequence length
TY = 8           # decoder (target) sequence length


def speech2vec_kernel(
    xsf_ref,      # (Tx*Bp, 2I) f32   fused fwd/rev encoder input, time-major flat
    ysf_ref,      # (Ty*Bp, Dp) f32   targets, lane-padded to Dp
    lmask_ref,    # (Ty*Bp, 1)  f32   loss mask (ys_mask), time-major flat
    dvalid_ref,   # (Ty, Bp, H) f32   decoder step-valid mask (t < ys_len)
    emask_ref,    # (Tx, Bp, 2H) f32  encoder step-valid mask [fwd | rev]
    encw_ref,     # (2I+2H, 8H) bf16  [wih_e ; whh_e]
    decw_ref,     # (2H+3H, W)  bf16  [wp | pad ; wih_d ; whh_d ; wh | pad]
    bias_ref,     # (4, BW)     f32   rows: b_e, bp, b_d, bh (each zero-padded)
    loss_ref,     # (1, 1)      f32
    embed_ref,    # (Bp, H)     f32
    out_ref,      # (Ty*Bp, Dp) f32
    xg_ref,       # scratch (Tx*Bp, 8H) f32 — hoisted encoder input gates
    hrows_ref,    # scratch (Ty*Bp, H)  f32 — decoder hidden rows (pad_packed)
    *,
    n_real_batch, n_real_feat,
):
    I2 = xsf_ref.shape[1]
    Tx = emask_ref.shape[0]
    Ty, Bp, H = dvalid_ref.shape
    H2, H4, H8 = 2 * H, 4 * H, 8 * H
    Dp = out_ref.shape[1]
    bf16 = jnp.bfloat16

    # ---- static weight / bias slices out of the packed buffers ----
    wih_e = encw_ref[0:I2, :]                       # (2I, 8H) bf16
    whh_e = encw_ref[I2:I2 + H2, :]                 # (2H, 8H) bf16
    wp    = decw_ref[0:H2, 0:H]                     # (2H, H)  bf16
    wih_d = decw_ref[H2:H2 + H, 0:H4]               # (H, 4H)  bf16
    whh_d = decw_ref[H2 + H:H2 + 2 * H, 0:H4]       # (H, 4H)  bf16
    wh    = decw_ref[H2 + 2 * H:H2 + 3 * H, 0:Dp]   # (H, Dp)  bf16
    b_e = bias_ref[0:1, 0:H8]                       # (1, 8H)  f32
    bp  = bias_ref[1:2, 0:H]                        # (1, H)
    b_d = bias_ref[2:3, 0:H4]                       # (1, 4H)
    bh  = bias_ref[3:4, 0:Dp]                       # (1, Dp)

    # ---- hoisted encoder input-gate matmul: ONE (Tx*Bp, 2I) @ (2I, 8H) ----
    xg_ref[...] = (jnp.dot(xsf_ref[...].astype(bf16), wih_e,
                           preferred_element_type=jnp.float32) + b_e)

    # ---- fused bidirectional encoder recurrence ----
    # State hc = [h_fwd | h_rev] (Bp, 2H), cc likewise.  Gate slab (Bp, 8H) is
    # laid out [i_f,i_r | f_f,f_r | g_f,g_r | o_f,o_r] so each gate group is a
    # contiguous 2H slice aligned with the fused state.
    def enc_step(t, carry):
        hc, cc = carry
        row0 = pl.multiple_of(t * Bp, 8)
        xg = xg_ref[pl.ds(row0, Bp), :]                                # (Bp, 8H)
        gates = xg + jnp.dot(hc.astype(bf16), whh_e,
                             preferred_element_type=jnp.float32)       # (Bp, 8H)
        sg = jax.nn.sigmoid(gates)               # one wide sigmoid over all 8H lanes
        g = jnp.tanh(gates[:, 2 * H2:3 * H2])    # 128-lane-aligned g slice
        i = sg[:, 0 * H2:1 * H2]
        f = sg[:, 1 * H2:2 * H2]
        o = sg[:, 3 * H2:4 * H2]
        cc_new = f * cc + i * g
        hc_new = o * jnp.tanh(cc_new)
        # packed-sequence semantics: only update while the step is valid.
        # Mask depends on t only -> compare is off the serial dependence chain.
        m = emask_ref[t] != 0.0                                        # (Bp, 2H)
        hc = jnp.where(m, hc_new, hc)
        cc = jnp.where(m, cc_new, cc)
        return hc, cc

    hc0 = jnp.zeros((Bp, H2), jnp.float32)
    hc, _ = lax.fori_loop(0, Tx, enc_step, (hc0, hc0), unroll=True)

    # ---- projection: embed = [h_fwd | h_rev] @ Wp^T + bp ----
    embed = jnp.dot(hc.astype(bf16), wp,
                    preferred_element_type=jnp.float32) + bp           # (Bp, H)
    embed_ref[...] = embed

    # ---- decoder LSTM: input = embed every step, h0 = embed, c0 = 0 ----
    embed_bf = embed.astype(bf16)
    # Decoder input is constant across steps -> hoist its gate contribution.
    x_gate = jnp.dot(embed_bf, wih_d,
                     preferred_element_type=jnp.float32) + b_d         # (Bp, 4H)

    h = embed
    c = jnp.zeros_like(embed)
    for t in range(Ty):                                                # static, fully unrolled
        gates = x_gate + jnp.dot(h.astype(bf16), whh_d,
                                 preferred_element_type=jnp.float32)   # (Bp, 4H)
        sg = jax.nn.sigmoid(gates)
        g = jnp.tanh(gates[:, 2 * H:3 * H])
        i = sg[:, 0 * H:1 * H]
        f = sg[:, 1 * H:2 * H]
        o = sg[:, 3 * H:4 * H]
        c_new = f * c + i * g
        h_new = o * jnp.tanh(c_new)
        m = dvalid_ref[t] != 0.0                                       # (Bp, H)
        # pad_packed: rows of finished sequences are zero in the decoder output.
        hrows_ref[t * Bp:(t + 1) * Bp, :] = jnp.where(m, h_new, 0.0)
        h = jnp.where(m, h_new, h)
        c = jnp.where(m, c_new, c)

    # ---- head: one matmul over all Ty*Bp rows + one lane-dense store ----
    h_all = hrows_ref[...]                                             # (Ty*Bp, H)
    out_flat = jnp.dot(h_all.astype(bf16), wh,
                       preferred_element_type=jnp.float32) + bh        # (Ty*Bp, Dp)
    out_ref[...] = out_flat

    # ---- masked MSE: ((sq*mask).sum(time)/mask.sum(time)).mean over real (b,d) ----
    lm = lmask_ref[...]                                                # (Ty*Bp, 1)
    diff = out_flat - ysf_ref[...]          # padded lanes: 0 - 0 = 0 -> no contribution
    sq = diff * diff * lm                                              # (Ty*Bp, Dp)
    num = jnp.zeros((Bp, Dp), jnp.float32)
    den = jnp.zeros((Bp, 1), jnp.float32)
    for t in range(Ty):                                                # static, tiny
        num = num + sq[t * Bp:(t + 1) * Bp, :]
        den = den + lm[t * Bp:(t + 1) * Bp, :]
    den = jnp.where(den > 0.0, den, 1.0)    # guard padded batch rows (den==0, num==0)
    per = num / den                                                    # (Bp, Dp)
    denom = float(n_real_batch * n_real_feat)                          # static constant
    loss_ref[...] = jnp.sum(per, keepdims=True) / denom


def init_params(key, input_size=INPUT_SIZE, hidden=HIDDEN):
    ks = list(jax.random.split(key, 16))
    s = 1.0 / (hidden ** 0.5)

    def u(k, shape):
        return jax.random.uniform(k, shape, jnp.float32, minval=-s, maxval=s)

    return {
        # encoder: bidirectional LSTM(input_size -> hidden), PyTorch param shapes
        'enc_w_ih_f': u(ks[0], (4 * hidden, input_size)),
        'enc_w_hh_f': u(ks[1], (4 * hidden, hidden)),
        'enc_b_f':    u(ks[2], (4 * hidden,)) + u(ks[3], (4 * hidden,)),   # b_ih + b_hh
        'enc_w_ih_r': u(ks[4], (4 * hidden, input_size)),
        'enc_w_hh_r': u(ks[5], (4 * hidden, hidden)),
        'enc_b_r':    u(ks[6], (4 * hidden,)) + u(ks[7], (4 * hidden,)),
        # projection: Linear(2H -> H)
        'proj_w': u(ks[8], (hidden, 2 * hidden)),
        'proj_b': u(ks[9], (hidden,)),
        # decoder: LSTM(H -> H)
        'dec_w_ih': u(ks[10], (4 * hidden, hidden)),
        'dec_w_hh': u(ks[11], (4 * hidden, hidden)),
        'dec_b':    u(ks[12], (4 * hidden,)) + u(ks[13], (4 * hidden,)),
        # head: Linear(H -> input_size)
        'head_w': u(ks[14], (input_size, hidden)),
        'head_b': u(ks[15], (input_size,)),
    }


def _fuse_enc_weights(w_f_t, w_r_t, H):
    """w_f_t / w_r_t: (in, 4H), gate blocks [i|f|g|o] along columns.
    Returns (2*in, 8H) block-structured weight with column layout
    [i_f, i_r, f_f, f_r, g_f, g_r, o_f, o_r]; row block 0 = fwd inputs,
    row block 1 = rev inputs."""
    n_in = w_f_t.shape[0]
    zeros = jnp.zeros((n_in, H), w_f_t.dtype)
    top = jnp.concatenate(
        [w_f_t[:, 0 * H:1 * H], zeros, w_f_t[:, 1 * H:2 * H], zeros,
         w_f_t[:, 2 * H:3 * H], zeros, w_f_t[:, 3 * H:4 * H], zeros], axis=1)
    bot = jnp.concatenate(
        [zeros, w_r_t[:, 0 * H:1 * H], zeros, w_r_t[:, 1 * H:2 * H],
         zeros, w_r_t[:, 2 * H:3 * H], zeros, w_r_t[:, 3 * H:4 * H]], axis=1)
    return jnp.concatenate([top, bot], axis=0)


def _fuse_enc_bias(b_f, b_r, H):
    parts = []
    for k in range(4):
        parts.append(b_f[k * H:(k + 1) * H])
        parts.append(b_r[k * H:(k + 1) * H])
    return jnp.concatenate(parts).reshape(1, -1)       # (1, 8H)


def speech2vec_forward(params, xs, xs_len, ys, ys_len, ys_mask):
    """xs: (B,TX,I), ys: (B,TY,I), ys_mask: (B,TY,1)  (PyTorch batch-first layout)."""
    Bn, Tx, I = xs.shape
    Ty = ys.shape[1]
    H = params['proj_b'].shape[0]
    Bp = ((Bn + 7) // 8) * 8              # pad batch to the f32 sublane tile
    Dp = 128                              # lane-dense head-output width (>= I)
    W = max(4 * H, Dp)                    # packed decoder/head weight lane width
    BW = max(8 * H, Dp)                   # packed bias lane width
    f32, bf16 = jnp.float32, jnp.bfloat16

    def pad_b(a, axis):
        pw = [(0, 0)] * a.ndim
        pw[axis] = (0, Bp - Bn)
        return jnp.pad(a, pw)

    xs_len = jnp.asarray(xs_len, jnp.int32)
    ys_len = jnp.asarray(ys_len, jnp.int32)
    xs_len_p = jnp.pad(xs_len, (0, Bp - Bn))        # padded rows: len 0 (state stays 0)
    ys_len_p = jnp.pad(ys_len, (0, Bp - Bn))

    # time-major, batch-padded activations
    xs_t = pad_b(jnp.transpose(xs, (1, 0, 2)).astype(f32), axis=1)        # (Tx, Bp, I)
    ys_t = pad_b(jnp.transpose(ys, (1, 0, 2)).astype(f32), axis=1)        # (Ty, Bp, I)
    # fused encoder input: [x[t] | x[Tx-1-t]] along the feature axis, flat time-major
    xs_fused = jnp.concatenate([xs_t, xs_t[::-1]], axis=2)                # (Tx, Bp, 2I)
    xs_flat = xs_fused.reshape(Tx * Bp, 2 * I)
    # targets: flat time-major, lane-padded to Dp (padded columns are 0 -> no loss)
    ys_flat = jnp.pad(ys_t.reshape(Ty * Bp, I), ((0, 0), (0, Dp - I)))    # (Ty*Bp, Dp)

    # precomputed validity masks (no per-iteration broadcast on the serial path)
    tx_idx = jnp.arange(Tx, dtype=jnp.int32)
    ty_idx = jnp.arange(Ty, dtype=jnp.int32)
    m_fwd = (tx_idx[:, None] < xs_len_p[None, :]).astype(f32)             # (Tx, Bp)
    m_rev = m_fwd[::-1]
    enc_mask = jnp.concatenate(
        [jnp.broadcast_to(m_fwd[:, :, None], (Tx, Bp, H)),
         jnp.broadcast_to(m_rev[:, :, None], (Tx, Bp, H))], axis=2)       # (Tx, Bp, 2H)
    dec_valid = jnp.broadcast_to(
        (ty_idx[:, None] < ys_len_p[None, :]).astype(f32)[:, :, None],
        (Ty, Bp, H))                                                      # (Ty, Bp, H)

    # loss mask, flattened time-major (row = t*Bp + b); padded batch rows are 0
    lmask = pad_b(jnp.transpose(ys_mask[..., 0], (1, 0)).astype(f32), axis=1)  # (Ty, Bp)
    lmask_flat = lmask.reshape(Ty * Bp, 1)

    # ---- packed parameter buffers (3 DMAs instead of 13) ----
    wih_e = _fuse_enc_weights(params['enc_w_ih_f'].T, params['enc_w_ih_r'].T, H)
    whh_e = _fuse_enc_weights(params['enc_w_hh_f'].T, params['enc_w_hh_r'].T, H)
    enc_w = jnp.concatenate([wih_e, whh_e], axis=0).astype(bf16)          # (2I+2H, 8H)

    def pad_lanes(a, width):
        return jnp.pad(a, ((0, 0), (0, width - a.shape[1])))

    wp_p   = pad_lanes(params['proj_w'].T, W)                             # (2H, W)
    wih_d  = pad_lanes(params['dec_w_ih'].T, W)                           # (H, W)
    whh_d  = pad_lanes(params['dec_w_hh'].T, W)                           # (H, W)
    wh_p   = pad_lanes(params['head_w'].T, W)                             # (H, W)  (zero cols >= I)
    dec_w = jnp.concatenate([wp_p, wih_d, whh_d, wh_p], axis=0).astype(bf16)   # (5H, W)

    b_e = _fuse_enc_bias(params['enc_b_f'], params['enc_b_r'], H)         # (1, 8H)
    bp  = params['proj_b'].reshape(1, -1)                                 # (1, H)
    b_d = params['dec_b'].reshape(1, -1)                                  # (1, 4H)
    bh  = pad_lanes(params['head_b'].reshape(1, -1), Dp)                  # (1, Dp)
    biases = jnp.concatenate(
        [pad_lanes(b_e, BW), pad_lanes(bp, BW),
         pad_lanes(b_d, BW), pad_lanes(bh, BW)], axis=0)                  # (4, BW) f32

    inputs = (xs_flat, ys_flat, lmask_flat, dec_valid, enc_mask,
              enc_w, dec_w, biases)

    out_shapes = (
        jax.ShapeDtypeStruct((1, 1), f32),              # loss
        jax.ShapeDtypeStruct((Bp, H), f32),             # embed (batch-padded)
        jax.ShapeDtypeStruct((Ty * Bp, Dp), f32),       # decoder output, flat, lane-dense
    )

    kernel = functools.partial(speech2vec_kernel,
                               n_real_batch=Bn, n_real_feat=I)

    # NOTE: gridless single-invocation kernel (whole problem fits VMEM easily).
    # If B / sequence lengths scale up, add a batch grid with
    # dimension_semantics=("parallel",) so v7x's two TensorCores both work,
    # and budget tiles against 64 MiB VMEM on v7x (not 128 MiB of v5e/v6e).
    loss, embed_p, out_flat = pl.pallas_call(
        kernel,
        out_shape=out_shapes,
        in_specs=[pl.BlockSpec(memory_space=pltpu.MemorySpace.VMEM)] * len(inputs),
        out_specs=tuple(pl.BlockSpec(memory_space=pltpu.MemorySpace.VMEM)
                        for _ in out_shapes),
        scratch_shapes=[pltpu.VMEM((Tx * Bp, 8 * H), f32),   # hoisted encoder x-gates
                        pltpu.VMEM((Ty * Bp, H), f32)],      # decoder hidden rows
    )(*inputs)

    out = jnp.transpose(out_flat[:, :I].reshape(Ty, Bp, I)[:, :Bn], (1, 0, 2))  # (B, Ty, I)
    return loss[0, 0], embed_p[:Bn], out


if __name__ == "__main__":
    key = jax.random.PRNGKey(0)
    pkey, xkey, ykey = jax.random.split(key, 3)

    params = init_params(pkey)

    xs = jax.random.normal(xkey, (B, TX, INPUT_SIZE), jnp.float32)
    ys = jax.random.normal(ykey, (B, TY, INPUT_SIZE), jnp.float32)
    xs_len = jnp.array([TX, TX - 3], jnp.int32)
    ys_len = jnp.array([TY, TY - 2], jnp.int32)
    t_idx = jnp.arange(TY)[None, :]
    ys_mask = (t_idx < ys_len[:, None]).astype(jnp.float32)[..., None]   # (B, TY, 1)

    loss, embed, out = speech2vec_forward(params, xs, xs_len, ys, ys_len, ys_mask)
    jax.block_until_ready((loss, embed, out))

    assert embed.shape == (B, HIDDEN)
    assert out.shape == (B, TY, INPUT_SIZE)
    assert loss.shape == ()
    print("KERNEL_OK")
</pallas_src>

<mosaic_0001>
module attributes {stable_mosaic.version = 11 : i64} {
  func.func @speech2vec_kernel(%arg0: memref<64x16xf32, #tpu.memory_space<vmem>>, %arg1: memref<64x128xf32, #tpu.memory_space<vmem>>, %arg2: memref<64x1xf32, #tpu.memory_space<vmem>>, %arg3: memref<8x8x32xf32, #tpu.memory_space<vmem>>, %arg4: memref<8x8x64xf32, #tpu.memory_space<vmem>>, %arg5: memref<80x256xbf16, #tpu.memory_space<vmem>>, %arg6: memref<160x128xbf16, #tpu.memory_space<vmem>>, %arg7: memref<4x256xf32, #tpu.memory_space<vmem>>, %arg8: memref<1x1xf32, #tpu.memory_space<vmem>>, %arg9: memref<8x32xf32, #tpu.memory_space<vmem>>, %arg10: memref<64x128xf32, #tpu.memory_space<vmem>>, %arg11: memref<64x256xf32, #tpu.memory_space<vmem>>, %arg12: memref<64x32xf32, #tpu.memory_space<vmem>>) attributes {dimension_semantics = [], scalar_prefetch = 0 : i64, scratch_operands = 2 : i64, tpu.core_type = #tpu.core_type<tc>} {
    %c0 = arith.constant 0 : index
    %c0_0 = arith.constant 0 : index
    %0 = vector.load %arg5[%c0, %c0_0] : memref<80x256xbf16, #tpu.memory_space<vmem>>, vector<16x256xbf16>
    %c16 = arith.constant 16 : index
    %c0_1 = arith.constant 0 : index
    %1 = vector.load %arg5[%c16, %c0_1] : memref<80x256xbf16, #tpu.memory_space<vmem>>, vector<64x256xbf16>
    %c0_2 = arith.constant 0 : index
    %c0_3 = arith.constant 0 : index
    %2 = vector.load %arg6[%c0_2, %c0_3] : memref<160x128xbf16, #tpu.memory_space<vmem>>, vector<64x32xbf16>
    %c64 = arith.constant 64 : index
    %c0_4 = arith.constant 0 : index
    %3 = vector.load %arg6[%c64, %c0_4] : memref<160x128xbf16, #tpu.memory_space<vmem>>, vector<32x128xbf16>
    %c96 = arith.constant 96 : index
    %c0_5 = arith.constant 0 : index
    %4 = vector.load %arg6[%c96, %c0_5] : memref<160x128xbf16, #tpu.memory_space<vmem>>, vector<32x128xbf16>
    %c128 = arith.constant 128 : index
    %c0_6 = arith.constant 0 : index
    %5 = vector.load %arg6[%c128, %c0_6] : memref<160x128xbf16, #tpu.memory_space<vmem>>, vector<32x128xbf16>
    %c0_7 = arith.constant 0 : index
    %c0_8 = arith.constant 0 : index
    %6 = vector.load %arg7[%c0_7, %c0_8] : memref<4x256xf32, #tpu.memory_space<vmem>>, vector<1x256xf32>
    %c1 = arith.constant 1 : index
    %c0_9 = arith.constant 0 : index
    %7 = vector.load %arg7[%c1, %c0_9] : memref<4x256xf32, #tpu.memory_space<vmem>>, vector<1x32xf32>
    %c2 = arith.constant 2 : index
    %c0_10 = arith.constant 0 : index
    %8 = vector.load %arg7[%c2, %c0_10] : memref<4x256xf32, #tpu.memory_space<vmem>>, vector<1x128xf32>
    %c3 = arith.constant 3 : index
    %c0_11 = arith.constant 0 : index
    %9 = vector.load %arg7[%c3, %c0_11] : memref<4x256xf32, #tpu.memory_space<vmem>>, vector<1x128xf32>
    %c0_12 = arith.constant 0 : index
    %c0_13 = arith.constant 0 : index
    %10 = vector.load %arg0[%c0_12, %c0_13] : memref<64x16xf32, #tpu.memory_space<vmem>>, vector<64x16xf32>
    %11 = arith.truncf %10 : vector<64x16xf32> to vector<64x16xbf16>
    %cst = arith.constant dense<0.000000e+00> : vector<64x256xf32>
    %12 = tpu.matmul %11, %0, %cst {dimension_numbers = #tpu.dot_dimension_numbers<[1], [0], [0], [1], [0, 0, 1, 1], [], []>} : vector<64x16xbf16>, vector<16x256xbf16>, vector<64x256xf32> -> vector<64x256xf32>
    %13 = vector.broadcast %6 : vector<1x256xf32> to vector<64x256xf32>
    %14 = arith.addf %12, %13 : vector<64x256xf32>
    %c0_14 = arith.constant 0 : index
    %c0_15 = arith.constant 0 : index
    %15 = vector.load %arg11[%c0_14, %c0_15] : memref<64x256xf32, #tpu.memory_space<vmem>>, vector<64x256xf32>
    tpu.vector_store %arg11[%c0_14, %c0_15], %14 {strides = array<i32>} : memref<64x256xf32, #tpu.memory_space<vmem>>, vector<64x256xf32>,
    %cst_16 = arith.constant 0.000000e+00 : f32
    %16 = vector.broadcast %cst_16 : f32 to vector<8x64xf32>
    %c0_i32 = arith.constant 0 : i32
    %c8_i32 = arith.constant 8 : i32
    %17 = arith.muli %c0_i32, %c8_i32 : i32
    %18 = tpu.assume_multiple %17, 8 : i32
    %19 = arith.index_cast %18 : i32 to index
    %c0_17 = arith.constant 0 : index
    %20 = vector.load %arg11[%19, %c0_17] : memref<64x256xf32, #tpu.memory_space<vmem>>, vector<8x256xf32>
    %21 = arith.truncf %16 : vector<8x64xf32> to vector<8x64xbf16>
    %cst_18 = arith.constant dense<0.000000e+00> : vector<8x256xf32>
    %22 = tpu.matmul %21, %1, %cst_18 {dimension_numbers = #tpu.dot_dimension_numbers<[1], [0], [0], [1], [0, 0, 1, 1], [], []>} : vector<8x64xbf16>, vector<64x256xbf16>, vector<8x256xf32> -> vector<8x256xf32>
    %23 = arith.addf %20, %22 : vector<8x256xf32>
    %24 = arith.negf %23 : vector<8x256xf32>
    %25 = math.exp %24 : vector<8x256xf32>
    %cst_19 = arith.constant 1.000000e+00 : f32
    %26 = vector.broadcast %cst_19 : f32 to vector<8x256xf32>
    %27 = arith.addf %26, %25 : vector<8x256xf32>
    %28 = arith.divf %26, %27 : vector<8x256xf32>
    %29 = vector.extract_strided_slice %23 {offsets = [0, 128], sizes = [8, 64], strides = [1, 1]} : vector<8x256xf32> to vector<8x64xf32>
    %30 = math.tanh %29 : vector<8x64xf32>
    %31 = vector.extract_strided_slice %28 {offsets = [0, 0], sizes = [8, 64], strides = [1, 1]} : vector<8x256xf32> to vector<8x64xf32>
    %32 = vector.extract_strided_slice %28 {offsets = [0, 64], sizes = [8, 64], strides = [1, 1]} : vector<8x256xf32> to vector<8x64xf32>
    %33 = vector.extract_strided_slice %28 {offsets = [0, 192], sizes = [8, 64], strides = [1, 1]} : vector<8x256xf32> to vector<8x64xf32>
    %34 = arith.mulf %32, %16 : vector<8x64xf32>
    %35 = arith.mulf %31, %30 : vector<8x64xf32>
    %36 = arith.addf %34, %35 : vector<8x64xf32>
    %37 = math.tanh %36 : vector<8x64xf32>
    %38 = arith.mulf %33, %37 : vector<8x64xf32>
    %39 = arith.index_cast %c0_i32 : i32 to index
    %c0_20 = arith.constant 0 : index
    %c0_21 = arith.constant 0 : index
    %40 = vector.load %arg4[%39, %c0_20, %c0_21] : memref<8x8x64xf32, #tpu.memory_space<vmem>>, vector<1x8x64xf32>
    %41 = vector.shape_cast %40 : vector<1x8x64xf32> to vector<8x64xf32>
    %cst_22 = arith.constant 0.000000e+00 : f32
    %42 = vector.broadcast %cst_22 : f32 to vector<8x64xf32>
    %43 = arith.cmpf one, %41, %42 : vector<8x64xf32>
    %44 = arith.select %43, %38, %16 : vector<8x64xi1>, vector<8x64xf32>
    %45 = arith.select %43, %36, %16 : vector<8x64xi1>, vector<8x64xf32>
    %c1_i32 = arith.constant 1 : i32
    %c8_i32_23 = arith.constant 8 : i32
    %46 = arith.muli %c1_i32, %c8_i32_23 : i32
    %47 = tpu.assume_multiple %46, 8 : i32
    %48 = arith.index_cast %47 : i32 to index
    %c0_24 = arith.constant 0 : index
    %49 = vector.load %arg11[%48, %c0_24] : memref<64x256xf32, #tpu.memory_space<vmem>>, vector<8x256xf32>
    %50 = arith.truncf %44 : vector<8x64xf32> to vector<8x64xbf16>
    %cst_25 = arith.constant dense<0.000000e+00> : vector<8x256xf32>
    %51 = tpu.matmul %50, %1, %cst_25 {dimension_numbers = #tpu.dot_dimension_numbers<[1], [0], [0], [1], [0, 0, 1, 1], [], []>} : vector<8x64xbf16>, vector<64x256xbf16>, vector<8x256xf32> -> vector<8x256xf32>
    %52 = arith.addf %49, %51 : vector<8x256xf32>
    %53 = arith.negf %52 : vector<8x256xf32>
    %54 = math.exp %53 : vector<8x256xf32>
    %cst_26 = arith.constant 1.000000e+00 : f32
    %55 = vector.broadcast %cst_26 : f32 to vector<8x256xf32>
    %56 = arith.addf %55, %54 : vector<8x256xf32>
    %57 = arith.divf %55, %56 : vector<8x256xf32>
    %58 = vector.extract_strided_slice %52 {offsets = [0, 128], sizes = [8, 64], strides = [1, 1]} : vector<8x256xf32> to vector<8x64xf32>
    %59 = math.tanh %58 : vector<8x64xf32>
    %60 = vector.extract_strided_slice %57 {offsets = [0, 0], sizes = [8, 64], strides = [1, 1]} : vector<8x256xf32> to vector<8x64xf32>
    %61 = vector.extract_strided_slice %57 {offsets = [0, 64], sizes = [8, 64], strides = [1, 1]} : vector<8x256xf32> to vector<8x64xf32>
    %62 = vector.extract_strided_slice %57 {offsets = [0, 192], sizes = [8, 64], strides = [1, 1]} : vector<8x256xf32> to vector<8x64xf32>
    %63 = arith.mulf %61, %45 : vector<8x64xf32>
    %64 = arith.mulf %60, %59 : vector<8x64xf32>
    %65 = arith.addf %63, %64 : vector<8x64xf32>
    %66 = math.tanh %65 : vector<8x64xf32>
    %67 = arith.mulf %62, %66 : vector<8x64xf32>
    %68 = arith.index_cast %c1_i32 : i32 to index
    %c0_27 = arith.constant 0 : index
    %c0_28 = arith.constant 0 : index
    %69 = vector.load %arg4[%68, %c0_27, %c0_28] : memref<8x8x64xf32, #tpu.memory_space<vmem>>, vector<1x8x64xf32>
    %70 = vector.shape_cast %69 : vector<1x8x64xf32> to vector<8x64xf32>
    %cst_29 = arith.constant 0.000000e+00 : f32
    %71 = vector.broadcast %cst_29 : f32 to vector<8x64xf32>
    %72 = arith.cmpf one, %70, %71 : vector<8x64xf32>
    %73 = arith.select %72, %67, %44 : vector<8x64xi1>, vector<8x64xf32>
    %74 = arith.select %72, %65, %45 : vector<8x64xi1>, vector<8x64xf32>
    %c2_i32 = arith.constant 2 : i32
    %c8_i32_30 = arith.constant 8 : i32
    %75 = arith.muli %c2_i32, %c8_i32_30 : i32
    %76 = tpu.assume_multiple %75, 8 : i32
    %77 = arith.index_cast %76 : i32 to index
    %c0_31 = arith.constant 0 : index
    %78 = vector.load %arg11[%77, %c0_31] : memref<64x256xf32, #tpu.memory_space<vmem>>, vector<8x256xf32>
    %79 = arith.truncf %73 : vector<8x64xf32> to vector<8x64xbf16>
    %cst_32 = arith.constant dense<0.000000e+00> : vector<8x256xf32>
    %80 = tpu.matmul %79, %1, %cst_32 {dimension_numbers = #tpu.dot_dimension_numbers<[1], [0], [0], [1], [0, 0, 1, 1], [], []>} : vector<8x64xbf16>, vector<64x256xbf16>, vector<8x256xf32> -> vector<8x256xf32>
    %81 = arith.addf %78, %80 : vector<8x256xf32>
    %82 = arith.negf %81 : vector<8x256xf32>
    %83 = math.exp %82 : vector<8x256xf32>
    %cst_33 = arith.constant 1.000000e+00 : f32
    %84 = vector.broadcast %cst_33 : f32 to vector<8x256xf32>
    %85 = arith.addf %84, %83 : vector<8x256xf32>
    %86 = arith.divf %84, %85 : vector<8x256xf32>
    %87 = vector.extract_strided_slice %81 {offsets = [0, 128], sizes = [8, 64], strides = [1, 1]} : vector<8x256xf32> to vector<8x64xf32>
    %88 = math.tanh %87 : vector<8x64xf32>
    %89 = vector.extract_strided_slice %86 {offsets = [0, 0], sizes = [8, 64], strides = [1, 1]} : vector<8x256xf32> to vector<8x64xf32>
    %90 = vector.extract_strided_slice %86 {offsets = [0, 64], sizes = [8, 64], strides = [1, 1]} : vector<8x256xf32> to vector<8x64xf32>
    %91 = vector.extract_strided_slice %86 {offsets = [0, 192], sizes = [8, 64], strides = [1, 1]} : vector<8x256xf32> to vector<8x64xf32>
    %92 = arith.mulf %90, %74 : vector<8x64xf32>
    %93 = arith.mulf %89, %88 : vector<8x64xf32>
    %94 = arith.addf %92, %93 : vector<8x64xf32>
    %95 = math.tanh %94 : vector<8x64xf32>
    %96 = arith.mulf %91, %95 : vector<8x64xf32>
    %97 = arith.index_cast %c2_i32 : i32 to index
    %c0_34 = arith.constant 0 : index
    %c0_35 = arith.constant 0 : index
    %98 = vector.load %arg4[%97, %c0_34, %c0_35] : memref<8x8x64xf32, #tpu.memory_space<vmem>>, vector<1x8x64xf32>
    %99 = vector.shape_cast %98 : vector<1x8x64xf32> to vector<8x64xf32>
    %cst_36 = arith.constant 0.000000e+00 : f32
    %100 = vector.broadcast %cst_36 : f32 to vector<8x64xf32>
    %101 = arith.cmpf one, %99, %100 : vector<8x64xf32>
    %102 = arith.select %101, %96, %73 : vector<8x64xi1>, vector<8x64xf32>
    %103 = arith.select %101, %94, %74 : vector<8x64xi1>, vector<8x64xf32>
    %c3_i32 = arith.constant 3 : i32
    %c8_i32_37 = arith.constant 8 : i32
    %104 = arith.muli %c3_i32, %c8_i32_37 : i32
    %105 = tpu.assume_multiple %104, 8 : i32
    %106 = arith.index_cast %105 : i32 to index
    %c0_38 = arith.constant 0 : index
    %107 = vector.load %arg11[%106, %c0_38] : memref<64x256xf32, #tpu.memory_space<vmem>>, vector<8x256xf32>
    %108 = arith.truncf %102 : vector<8x64xf32> to vector<8x64xbf16>
    %cst_39 = arith.constant dense<0.000000e+00> : vector<8x256xf32>
    %109 = tpu.matmul %108, %1, %cst_39 {dimension_numbers = #tpu.dot_dimension_numbers<[1], [0], [0], [1], [0, 0, 1, 1], [], []>} : vector<8x64xbf16>, vector<64x256xbf16>, vector<8x256xf32> -> vector<8x256xf32>
    %110 = arith.addf %107, %109 : vector<8x256xf32>
    %111 = arith.negf %110 : vector<8x256xf32>
    %112 = math.exp %111 : vector<8x256xf32>
    %cst_40 = arith.constant 1.000000e+00 : f32
    %113 = vector.broadcast %cst_40 : f32 to vector<8x256xf32>
    %114 = arith.addf %113, %112 : vector<8x256xf32>
    %115 = arith.divf %113, %114 : vector<8x256xf32>
    %116 = vector.extract_strided_slice %110 {offsets = [0, 128], sizes = [8, 64], strides = [1, 1]} : vector<8x256xf32> to vector<8x64xf32>
    %117 = math.tanh %116 : vector<8x64xf32>
    %118 = vector.extract_strided_slice %115 {offsets = [0, 0], sizes = [8, 64], strides = [1, 1]} : vector<8x256xf32> to vector<8x64xf32>
    %119 = vector.extract_strided_slice %115 {offsets = [0, 64], sizes = [8, 64], strides = [1, 1]} : vector<8x256xf32> to vector<8x64xf32>
    %120 = vector.extract_strided_slice %115 {offsets = [0, 192], sizes = [8, 64], strides = [1, 1]} : vector<8x256xf32> to vector<8x64xf32>
    %121 = arith.mulf %119, %103 : vector<8x64xf32>
    %122 = arith.mulf %118, %117 : vector<8x64xf32>
    %123 = arith.addf %121, %122 : vector<8x64xf32>
    %124 = math.tanh %123 : vector<8x64xf32>
    %125 = arith.mulf %120, %124 : vector<8x64xf32>
    %126 = arith.index_cast %c3_i32 : i32 to index
    %c0_41 = arith.constant 0 : index
    %c0_42 = arith.constant 0 : index
    %127 = vector.load %arg4[%126, %c0_41, %c0_42] : memref<8x8x64xf32, #tpu.memory_space<vmem>>, vector<1x8x64xf32>
    %128 = vector.shape_cast %127 : vector<1x8x64xf32> to vector<8x64xf32>
    %cst_43 = arith.constant 0.000000e+00 : f32
    %129 = vector.broadcast %cst_43 : f32 to vector<8x64xf32>
    %130 = arith.cmpf one, %128, %129 : vector<8x64xf32>
    %131 = arith.select %130, %125, %102 : vector<8x64xi1>, vector<8x64xf32>
    %132 = arith.select %130, %123, %103 : vector<8x64xi1>, vector<8x64xf32>
    %c4_i32 = arith.constant 4 : i32
    %c8_i32_44 = arith.constant 8 : i32
    %133 = arith.muli %c4_i32, %c8_i32_44 : i32
    %134 = tpu.assume_multiple %133, 8 : i32
    %135 = arith.index_cast %134 : i32 to index
    %c0_45 = arith.constant 0 : index
    %136 = vector.load %arg11[%135, %c0_45] : memref<64x256xf32, #tpu.memory_space<vmem>>, vector<8x256xf32>
    %137 = arith.truncf %131 : vector<8x64xf32> to vector<8x64xbf16>
    %cst_46 = arith.constant dense<0.000000e+00> : vector<8x256xf32>
    %138 = tpu.matmul %137, %1, %cst_46 {dimension_numbers = #tpu.dot_dimension_numbers<[1], [0], [0], [1], [0, 0, 1, 1], [], []>} : vector<8x64xbf16>, vector<64x256xbf16>, vector<8x256xf32> -> vector<8x256xf32>
    %139 = arith.addf %136, %138 : vector<8x256xf32>
    %140 = arith.negf %139 : vector<8x256xf32>
    %141 = math.exp %140 : vector<8x256xf32>
    %cst_47 = arith.constant 1.000000e+00 : f32
    %142 = vector.broadcast %cst_47 : f32 to vector<8x256xf32>
    %143 = arith.addf %142, %141 : vector<8x256xf32>
    %144 = arith.divf %142, %143 : vector<8x256xf32>
    %145 = vector.extract_strided_slice %139 {offsets = [0, 128], sizes = [8, 64], strides = [1, 1]} : vector<8x256xf32> to vector<8x64xf32>
    %146 = math.tanh %145 : vector<8x64xf32>
    %147 = vector.extract_strided_slice %144 {offsets = [0, 0], sizes = [8, 64], strides = [1, 1]} : vector<8x256xf32> to vector<8x64xf32>
    %148 = vector.extract_strided_slice %144 {offsets = [0, 64], sizes = [8, 64], strides = [1, 1]} : vector<8x256xf32> to vector<8x64xf32>
    %149 = vector.extract_strided_slice %144 {offsets = [0, 192], sizes = [8, 64], strides = [1, 1]} : vector<8x256xf32> to vector<8x64xf32>
    %150 = arith.mulf %148, %132 : vector<8x64xf32>
    %151 = arith.mulf %147, %146 : vector<8x64xf32>
    %152 = arith.addf %150, %151 : vector<8x64xf32>
    %153 = math.tanh %152 : vector<8x64xf32>
    %154 = arith.mulf %149, %153 : vector<8x64xf32>
    %155 = arith.index_cast %c4_i32 : i32 to index
    %c0_48 = arith.constant 0 : index
    %c0_49 = arith.constant 0 : index
    %156 = vector.load %arg4[%155, %c0_48, %c0_49] : memref<8x8x64xf32, #tpu.memory_space<vmem>>, vector<1x8x64xf32>
    %157 = vector.shape_cast %156 : vector<1x8x64xf32> to vector<8x64xf32>
    %cst_50 = arith.constant 0.000000e+00 : f32
    %158 = vector.broadcast %cst_50 : f32 to vector<8x64xf32>
    %159 = arith.cmpf one, %157, %158 : vector<8x64xf32>
    %160 = arith.select %159, %154, %131 : vector<8x64xi1>, vector<8x64xf32>
    %161 = arith.select %159, %152, %132 : vector<8x64xi1>, vector<8x64xf32>
    %c5_i32 = arith.constant 5 : i32
    %c8_i32_51 = arith.constant 8 : i32
    %162 = arith.muli %c5_i32, %c8_i32_51 : i32
    %163 = tpu.assume_multiple %162, 8 : i32
    %164 = arith.index_cast %163 : i32 to index
    %c0_52 = arith.constant 0 : index
    %165 = vector.load %arg11[%164, %c0_52] : memref<64x256xf32, #tpu.memory_space<vmem>>, vector<8x256xf32>
    %166 = arith.truncf %160 : vector<8x64xf32> to vector<8x64xbf16>
    %cst_53 = arith.constant dense<0.000000e+00> : vector<8x256xf32>
    %167 = tpu.matmul %166, %1, %cst_53 {dimension_numbers = #tpu.dot_dimension_numbers<[1], [0], [0], [1], [0, 0, 1, 1], [], []>} : vector<8x64xbf16>, vector<64x256xbf16>, vector<8x256xf32> -> vector<8x256xf32>
    %168 = arith.addf %165, %167 : vector<8x256xf32>
    %169 = arith.negf %168 : vector<8x256xf32>
    %170 = math.exp %169 : vector<8x256xf32>
    %cst_54 = arith.constant 1.000000e+00 : f32
    %171 = vector.broadcast %cst_54 : f32 to vector<8x256xf32>
    %172 = arith.addf %171, %170 : vector<8x256xf32>
    %173 = arith.divf %171, %172 : vector<8x256xf32>
    %174 = vector.extract_strided_slice %168 {offsets = [0, 128], sizes = [8, 64], strides = [1, 1]} : vector<8x256xf32> to vector<8x64xf32>
    %175 = math.tanh %174 : vector<8x64xf32>
    %176 = vector.extract_strided_slice %173 {offsets = [0, 0], sizes = [8, 64], strides = [1, 1]} : vector<8x256xf32> to vector<8x64xf32>
    %177 = vector.extract_strided_slice %173 {offsets = [0, 64], sizes = [8, 64], strides = [1, 1]} : vector<8x256xf32> to vector<8x64xf32>
    %178 = vector.extract_strided_slice %173 {offsets = [0, 192], sizes = [8, 64], strides = [1, 1]} : vector<8x256xf32> to vector<8x64xf32>
    %179 = arith.mulf %177, %161 : vector<8x64xf32>
    %180 = arith.mulf %176, %175 : vector<8x64xf32>
    %181 = arith.addf %179, %180 : vector<8x64xf32>
    %182 = math.tanh %181 : vector<8x64xf32>
    %183 = arith.mulf %178, %182 : vector<8x64xf32>
    %184 = arith.index_cast %c5_i32 : i32 to index
    %c0_55 = arith.constant 0 : index
    %c0_56 = arith.constant 0 : index
    %185 = vector.load %arg4[%184, %c0_55, %c0_56] : memref<8x8x64xf32, #tpu.memory_space<vmem>>, vector<1x8x64xf32>
    %186 = vector.shape_cast %185 : vector<1x8x64xf32> to vector<8x64xf32>
    %cst_57 = arith.constant 0.000000e+00 : f32
    %187 = vector.broadcast %cst_57 : f32 to vector<8x64xf32>
    %188 = arith.cmpf one, %186, %187 : vector<8x64xf32>
    %189 = arith.select %188, %183, %160 : vector<8x64xi1>, vector<8x64xf32>
    %190 = arith.select %188, %181, %161 : vector<8x64xi1>, vector<8x64xf32>
    %c6_i32 = arith.constant 6 : i32
    %c8_i32_58 = arith.constant 8 : i32
    %191 = arith.muli %c6_i32, %c8_i32_58 : i32
    %192 = tpu.assume_multiple %191, 8 : i32
    %193 = arith.index_cast %192 : i32 to index
    %c0_59 = arith.constant 0 : index
    %194 = vector.load %arg11[%193, %c0_59] : memref<64x256xf32, #tpu.memory_space<vmem>>, vector<8x256xf32>
    %195 = arith.truncf %189 : vector<8x64xf32> to vector<8x64xbf16>
    %cst_60 = arith.constant dense<0.000000e+00> : vector<8x256xf32>
    %196 = tpu.matmul %195, %1, %cst_60 {dimension_numbers = #tpu.dot_dimension_numbers<[1], [0], [0], [1], [0, 0, 1, 1], [], []>} : vector<8x64xbf16>, vector<64x256xbf16>, vector<8x256xf32> -> vector<8x256xf32>
    %197 = arith.addf %194, %196 : vector<8x256xf32>
    %198 = arith.negf %197 : vector<8x256xf32>
    %199 = math.exp %198 : vector<8x256xf32>
    %cst_61 = arith.constant 1.000000e+00 : f32
    %200 = vector.broadcast %cst_61 : f32 to vector<8x256xf32>
    %201 = arith.addf %200, %199 : vector<8x256xf32>
    %202 = arith.divf %200, %201 : vector<8x256xf32>
    %203 = vector.extract_strided_slice %197 {offsets = [0, 128], sizes = [8, 64], strides = [1, 1]} : vector<8x256xf32> to vector<8x64xf32>
    %204 = math.tanh %203 : vector<8x64xf32>
    %205 = vector.extract_strided_slice %202 {offsets = [0, 0], sizes = [8, 64], strides = [1, 1]} : vector<8x256xf32> to vector<8x64xf32>
    %206 = vector.extract_strided_slice %202 {offsets = [0, 64], sizes = [8, 64], strides = [1, 1]} : vector<8x256xf32> to vector<8x64xf32>
    %207 = vector.extract_strided_slice %202 {offsets = [0, 192], sizes = [8, 64], strides = [1, 1]} : vector<8x256xf32> to vector<8x64xf32>
    %208 = arith.mulf %206, %190 : vector<8x64xf32>
    %209 = arith.mulf %205, %204 : vector<8x64xf32>
    %210 = arith.addf %208, %209 : vector<8x64xf32>
    %211 = math.tanh %210 : vector<8x64xf32>
    %212 = arith.mulf %207, %211 : vector<8x64xf32>
    %213 = arith.index_cast %c6_i32 : i32 to index
    %c0_62 = arith.constant 0 : index
    %c0_63 = arith.constant 0 : index
    %214 = vector.load %arg4[%213, %c0_62, %c0_63] : memref<8x8x64xf32, #tpu.memory_space<vmem>>, vector<1x8x64xf32>
    %215 = vector.shape_cast %214 : vector<1x8x64xf32> to vector<8x64xf32>
    %cst_64 = arith.constant 0.000000e+00 : f32
    %216 = vector.broadcast %cst_64 : f32 to vector<8x64xf32>
    %217 = arith.cmpf one, %215, %216 : vector<8x64xf32>
    %218 = arith.select %217, %212, %189 : vector<8x64xi1>, vector<8x64xf32>
    %219 = arith.select %217, %210, %190 : vector<8x64xi1>, vector<8x64xf32>
    %c7_i32 = arith.constant 7 : i32
    %c8_i32_65 = arith.constant 8 : i32
    %220 = arith.muli %c7_i32, %c8_i32_65 : i32
    %221 = tpu.assume_multiple %220, 8 : i32
    %222 = arith.index_cast %221 : i32 to index
    %c0_66 = arith.constant 0 : index
    %223 = vector.load %arg11[%222, %c0_66] : memref<64x256xf32, #tpu.memory_space<vmem>>, vector<8x256xf32>
    %224 = arith.truncf %218 : vector<8x64xf32> to vector<8x64xbf16>
    %cst_67 = arith.constant dense<0.000000e+00> : vector<8x256xf32>
    %225 = tpu.matmul %224, %1, %cst_67 {dimension_numbers = #tpu.dot_dimension_numbers<[1], [0], [0], [1], [0, 0, 1, 1], [], []>} : vector<8x64xbf16>, vector<64x256xbf16>, vector<8x256xf32> -> vector<8x256xf32>
    %226 = arith.addf %223, %225 : vector<8x256xf32>
    %227 = arith.negf %226 : vector<8x256xf32>
    %228 = math.exp %227 : vector<8x256xf32>
    %cst_68 = arith.constant 1.000000e+00 : f32
    %229 = vector.broadcast %cst_68 : f32 to vector<8x256xf32>
    %230 = arith.addf %229, %228 : vector<8x256xf32>
    %231 = arith.divf %229, %230 : vector<8x256xf32>
    %232 = vector.extract_strided_slice %226 {offsets = [0, 128], sizes = [8, 64], strides = [1, 1]} : vector<8x256xf32> to vector<8x64xf32>
    %233 = math.tanh %232 : vector<8x64xf32>
    %234 = vector.extract_strided_slice %231 {offsets = [0, 0], sizes = [8, 64], strides = [1, 1]} : vector<8x256xf32> to vector<8x64xf32>
    %235 = vector.extract_strided_slice %231 {offsets = [0, 64], sizes = [8, 64], strides = [1, 1]} : vector<8x256xf32> to vector<8x64xf32>
    %236 = vector.extract_strided_slice %231 {offsets = [0, 192], sizes = [8, 64], strides = [1, 1]} : vector<8x256xf32> to vector<8x64xf32>
    %237 = arith.mulf %235, %219 : vector<8x64xf32>
    %238 = arith.mulf %234, %233 : vector<8x64xf32>
    %239 = arith.addf %237, %238 : vector<8x64xf32>
    %240 = math.tanh %239 : vector<8x64xf32>
    %241 = arith.mulf %236, %240 : vector<8x64xf32>
    %242 = arith.index_cast %c7_i32 : i32 to index
    %c0_69 = arith.constant 0 : index
    %c0_70 = arith.constant 0 : index
    %243 = vector.load %arg4[%242, %c0_69, %c0_70] : memref<8x8x64xf32, #tpu.memory_space<vmem>>, vector<1x8x64xf32>
    %244 = vector.shape_cast %243 : vector<1x8x64xf32> to vector<8x64xf32>
    %cst_71 = arith.constant 0.000000e+00 : f32
    %245 = vector.broadcast %cst_71 : f32 to vector<8x64xf32>
    %246 = arith.cmpf one, %244, %245 : vector<8x64xf32>
    %247 = arith.select %246, %241, %218 : vector<8x64xi1>, vector<8x64xf32>
    %248 = arith.select %246, %239, %219 : vector<8x64xi1>, vector<8x64xf32>
    %c8_i32_72 = arith.constant 8 : i32
    %249 = arith.truncf %247 : vector<8x64xf32> to vector<8x64xbf16>
    %cst_73 = arith.constant dense<0.000000e+00> : vector<8x32xf32>
    %250 = tpu.matmul %249, %2, %cst_73 {dimension_numbers = #tpu.dot_dimension_numbers<[1], [0], [0], [1], [0, 0, 1, 1], [], []>} : vector<8x64xbf16>, vector<64x32xbf16>, vector<8x32xf32> -> vector<8x32xf32>
    %251 = vector.broadcast %7 : vector<1x32xf32> to vector<8x32xf32>
    %252 = arith.addf %250, %251 : vector<8x32xf32>
    %c0_74 = arith.constant 0 : index
    %c0_75 = arith.constant 0 : index
    %253 = vector.load %arg9[%c0_74, %c0_75] : memref<8x32xf32, #tpu.memory_space<vmem>>, vector<8x32xf32>
    tpu.vector_store %arg9[%c0_74, %c0_75], %252 {strides = array<i32>} : memref<8x32xf32, #tpu.memory_space<vmem>>, vector<8x32xf32>,
    %254 = arith.truncf %252 : vector<8x32xf32> to vector<8x32xbf16>
    %cst_76 = arith.constant dense<0.000000e+00> : vector<8x128xf32>
    %255 = tpu.matmul %254, %3, %cst_76 {dimension_numbers = #tpu.dot_dimension_numbers<[1], [0], [0], [1], [0, 0, 1, 1], [], []>} : vector<8x32xbf16>, vector<32x128xbf16>, vector<8x128xf32> -> vector<8x128xf32>
    %256 = vector.broadcast %8 : vector<1x128xf32> to vector<8x128xf32>
    %257 = arith.addf %255, %256 : vector<8x128xf32>
    %cst_77 = arith.constant 0.000000e+00 : f32
    %258 = vector.broadcast %cst_77 : f32 to vector<8x32xf32>
    %259 = arith.truncf %252 : vector<8x32xf32> to vector<8x32xbf16>
    %cst_78 = arith.constant dense<0.000000e+00> : vector<8x128xf32>
    %260 = tpu.matmul %259, %4, %cst_78 {dimension_numbers = #tpu.dot_dimension_numbers<[1], [0], [0], [1], [0, 0, 1, 1], [], []>} : vector<8x32xbf16>, vector<32x128xbf16>, vector<8x128xf32> -> vector<8x128xf32>
    %261 = arith.addf %257, %260 : vector<8x128xf32>
    %262 = arith.negf %261 : vector<8x128xf32>
    %263 = math.exp %262 : vector<8x128xf32>
    %cst_79 = arith.constant 1.000000e+00 : f32
    %264 = vector.broadcast %cst_79 : f32 to vector<8x128xf32>
    %265 = arith.addf %264, %263 : vector<8x128xf32>
    %266 = arith.divf %264, %265 : vector<8x128xf32>
    %267 = vector.extract_strided_slice %261 {offsets = [0, 64], sizes = [8, 32], strides = [1, 1]} : vector<8x128xf32> to vector<8x32xf32>
    %268 = math.tanh %267 : vector<8x32xf32>
    %269 = vector.extract_strided_slice %266 {offsets = [0, 0], sizes = [8, 32], strides = [1, 1]} : vector<8x128xf32> to vector<8x32xf32>
    %270 = vector.extract_strided_slice %266 {offsets = [0, 32], sizes = [8, 32], strides = [1, 1]} : vector<8x128xf32> to vector<8x32xf32>
    %271 = vector.extract_strided_slice %266 {offsets = [0, 96], sizes = [8, 32], strides = [1, 1]} : vector<8x128xf32> to vector<8x32xf32>
    %272 = arith.mulf %270, %258 : vector<8x32xf32>
    %273 = arith.mulf %269, %268 : vector<8x32xf32>
    %274 = arith.addf %272, %273 : vector<8x32xf32>
    %275 = math.tanh %274 : vector<8x32xf32>
    %276 = arith.mulf %271, %275 : vector<8x32xf32>
    %c0_80 = arith.constant 0 : index
    %c0_81 = arith.constant 0 : index
    %c0_82 = arith.constant 0 : index
    %277 = vector.load %arg3[%c0_80, %c0_81, %c0_82] : memref<8x8x32xf32, #tpu.memory_space<vmem>>, vector<1x8x32xf32>
    %278 = vector.shape_cast %277 : vector<1x8x32xf32> to vector<8x32xf32>
    %cst_83 = arith.constant 0.000000e+00 : f32
    %279 = vector.broadcast %cst_83 : f32 to vector<8x32xf32>
    %280 = arith.cmpf one, %278, %279 : vector<8x32xf32>
    %cst_84 = arith.constant 0.000000e+00 : f32
    %281 = vector.broadcast %cst_84 : f32 to vector<8x32xf32>
    %282 = arith.select %280, %276, %281 : vector<8x32xi1>, vector<8x32xf32>
    %c0_85 = arith.constant 0 : index
    %c0_86 = arith.constant 0 : index
    %283 = vector.load %arg12[%c0_85, %c0_86] : memref<64x32xf32, #tpu.memory_space<vmem>>, vector<8x32xf32>
    tpu.vector_store %arg12[%c0_85, %c0_86], %282 {strides = array<i32>} : memref<64x32xf32, #tpu.memory_space<vmem>>, vector<8x32xf32>,
    %284 = arith.select %280, %276, %252 : vector<8x32xi1>, vector<8x32xf32>
    %285 = arith.select %280, %274, %258 : vector<8x32xi1>, vector<8x32xf32>
    %286 = arith.truncf %284 : vector<8x32xf32> to vector<8x32xbf16>
    %cst_87 = arith.constant dense<0.000000e+00> : vector<8x128xf32>
    %287 = tpu.matmul %286, %4, %cst_87 {dimension_numbers = #tpu.dot_dimension_numbers<[1], [0], [0], [1], [0, 0, 1, 1], [], []>} : vector<8x32xbf16>, vector<32x128xbf16>, vector<8x128xf32> -> vector<8x128xf32>
    %288 = arith.addf %257, %287 : vector<8x128xf32>
    %289 = arith.negf %288 : vector<8x128xf32>
    %290 = math.exp %289 : vector<8x128xf32>
    %cst_88 = arith.constant 1.000000e+00 : f32
    %291 = vector.broadcast %cst_88 : f32 to vector<8x128xf32>
    %292 = arith.addf %291, %290 : vector<8x128xf32>
    %293 = arith.divf %291, %292 : vector<8x128xf32>
    %294 = vector.extract_strided_slice %288 {offsets = [0, 64], sizes = [8, 32], strides = [1, 1]} : vector<8x128xf32> to vector<8x32xf32>
    %295 = math.tanh %294 : vector<8x32xf32>
    %296 = vector.extract_strided_slice %293 {offsets = [0, 0], sizes = [8, 32], strides = [1, 1]} : vector<8x128xf32> to vector<8x32xf32>
    %297 = vector.extract_strided_slice %293 {offsets = [0, 32], sizes = [8, 32], strides = [1, 1]} : vector<8x128xf32> to vector<8x32xf32>
    %298 = vector.extract_strided_slice %293 {offsets = [0, 96], sizes = [8, 32], strides = [1, 1]} : vector<8x128xf32> to vector<8x32xf32>
    %299 = arith.mulf %297, %285 : vector<8x32xf32>
    %300 = arith.mulf %296, %295 : vector<8x32xf32>
    %301 = arith.addf %299, %300 : vector<8x32xf32>
    %302 = math.tanh %301 : vector<8x32xf32>
    %303 = arith.mulf %298, %302 : vector<8x32xf32>
    %c1_89 = arith.constant 1 : index
    %c0_90 = arith.constant 0 : index
    %c0_91 = arith.constant 0 : index
    %304 = vector.load %arg3[%c1_89, %c0_90, %c0_91] : memref<8x8x32xf32, #tpu.memory_space<vmem>>, vector<1x8x32xf32>
    %305 = vector.shape_cast %304 : vector<1x8x32xf32> to vector<8x32xf32>
    %cst_92 = arith.constant 0.000000e+00 : f32
    %306 = vector.broadcast %cst_92 : f32 to vector<8x32xf32>
    %307 = arith.cmpf one, %305, %306 : vector<8x32xf32>
    %cst_93 = arith.constant 0.000000e+00 : f32
    %308 = vector.broadcast %cst_93 : f32 to vector<8x32xf32>
    %309 = arith.select %307, %303, %308 : vector<8x32xi1>, vector<8x32xf32>
    %c8 = arith.constant 8 : index
    %c0_94 = arith.constant 0 : index
    %310 = vector.load %arg12[%c8, %c0_94] : memref<64x32xf32, #tpu.memory_space<vmem>>, vector<8x32xf32>
    tpu.vector_store %arg12[%c8, %c0_94], %309 {strides = array<i32>} : memref<64x32xf32, #tpu.memory_space<vmem>>, vector<8x32xf32>,
    %311 = arith.select %307, %303, %284 : vector<8x32xi1>, vector<8x32xf32>
    %312 = arith.select %307, %301, %285 : vector<8x32xi1>, vector<8x32xf32>
    %313 = arith.truncf %311 : vector<8x32xf32> to vector<8x32xbf16>
    %cst_95 = arith.constant dense<0.000000e+00> : vector<8x128xf32>
    %314 = tpu.matmul %313, %4, %cst_95 {dimension_numbers = #tpu.dot_dimension_numbers<[1], [0], [0], [1], [0, 0, 1, 1], [], []>} : vector<8x32xbf16>, vector<32x128xbf16>, vector<8x128xf32> -> vector<8x128xf32>
    %315 = arith.addf %257, %314 : vector<8x128xf32>
    %316 = arith.negf %315 : vector<8x128xf32>
    %317 = math.exp %316 : vector<8x128xf32>
    %cst_96 = arith.constant 1.000000e+00 : f32
    %318 = vector.broadcast %cst_96 : f32 to vector<8x128xf32>
    %319 = arith.addf %318, %317 : vector<8x128xf32>
    %320 = arith.divf %318, %319 : vector<8x128xf32>
    %321 = vector.extract_strided_slice %315 {offsets = [0, 64], sizes = [8, 32], strides = [1, 1]} : vector<8x128xf32> to vector<8x32xf32>
    %322 = math.tanh %321 : vector<8x32xf32>
    %323 = vector.extract_strided_slice %320 {offsets = [0, 0], sizes = [8, 32], strides = [1, 1]} : vector<8x128xf32> to vector<8x32xf32>
    %324 = vector.extract_strided_slice %320 {offsets = [0, 32], sizes = [8, 32], strides = [1, 1]} : vector<8x128xf32> to vector<8x32xf32>
    %325 = vector.extract_strided_slice %320 {offsets = [0, 96], sizes = [8, 32], strides = [1, 1]} : vector<8x128xf32> to vector<8x32xf32>
    %326 = arith.mulf %324, %312 : vector<8x32xf32>
    %327 = arith.mulf %323, %322 : vector<8x32xf32>
    %328 = arith.addf %326, %327 : vector<8x32xf32>
    %329 = math.tanh %328 : vector<8x32xf32>
    %330 = arith.mulf %325, %329 : vector<8x32xf32>
    %c2_97 = arith.constant 2 : index
    %c0_98 = arith.constant 0 : index
    %c0_99 = arith.constant 0 : index
    %331 = vector.load %arg3[%c2_97, %c0_98, %c0_99] : memref<8x8x32xf32, #tpu.memory_space<vmem>>, vector<1x8x32xf32>
    %332 = vector.shape_cast %331 : vector<1x8x32xf32> to vector<8x32xf32>
    %cst_100 = arith.constant 0.000000e+00 : f32
    %333 = vector.broadcast %cst_100 : f32 to vector<8x32xf32>
    %334 = arith.cmpf one, %332, %333 : vector<8x32xf32>
    %cst_101 = arith.constant 0.000000e+00 : f32
    %335 = vector.broadcast %cst_101 : f32 to vector<8x32xf32>
    %336 = arith.select %334, %330, %335 : vector<8x32xi1>, vector<8x32xf32>
    %c16_102 = arith.constant 16 : index
    %c0_103 = arith.constant 0 : index
    %337 = vector.load %arg12[%c16_102, %c0_103] : memref<64x32xf32, #tpu.memory_space<vmem>>, vector<8x32xf32>
    tpu.vector_store %arg12[%c16_102, %c0_103], %336 {strides = array<i32>} : memref<64x32xf32, #tpu.memory_space<vmem>>, vector<8x32xf32>,
    %338 = arith.select %334, %330, %311 : vector<8x32xi1>, vector<8x32xf32>
    %339 = arith.select %334, %328, %312 : vector<8x32xi1>, vector<8x32xf32>
    %340 = arith.truncf %338 : vector<8x32xf32> to vector<8x32xbf16>
    %cst_104 = arith.constant dense<0.000000e+00> : vector<8x128xf32>
    %341 = tpu.matmul %340, %4, %cst_104 {dimension_numbers = #tpu.dot_dimension_numbers<[1], [0], [0], [1], [0, 0, 1, 1], [], []>} : vector<8x32xbf16>, vector<32x128xbf16>, vector<8x128xf32> -> vector<8x128xf32>
    %342 = arith.addf %257, %341 : vector<8x128xf32>
    %343 = arith.negf %342 : vector<8x128xf32>
    %344 = math.exp %343 : vector<8x128xf32>
    %cst_105 = arith.constant 1.000000e+00 : f32
    %345 = vector.broadcast %cst_105 : f32 to vector<8x128xf32>
    %346 = arith.addf %345, %344 : vector<8x128xf32>
    %347 = arith.divf %345, %346 : vector<8x128xf32>
    %348 = vector.extract_strided_slice %342 {offsets = [0, 64], sizes = [8, 32], strides = [1, 1]} : vector<8x128xf32> to vector<8x32xf32>
    %349 = math.tanh %348 : vector<8x32xf32>
    %350 = vector.extract_strided_slice %347 {offsets = [0, 0], sizes = [8, 32], strides = [1, 1]} : vector<8x128xf32> to vector<8x32xf32>
    %351 = vector.extract_strided_slice %347 {offsets = [0, 32], sizes = [8, 32], strides = [1, 1]} : vector<8x128xf32> to vector<8x32xf32>
    %352 = vector.extract_strided_slice %347 {offsets = [0, 96], sizes = [8, 32], strides = [1, 1]} : vector<8x128xf32> to vector<8x32xf32>
    %353 = arith.mulf %351, %339 : vector<8x32xf32>
    %354 = arith.mulf %350, %349 : vector<8x32xf32>
    %355 = arith.addf %353, %354 : vector<8x32xf32>
    %356 = math.tanh %355 : vector<8x32xf32>
    %357 = arith.mulf %352, %356 : vector<8x32xf32>
    %c3_106 = arith.constant 3 : index
    %c0_107 = arith.constant 0 : index
    %c0_108 = arith.constant 0 : index
    %358 = vector.load %arg3[%c3_106, %c0_107, %c0_108] : memref<8x8x32xf32, #tpu.memory_space<vmem>>, vector<1x8x32xf32>
    %359 = vector.shape_cast %358 : vector<1x8x32xf32> to vector<8x32xf32>
    %cst_109 = arith.constant 0.000000e+00 : f32
    %360 = vector.broadcast %cst_109 : f32 to vector<8x32xf32>
    %361 = arith.cmpf one, %359, %360 : vector<8x32xf32>
    %cst_110 = arith.constant 0.000000e+00 : f32
    %362 = vector.broadcast %cst_110 : f32 to vector<8x32xf32>
    %363 = arith.select %361, %357, %362 : vector<8x32xi1>, vector<8x32xf32>
    %c24 = arith.constant 24 : index
    %c0_111 = arith.constant 0 : index
    %364 = vector.load %arg12[%c24, %c0_111] : memref<64x32xf32, #tpu.memory_space<vmem>>, vector<8x32xf32>
    tpu.vector_store %arg12[%c24, %c0_111], %363 {strides = array<i32>} : memref<64x32xf32, #tpu.memory_space<vmem>>, vector<8x32xf32>,
    %365 = arith.select %361, %357, %338 : vector<8x32xi1>, vector<8x32xf32>
    %366 = arith.select %361, %355, %339 : vector<8x32xi1>, vector<8x32xf32>
    %367 = arith.truncf %365 : vector<8x32xf32> to vector<8x32xbf16>
    %cst_112 = arith.constant dense<0.000000e+00> : vector<8x128xf32>
    %368 = tpu.matmul %367, %4, %cst_112 {dimension_numbers = #tpu.dot_dimension_numbers<[1], [0], [0], [1], [0, 0, 1, 1], [], []>} : vector<8x32xbf16>, vector<32x128xbf16>, vector<8x128xf32> -> vector<8x128xf32>
    %369 = arith.addf %257, %368 : vector<8x128xf32>
    %370 = arith.negf %369 : vector<8x128xf32>
    %371 = math.exp %370 : vector<8x128xf32>
    %cst_113 = arith.constant 1.000000e+00 : f32
    %372 = vector.broadcast %cst_113 : f32 to vector<8x128xf32>
    %373 = arith.addf %372, %371 : vector<8x128xf32>
    %374 = arith.divf %372, %373 : vector<8x128xf32>
    %375 = vector.extract_strided_slice %369 {offsets = [0, 64], sizes = [8, 32], strides = [1, 1]} : vector<8x128xf32> to vector<8x32xf32>
    %376 = math.tanh %375 : vector<8x32xf32>
    %377 = vector.extract_strided_slice %374 {offsets = [0, 0], sizes = [8, 32], strides = [1, 1]} : vector<8x128xf32> to vector<8x32xf32>
    %378 = vector.extract_strided_slice %374 {offsets = [0, 32], sizes = [8, 32], strides = [1, 1]} : vector<8x128xf32> to vector<8x32xf32>
    %379 = vector.extract_strided_slice %374 {offsets = [0, 96], sizes = [8, 32], strides = [1, 1]} : vector<8x128xf32> to vector<8x32xf32>
    %380 = arith.mulf %378, %366 : vector<8x32xf32>
    %381 = arith.mulf %377, %376 : vector<8x32xf32>
    %382 = arith.addf %380, %381 : vector<8x32xf32>
    %383 = math.tanh %382 : vector<8x32xf32>
    %384 = arith.mulf %379, %383 : vector<8x32xf32>
    %c4 = arith.constant 4 : index
    %c0_114 = arith.constant 0 : index
    %c0_115 = arith.constant 0 : index
    %385 = vector.load %arg3[%c4, %c0_114, %c0_115] : memref<8x8x32xf32, #tpu.memory_space<vmem>>, vector<1x8x32xf32>
    %386 = vector.shape_cast %385 : vector<1x8x32xf32> to vector<8x32xf32>
    %cst_116 = arith.constant 0.000000e+00 : f32
    %387 = vector.broadcast %cst_116 : f32 to vector<8x32xf32>
    %388 = arith.cmpf one, %386, %387 : vector<8x32xf32>
    %cst_117 = arith.constant 0.000000e+00 : f32
    %389 = vector.broadcast %cst_117 : f32 to vector<8x32xf32>
    %390 = arith.select %388, %384, %389 : vector<8x32xi1>, vector<8x32xf32>
    %c32 = arith.constant 32 : index
    %c0_118 = arith.constant 0 : index
    %391 = vector.load %arg12[%c32, %c0_118] : memref<64x32xf32, #tpu.memory_space<vmem>>, vector<8x32xf32>
    tpu.vector_store %arg12[%c32, %c0_118], %390 {strides = array<i32>} : memref<64x32xf32, #tpu.memory_space<vmem>>, vector<8x32xf32>,
    %392 = arith.select %388, %384, %365 : vector<8x32xi1>, vector<8x32xf32>
    %393 = arith.select %388, %382, %366 : vector<8x32xi1>, vector<8x32xf32>
    %394 = arith.truncf %392 : vector<8x32xf32> to vector<8x32xbf16>
    %cst_119 = arith.constant dense<0.000000e+00> : vector<8x128xf32>
    %395 = tpu.matmul %394, %4, %cst_119 {dimension_numbers = #tpu.dot_dimension_numbers<[1], [0], [0], [1], [0, 0, 1, 1], [], []>} : vector<8x32xbf16>, vector<32x128xbf16>, vector<8x128xf32> -> vector<8x128xf32>
    %396 = arith.addf %257, %395 : vector<8x128xf32>
    %397 = arith.negf %396 : vector<8x128xf32>
    %398 = math.exp %397 : vector<8x128xf32>
    %cst_120 = arith.constant 1.000000e+00 : f32
    %399 = vector.broadcast %cst_120 : f32 to vector<8x128xf32>
    %400 = arith.addf %399, %398 : vector<8x128xf32>
    %401 = arith.divf %399, %400 : vector<8x128xf32>
    %402 = vector.extract_strided_slice %396 {offsets = [0, 64], sizes = [8, 32], strides = [1, 1]} : vector<8x128xf32> to vector<8x32xf32>
    %403 = math.tanh %402 : vector<8x32xf32>
    %404 = vector.extract_strided_slice %401 {offsets = [0, 0], sizes = [8, 32], strides = [1, 1]} : vector<8x128xf32> to vector<8x32xf32>
    %405 = vector.extract_strided_slice %401 {offsets = [0, 32], sizes = [8, 32], strides = [1, 1]} : vector<8x128xf32> to vector<8x32xf32>
    %406 = vector.extract_strided_slice %401 {offsets = [0, 96], sizes = [8, 32], strides = [1, 1]} : vector<8x128xf32> to vector<8x32xf32>
    %407 = arith.mulf %405, %393 : vector<8x32xf32>
    %408 = arith.mulf %404, %403 : vector<8x32xf32>
    %409 = arith.addf %407, %408 : vector<8x32xf32>
    %410 = math.tanh %409 : vector<8x32xf32>
    %411 = arith.mulf %406, %410 : vector<8x32xf32>
    %c5 = arith.constant 5 : index
    %c0_121 = arith.constant 0 : index
    %c0_122 = arith.constant 0 : index
    %412 = vector.load %arg3[%c5, %c0_121, %c0_122] : memref<8x8x32xf32, #tpu.memory_space<vmem>>, vector<1x8x32xf32>
    %413 = vector.shape_cast %412 : vector<1x8x32xf32> to vector<8x32xf32>
    %cst_123 = arith.constant 0.000000e+00 : f32
    %414 = vector.broadcast %cst_123 : f32 to vector<8x32xf32>
    %415 = arith.cmpf one, %413, %414 : vector<8x32xf32>
    %cst_124 = arith.constant 0.000000e+00 : f32
    %416 = vector.broadcast %cst_124 : f32 to vector<8x32xf32>
    %417 = arith.select %415, %411, %416 : vector<8x32xi1>, vector<8x32xf32>
    %c40 = arith.constant 40 : index
    %c0_125 = arith.constant 0 : index
    %418 = vector.load %arg12[%c40, %c0_125] : memref<64x32xf32, #tpu.memory_space<vmem>>, vector<8x32xf32>
    tpu.vector_store %arg12[%c40, %c0_125], %417 {strides = array<i32>} : memref<64x32xf32, #tpu.memory_space<vmem>>, vector<8x32xf32>,
    %419 = arith.select %415, %411, %392 : vector<8x32xi1>, vector<8x32xf32>
    %420 = arith.select %415, %409, %393 : vector<8x32xi1>, vector<8x32xf32>
    %421 = arith.truncf %419 : vector<8x32xf32> to vector<8x32xbf16>
    %cst_126 = arith.constant dense<0.000000e+00> : vector<8x128xf32>
    %422 = tpu.matmul %421, %4, %cst_126 {dimension_numbers = #tpu.dot_dimension_numbers<[1], [0], [0], [1], [0, 0, 1, 1], [], []>} : vector<8x32xbf16>, vector<32x128xbf16>, vector<8x128xf32> -> vector<8x128xf32>
    %423 = arith.addf %257, %422 : vector<8x128xf32>
    %424 = arith.negf %423 : vector<8x128xf32>
    %425 = math.exp %424 : vector<8x128xf32>
    %cst_127 = arith.constant 1.000000e+00 : f32
    %426 = vector.broadcast %cst_127 : f32 to vector<8x128xf32>
    %427 = arith.addf %426, %425 : vector<8x128xf32>
    %428 = arith.divf %426, %427 : vector<8x128xf32>
    %429 = vector.extract_strided_slice %423 {offsets = [0, 64], sizes = [8, 32], strides = [1, 1]} : vector<8x128xf32> to vector<8x32xf32>
    %430 = math.tanh %429 : vector<8x32xf32>
    %431 = vector.extract_strided_slice %428 {offsets = [0, 0], sizes = [8, 32], strides = [1, 1]} : vector<8x128xf32> to vector<8x32xf32>
    %432 = vector.extract_strided_slice %428 {offsets = [0, 32], sizes = [8, 32], strides = [1, 1]} : vector<8x128xf32> to vector<8x32xf32>
    %433 = vector.extract_strided_slice %428 {offsets = [0, 96], sizes = [8, 32], strides = [1, 1]} : vector<8x128xf32> to vector<8x32xf32>
    %434 = arith.mulf %432, %420 : vector<8x32xf32>
    %435 = arith.mulf %431, %430 : vector<8x32xf32>
    %436 = arith.addf %434, %435 : vector<8x32xf32>
    %437 = math.tanh %436 : vector<8x32xf32>
    %438 = arith.mulf %433, %437 : vector<8x32xf32>
    %c6 = arith.constant 6 : index
    %c0_128 = arith.constant 0 : index
    %c0_129 = arith.constant 0 : index
    %439 = vector.load %arg3[%c6, %c0_128, %c0_129] : memref<8x8x32xf32, #tpu.memory_space<vmem>>, vector<1x8x32xf32>
    %440 = vector.shape_cast %439 : vector<1x8x32xf32> to vector<8x32xf32>
    %cst_130 = arith.constant 0.000000e+00 : f32
    %441 = vector.broadcast %cst_130 : f32 to vector<8x32xf32>
    %442 = arith.cmpf one, %440, %441 : vector<8x32xf32>
    %cst_131 = arith.constant 0.000000e+00 : f32
    %443 = vector.broadcast %cst_131 : f32 to vector<8x32xf32>
    %444 = arith.select %442, %438, %443 : vector<8x32xi1>, vector<8x32xf32>
    %c48 = arith.constant 48 : index
    %c0_132 = arith.constant 0 : index
    %445 = vector.load %arg12[%c48, %c0_132] : memref<64x32xf32, #tpu.memory_space<vmem>>, vector<8x32xf32>
    tpu.vector_store %arg12[%c48, %c0_132], %444 {strides = array<i32>} : memref<64x32xf32, #tpu.memory_space<vmem>>, vector<8x32xf32>,
    %446 = arith.select %442, %438, %419 : vector<8x32xi1>, vector<8x32xf32>
    %447 = arith.select %442, %436, %420 : vector<8x32xi1>, vector<8x32xf32>
    %448 = arith.truncf %446 : vector<8x32xf32> to vector<8x32xbf16>
    %cst_133 = arith.constant dense<0.000000e+00> : vector<8x128xf32>
    %449 = tpu.matmul %448, %4, %cst_133 {dimension_numbers = #tpu.dot_dimension_numbers<[1], [0], [0], [1], [0, 0, 1, 1], [], []>} : vector<8x32xbf16>, vector<32x128xbf16>, vector<8x128xf32> -> vector<8x128xf32>
    %450 = arith.addf %257, %449 : vector<8x128xf32>
    %451 = arith.negf %450 : vector<8x128xf32>
    %452 = math.exp %451 : vector<8x128xf32>
    %cst_134 = arith.constant 1.000000e+00 : f32
    %453 = vector.broadcast %cst_134 : f32 to vector<8x128xf32>
    %454 = arith.addf %453, %452 : vector<8x128xf32>
    %455 = arith.divf %453, %454 : vector<8x128xf32>
    %456 = vector.extract_strided_slice %450 {offsets = [0, 64], sizes = [8, 32], strides = [1, 1]} : vector<8x128xf32> to vector<8x32xf32>
    %457 = math.tanh %456 : vector<8x32xf32>
    %458 = vector.extract_strided_slice %455 {offsets = [0, 0], sizes = [8, 32], strides = [1, 1]} : vector<8x128xf32> to vector<8x32xf32>
    %459 = vector.extract_strided_slice %455 {offsets = [0, 32], sizes = [8, 32], strides = [1, 1]} : vector<8x128xf32> to vector<8x32xf32>
    %460 = vector.extract_strided_slice %455 {offsets = [0, 96], sizes = [8, 32], strides = [1, 1]} : vector<8x128xf32> to vector<8x32xf32>
    %461 = arith.mulf %459, %447 : vector<8x32xf32>
    %462 = arith.mulf %458, %457 : vector<8x32xf32>
    %463 = arith.addf %461, %462 : vector<8x32xf32>
    %464 = math.tanh %463 : vector<8x32xf32>
    %465 = arith.mulf %460, %464 : vector<8x32xf32>
    %c7 = arith.constant 7 : index
    %c0_135 = arith.constant 0 : index
    %c0_136 = arith.constant 0 : index
    %466 = vector.load %arg3[%c7, %c0_135, %c0_136] : memref<8x8x32xf32, #tpu.memory_space<vmem>>, vector<1x8x32xf32>
    %467 = vector.shape_cast %466 : vector<1x8x32xf32> to vector<8x32xf32>
    %cst_137 = arith.constant 0.000000e+00 : f32
    %468 = vector.broadcast %cst_137 : f32 to vector<8x32xf32>
    %469 = arith.cmpf one, %467, %468 : vector<8x32xf32>
    %cst_138 = arith.constant 0.000000e+00 : f32
    %470 = vector.broadcast %cst_138 : f32 to vector<8x32xf32>
    %471 = arith.select %469, %465, %470 : vector<8x32xi1>, vector<8x32xf32>
    %c56 = arith.constant 56 : index
    %c0_139 = arith.constant 0 : index
    %472 = vector.load %arg12[%c56, %c0_139] : memref<64x32xf32, #tpu.memory_space<vmem>>, vector<8x32xf32>
    tpu.vector_store %arg12[%c56, %c0_139], %471 {strides = array<i32>} : memref<64x32xf32, #tpu.memory_space<vmem>>, vector<8x32xf32>,
    %c0_140 = arith.constant 0 : index
    %c0_141 = arith.constant 0 : index
    %473 = vector.load %arg12[%c0_140, %c0_141] : memref<64x32xf32, #tpu.memory_space<vmem>>, vector<64x32xf32>
    %474 = arith.truncf %473 : vector<64x32xf32> to vector<64x32xbf16>
    %cst_142 = arith.constant dense<0.000000e+00> : vector<64x128xf32>
    %475 = tpu.matmul %474, %5, %cst_142 {dimension_numbers = #tpu.dot_dimension_numbers<[1], [0], [0], [1], [0, 0, 1, 1], [], []>} : vector<64x32xbf16>, vector<32x128xbf16>, vector<64x128xf32> -> vector<64x128xf32>
    %476 = vector.broadcast %9 : vector<1x128xf32> to vector<64x128xf32>
    %477 = arith.addf %475, %476 : vector<64x128xf32>
    %c0_143 = arith.constant 0 : index
    %c0_144 = arith.constant 0 : index
    %478 = vector.load %arg10[%c0_143, %c0_144] : memref<64x128xf32, #tpu.memory_space<vmem>>, vector<64x128xf32>
    tpu.vector_store %arg10[%c0_143, %c0_144], %477 {strides = array<i32>} : memref<64x128xf32, #tpu.memory_space<vmem>>, vector<64x128xf32>,
    %c0_145 = arith.constant 0 : index
    %c0_146 = arith.constant 0 : index
    %479 = vector.load %arg2[%c0_145, %c0_146] : memref<64x1xf32, #tpu.memory_space<vmem>>, vector<64x1xf32>
    %c0_147 = arith.constant 0 : index
    %c0_148 = arith.constant 0 : index
    %480 = vector.load %arg1[%c0_147, %c0_148] : memref<64x128xf32, #tpu.memory_space<vmem>>, vector<64x128xf32>
    %481 = arith.subf %477, %480 : vector<64x128xf32>
    %482 = arith.mulf %481, %481 : vector<64x128xf32>
    %483 = vector.broadcast %479 : vector<64x1xf32> to vector<64x128xf32>
    %484 = arith.mulf %482, %483 : vector<64x128xf32>
    %cst_149 = arith.constant 0.000000e+00 : f32
    %485 = vector.broadcast %cst_149 : f32 to vector<8x128xf32>
    %cst_150 = arith.constant 0.000000e+00 : f32
    %486 = vector.broadcast %cst_150 : f32 to vector<8x1xf32>
    %487 = vector.extract_strided_slice %484 {offsets = [0, 0], sizes = [8, 128], strides = [1, 1]} : vector<64x128xf32> to vector<8x128xf32>
    %488 = arith.addf %485, %487 : vector<8x128xf32>
    %489 = vector.extract_strided_slice %479 {offsets = [0, 0], sizes = [8, 1], strides = [1, 1]} : vector<64x1xf32> to vector<8x1xf32>
    %490 = arith.addf %486, %489 : vector<8x1xf32>
    %491 = vector.extract_strided_slice %484 {offsets = [8, 0], sizes = [8, 128], strides = [1, 1]} : vector<64x128xf32> to vector<8x128xf32>
    %492 = arith.addf %488, %491 : vector<8x128xf32>
    %493 = vector.extract_strided_slice %479 {offsets = [8, 0], sizes = [8, 1], strides = [1, 1]} : vector<64x1xf32> to vector<8x1xf32>
    %494 = arith.addf %490, %493 : vector<8x1xf32>
    %495 = vector.extract_strided_slice %484 {offsets = [16, 0], sizes = [8, 128], strides = [1, 1]} : vector<64x128xf32> to vector<8x128xf32>
    %496 = arith.addf %492, %495 : vector<8x128xf32>
    %497 = vector.extract_strided_slice %479 {offsets = [16, 0], sizes = [8, 1], strides = [1, 1]} : vector<64x1xf32> to vector<8x1xf32>
    %498 = arith.addf %494, %497 : vector<8x1xf32>
    %499 = vector.extract_strided_slice %484 {offsets = [24, 0], sizes = [8, 128], strides = [1, 1]} : vector<64x128xf32> to vector<8x128xf32>
    %500 = arith.addf %496, %499 : vector<8x128xf32>
    %501 = vector.extract_strided_slice %479 {offsets = [24, 0], sizes = [8, 1], strides = [1, 1]} : vector<64x1xf32> to vector<8x1xf32>
    %502 = arith.addf %498, %501 : vector<8x1xf32>
    %503 = vector.extract_strided_slice %484 {offsets = [32, 0], sizes = [8, 128], strides = [1, 1]} : vector<64x128xf32> to vector<8x128xf32>
    %504 = arith.addf %500, %503 : vector<8x128xf32>
    %505 = vector.extract_strided_slice %479 {offsets = [32, 0], sizes = [8, 1], strides = [1, 1]} : vector<64x1xf32> to vector<8x1xf32>
    %506 = arith.addf %502, %505 : vector<8x1xf32>
    %507 = vector.extract_strided_slice %484 {offsets = [40, 0], sizes = [8, 128], strides = [1, 1]} : vector<64x128xf32> to vector<8x128xf32>
    %508 = arith.addf %504, %507 : vector<8x128xf32>
    %509 = vector.extract_strided_slice %479 {offsets = [40, 0], sizes = [8, 1], strides = [1, 1]} : vector<64x1xf32> to vector<8x1xf32>
    %510 = arith.addf %506, %509 : vector<8x1xf32>
    %511 = vector.extract_strided_slice %484 {offsets = [48, 0], sizes = [8, 128], strides = [1, 1]} : vector<64x128xf32> to vector<8x128xf32>
    %512 = arith.addf %508, %511 : vector<8x128xf32>
    %513 = vector.extract_strided_slice %479 {offsets = [48, 0], sizes = [8, 1], strides = [1, 1]} : vector<64x1xf32> to vector<8x1xf32>
    %514 = arith.addf %510, %513 : vector<8x1xf32>
    %515 = vector.extract_strided_slice %484 {offsets = [56, 0], sizes = [8, 128], strides = [1, 1]} : vector<64x128xf32> to vector<8x128xf32>
    %516 = arith.addf %512, %515 : vector<8x128xf32>
    %517 = vector.extract_strided_slice %479 {offsets = [56, 0], sizes = [8, 1], strides = [1, 1]} : vector<64x1xf32> to vector<8x1xf32>
    %518 = arith.addf %514, %517 : vector<8x1xf32>
    %cst_151 = arith.constant 0.000000e+00 : f32
    %519 = vector.broadcast %cst_151 : f32 to vector<8x1xf32>
    %520 = arith.cmpf ogt, %518, %519 : vector<8x1xf32>
    %cst_152 = arith.constant 1.000000e+00 : f32
    %521 = vector.broadcast %cst_152 : f32 to vector<8x1xf32>
    %522 = arith.select %520, %518, %521 : vector<8x1xi1>, vector<8x1xf32>
    %523 = vector.broadcast %522 : vector<8x1xf32> to vector<8x128xf32>
    %524 = arith.divf %516, %523 : vector<8x128xf32>
    %525 = vector.shape_cast %524 : vector<8x128xf32> to vector<1x8x128xf32>
    %cst_153 = arith.constant dense<0.000000e+00> : vector<1xf32>
    %526 = vector.multi_reduction <add>, %525, %cst_153 [1, 2] : vector<1x8x128xf32> to vector<1xf32>
    %527 = vector.shape_cast %526 : vector<1xf32> to vector<1x1x1xf32>
    %528 = vector.extract %527[0, 0, 0] : f32 from vector<1x1x1xf32>
    %529 = vector.broadcast %528 : f32 to vector<1x1xf32>
    %cst_154 = arith.constant 1.600000e+01 : f32
    %530 = vector.broadcast %cst_154 : f32 to vector<1x1xf32>
    %531 = arith.divf %529, %530 : vector<1x1xf32>
    %c0_155 = arith.constant 0 : index
    %c0_156 = arith.constant 0 : index
    %532 = vector.load %arg8[%c0_155, %c0_156] : memref<1x1xf32, #tpu.memory_space<vmem>>, vector<1x1xf32>
    tpu.vector_store %arg8[%c0_155, %c0_156], %531 {strides = array<i32>} : memref<1x1xf32, #tpu.memory_space<vmem>>, vector<1x1xf32>,
    return
  }
}

</mosaic_0001>

<llo_original>
// kernel: tpu_custom_call.1
$region0: #{tpu_custom_call.1}
  #allocation0 [shape = 'u32[]', space=smem, size = 0x4, offset = 0x4, fixed_abs, tag = 'smem constant byte address 0x4 - core index']
  #allocation1 [shape = 'u32[144,128]{1,0:T(1,128)}', space=vmem, size = 0x12000, scoped, tag = 'internal scratch']
  #allocation2 [shape = 'f32[64,256]{1,0:T(8,128)}', space=vmem, size = 0x10000, scoped, tag = 'scratch operand']
  #allocation3 [shape = 'f32[64,32]{1,0:T(8,128)}', space=vmem, size = 0x8000, scoped, tag = 'scratch operand']
  %s0 = inlined_call_operand.vmem [shape: f32[64,16], index: 0, kind: input, shape index: {}]
  %s1 = inlined_call_operand.vmem [shape: f32[64,128], index: 1, kind: input, shape index: {}]
  %s2 = inlined_call_operand.vmem [shape: f32[64,1], index: 2, kind: input, shape index: {}]
  %s3 = inlined_call_operand.hbm [shape: f32[8,8,32], index: 3, kind: input, shape index: {}]
  %s4 = inlined_call_operand.hbm [shape: f32[8,8,64], index: 4, kind: input, shape index: {}]
  %s5 = inlined_call_operand.vmem [shape: bf16[80,256], index: 5, kind: input, shape index: {}]
  %s6 = inlined_call_operand.hbm [shape: bf16[160,128], index: 6, kind: input, shape index: {}]
  %s7 = inlined_call_operand.vmem [shape: f32[4,256], index: 7, kind: input, shape index: {}]
  %s8 = inlined_call_operand.hbm [shape: f32[1,1], index: 8, kind: output, shape index: {0}]
  %s9 = inlined_call_operand.hbm [shape: f32[8,32], index: 9, kind: output, shape index: {1}]
  %s10 = inlined_call_operand.hbm [shape: f32[64,128], index: 10, kind: output, shape index: {2}]
  %11 = xla_tuple %s8, %s9, %s10
  %s12 = sld [smem:[#allocation0]]
  $region70: #{tpu_custom_call.1} parent=0
    _
  %s14 = ssub.s32 1, %s12
  %s15 = scalar_select 0, %s14, %s12
  $region1: #{tpu_custom_call.1} parent=0
    #allocation4 [shape = 'u8[32768]{0}', space=vmem, size = 0x8000, scoped, tag = 'input window, operand 3, single buffered']
    #allocation5 [shape = 's32[1]{0}', space=sflag, size = 0x4, scoped, tag = 'scoped memory for tpu_custom_call.1']
    #allocation6 [shape = 's32[1]{0}', space=sflag, size = 0x4, scoped, tag = 'scoped memory for tpu_custom_call.1']
    #allocation7 [shape = 'u8[32768]{0}', space=vmem, size = 0x8000, scoped, tag = 'input window, operand 4, single buffered']
    #allocation8 [shape = 's32[1]{0}', space=sflag, size = 0x4, scoped, tag = 'scoped memory for tpu_custom_call.1']
    #allocation9 [shape = 'u8[40960]{0}', space=vmem, size = 0xa000, scoped, tag = 'input window, operand 6, single buffered']
    #allocation10 [shape = 'u8[512]{0}', space=vmem, size = 0x400, scoped, tag = 'output window, operand 0, single buffered']
    #allocation11 [shape = 'u8[4096]{0}', space=vmem, size = 0x1000, scoped, tag = 'output window, operand 1, single buffered']
    #allocation12 [shape = 's32[1]{0}', space=sflag, size = 0x4, scoped, tag = 'scoped memory for tpu_custom_call.1']
    #allocation13 [shape = 'u8[32768]{0}', space=vmem, size = 0x8000, scoped, tag = 'output window, operand 2, single buffered']
    %16 = vsyncpa [#allocation5], 0
    %17 = vsyncpa [#allocation8], 0
    %18 = vsyncpa [#allocation6], 0
    %19 = vsyncpa [#allocation12], 0
    // Predicated region
    $region2: #{tpu_custom_call.1} parent=1 // pred_check
      _
    $region3: #{tpu_custom_call.1} parent=1 // pred_check_branch
      %21 = sbr.rel (0) target = $region5
    $region4: #{tpu_custom_call.1} parent=1 // pred_region
      _
    $region5: #{tpu_custom_call.1} parent=1 // pred_fallthru
      _
    // Predicated region
    $region6: #{tpu_custom_call.1} parent=1 // pred_check
      _
    $region7: #{tpu_custom_call.1} parent=1 // pred_check_branch
      %23 = sbr.rel (0) target = $region9
    $region8: #{tpu_custom_call.1} parent=1 // pred_region
      _
    $region9: #{tpu_custom_call.1} parent=1 // pred_fallthru
      _
    // Predicated region
    $region10: #{tpu_custom_call.1} parent=1 // pred_check
      _
    $region11: #{tpu_custom_call.1} parent=1 // pred_check_branch
      %25 = sbr.rel (0) target = $region13
    $region12: #{tpu_custom_call.1} parent=1 // pred_region
      _
    $region13: #{tpu_custom_call.1} parent=1 // pred_fallthru
      _
    // Predicated region
    $region14: #{tpu_custom_call.1} parent=1 // pred_check
      _
    $region15: #{tpu_custom_call.1} parent=1 // pred_check_branch
      %27 = sbr.rel (0) target = $region17
    $region16: #{tpu_custom_call.1} parent=1 // pred_region
      %s29 = ssub.s32 1024, 1024
      %30 = vsyncadd [#allocation5], %s29
      %s31 = sshll.u32 [#allocation4], 4
      %s32 = int_to_ptr.vmem [resolvable:$true] %s31
      %37 = dma.hbm_to_vmem [thread:$0]  %s3, 1024, %s32, [#allocation5], 128, 128, 8
    $region17: #{tpu_custom_call.1} parent=1 // pred_fallthru
      _
    // Predicated region
    $region18: #{tpu_custom_call.1} parent=1 // pred_check
      _
    $region19: #{tpu_custom_call.1} parent=1 // pred_check_branch
      %39 = sbr.rel (0) target = $region21
    $region20: #{tpu_custom_call.1} parent=1 // pred_region
      %s41 = ssub.s32 1024, 1024
      %42 = vsyncadd [#allocation8], %s41
      %s43 = sshll.u32 [#allocation7], 4
      %s44 = int_to_ptr.vmem [resolvable:$true] %s43
      %49 = dma.hbm_to_vmem [thread:$0]  %s4, 1024, %s44, [#allocation8], 128, 128, 8
    $region21: #{tpu_custom_call.1} parent=1 // pred_fallthru
      _
    // Predicated region
    $region22: #{tpu_custom_call.1} parent=1 // pred_check
      _
    $region23: #{tpu_custom_call.1} parent=1 // pred_check_branch
      %51 = sbr.rel (0) target = $region25
    $region24: #{tpu_custom_call.1} parent=1 // pred_region
      _
    $region25: #{tpu_custom_call.1} parent=1 // pred_fallthru
      _
    // Predicated region
    $region26: #{tpu_custom_call.1} parent=1 // pred_check
      _
    $region27: #{tpu_custom_call.1} parent=1 // pred_check_branch
      %53 = sbr.rel (0) target = $region29
    $region28: #{tpu_custom_call.1} parent=1 // pred_region
      %s55 = ssub.s32 1280, 1280
      %56 = vsyncadd [#allocation8], %s55
      %s57 = sshll.u32 [#allocation9], 4
      %s58 = int_to_ptr.vmem [resolvable:$true] %s57
      %63 = dma.hbm_to_vmem [thread:$0]  %s6, 1280, %s58, [#allocation8], 64, 64, 4
    $region29: #{tpu_custom_call.1} parent=1 // pred_fallthru
      _
    // Predicated region
    $region30: #{tpu_custom_call.1} parent=1 // pred_check
      _
    $region31: #{tpu_custom_call.1} parent=1 // pred_check_branch
      %65 = sbr.rel (0) target = $region33
    $region32: #{tpu_custom_call.1} parent=1 // pred_region
      _
    $region33: #{tpu_custom_call.1} parent=1 // pred_fallthru
      _
    // Predicated region
    $region34: #{tpu_custom_call.1} parent=1 // pred_check
      _
    $region35: #{tpu_custom_call.1} parent=1 // pred_check_branch
      %67 = sbr.rel (0) target = $region37
    $region36: #{tpu_custom_call.1} parent=1 // pred_region
      %68 = dma.done [#allocation5], 1024
    $region37: #{tpu_custom_call.1} parent=1 // pred_fallthru
      _
    // Predicated region
    $region38: #{tpu_custom_call.1} parent=1 // pred_check
      _
    $region39: #{tpu_custom_call.1} parent=1 // pred_check_branch
      %70 = sbr.rel (0) target = $region41
    $region40: #{tpu_custom_call.1} parent=1 // pred_region
      %71 = dma.done [#allocation8], 1024
    $region41: #{tpu_custom_call.1} parent=1 // pred_fallthru
      _
    // Predicated region
    $region42: #{tpu_custom_call.1} parent=1 // pred_check
      _
    $region43: #{tpu_custom_call.1} parent=1 // pred_check_branch
      %73 = sbr.rel (0) target = $region45
    $region44: #{tpu_custom_call.1} parent=1 // pred_region
      %74 = dma.done [#allocation8], 1280
    $region45: #{tpu_custom_call.1} parent=1 // pred_fallthru
      _
    %v76 = vld [vmem:[%s5] sm:$0xff]
    %v77 = vld [vmem:[%s5 + $0x8] sm:$0xff]
    %v78 = vld [vmem:[%s5 + $0x10] sm:$0xff]
    %v79 = vld [vmem:[%s5 + $0x18] sm:$0xff]
    %v80 = vld [vmem:[%s5 + $0x20] sm:$0xff]
    %v81 = vld [vmem:[%s5 + $0x28] sm:$0xff]
    %v82 = vld [vmem:[%s5 + $0x30] sm:$0xff]
    %v83 = vld [vmem:[%s5 + $0x38] sm:$0xff]
    %v84 = vld [vmem:[%s5 + $0x40] sm:$0xff]
    %v85 = vld [vmem:[%s5 + $0x48] sm:$0xff]
    %v86 = vld [vmem:[#allocation9] sm:$0xf]
    %v87 = vld [vmem:[#allocation9 + $0x4] sm:$0xf]
    %v88 = vld [vmem:[#allocation9 + $0x8] sm:$0xf]
    %v89 = vld [vmem:[#allocation9 + $0xc] sm:$0xf]
    %v90 = vld [vmem:[#allocation9 + $0x10] sm:$0xf]
    %v91 = vld [vmem:[#allocation9 + $0x14] sm:$0xf]
    %v92 = vld [vmem:[#allocation9 + $0x18] sm:$0xf]
    %v93 = vld [vmem:[#allocation9 + $0x1c] sm:$0xf]
    %v94 = vld [vmem:[#allocation9 + $0x20] sm:$0xf]
    %v95 = vld [vmem:[#allocation9 + $0x24] sm:$0xf]
    %v96 = vld [vmem:[#allocation9 + $0x28] sm:$0xf]
    %v97 = vld [vmem:[#allocation9 + $0x2c] sm:$0xf]
    %v98 = vld [vmem:[#allocation9 + $0x30] sm:$0xf]
    %v99 = vld [vmem:[#allocation9 + $0x34] sm:$0xf]
    %v100 = vld [vmem:[#allocation9 + $0x38] sm:$0xf]
    %v101 = vld [vmem:[#allocation9 + $0x3c] sm:$0xf]
    %v102 = vld [vmem:[#allocation9 + $0x40] sm:$0xf]
    %v103 = vld [vmem:[#allocation9 + $0x44] sm:$0xf]
    %v104 = vld [vmem:[#allocation9 + $0x48] sm:$0xf]
    %v105 = vld [vmem:[#allocation9 + $0x4c] sm:$0xf]
    %v106 = vld [vmem:[%s7] ss:$4 sm:$0x3]
    %v107 = vld [vmem:[%s7 + $0x1] sm:$0x1]
    %v108 = vld [vmem:[%s7 + $0x2] sm:$0x1]
    %v109 = vld [vmem:[%s7 + $0x3] sm:$0x1]
    %v110 = vld [vmem:[%s0] sm:$0xff]
    %v111 = vld [vmem:[%s0 + $0x8] sm:$0xff]
    %v112 = vld [vmem:[%s0 + $0x10] sm:$0xff]
    %v113 = vld [vmem:[%s0 + $0x18] sm:$0xff]
    %v114 = vld [vmem:[%s0 + $0x20] sm:$0xff]
    %v115 = vld [vmem:[%s0 + $0x28] sm:$0xff]
    %v116 = vld [vmem:[%s0 + $0x30] sm:$0xff]
    %v117 = vld [vmem:[%s0 + $0x38] sm:$0xff]
    %v118 = vpack.c.bf16 %v111, %v110
    %v119 = vpack.c.bf16 %v113, %v112
    %v120 = vpack.c.bf16 %v115, %v114
    %v121 = vpack.c.bf16 %v117, %v116
    %v123 = vlaneseq
    %v124 = vshrl.u32 %v123, 7
    %v125 = vsub.s32 0, %v124
    %v126 = vrot.slane %v106, %v125
    %v127 = vlaneseq
    %v128 = vshrl.u32 %v127, 7
    %v129 = vsub.s32 1, %v128
    %v130 = vrot.slane %v106, %v129
    %v135 = vunpack.c.l.b16 %v76
    %v136 = vunpack.c.h.b16 %v76
    %v137 = vunpack.c.l.b16 %v77
    %v138 = vunpack.c.h.b16 %v77
    %v139 = vpack.c.b16 %v137, %v135
    %v140 = vpack.c.b16 %v138, %v136
    %vm143 = vcmask 130048
    %v145 = vsel %vm143, %v118, 0
    %v148 = vsel %vm143, %v119, 0
    %v151 = vsel %vm143, %v120, 0
    %v154 = vsel %vm143, %v121, 0
    %156 = vmatprep.subr.bf16.mxu0 0
    %157 = vmatpush1.bf16.msra.mxu0 0
    %158 = vmatprep.subr.bf16.mxu0 0
    %159 = vmatpush1.bf16.msra.mxu0 0
    %160 = vmatprep.subr.bf16.mxu0 0
    %161 = vmatpush1.bf16.msra.mxu0 0
    %162 = vmatprep.subr.bf16.mxu0 0
    %163 = vmatpush1.bf16.msra.mxu0 0
    %164 = vmatprep.subr.bf16.mxu0 0
    %165 = vmatpush1.bf16.msra.mxu0 0
    %166 = vmatprep.subr.bf16.mxu0 0
    %167 = vmatpush1.bf16.msra.mxu0 0
    %168 = vmatprep.subr.bf16.mxu0 0
    %169 = vmatpush1.bf16.msra.mxu0 0
    %170 = vmatprep.subr.bf16.mxu0 %v140
    %171 = vmatpush1.bf16.msra.mxu0 %v139
    %172 = vmatprep.subr.bf16.mxu0 0
    %173 = vmatpush2.bf16.msra.mxu0 0
    %174 = vmatprep.subr.bf16.mxu0 0
    %175 = vmatpush2.bf16.msra.mxu0 0
    %176 = vmatprep.subr.bf16.mxu0 0
    %177 = vmatpush2.bf16.msra.mxu0 0
    %178 = vmatprep.subr.bf16.mxu0 0
    %179 = vmatpush2.bf16.msra.mxu0 0
    %180 = vmatprep.subr.bf16.mxu0 0
    %181 = vmatpush2.bf16.msra.mxu0 0
    %182 = vmatprep.subr.bf16.mxu0 0
    %183 = vmatpush2.bf16.msra.mxu0 0
    %184 = vmatprep.subr.bf16.mxu0 0
    %185 = vmatpush2.bf16.msra.mxu0 0
    %186 = vmatprep.subr.bf16.mxu0 0
    %187 = vmatpush2.bf16.msra.mxu0 0
    %188 = vmatprep.mubr.bf16.mxu0 0
    %189 = vmatmul.mubr.bf16.gmra.mxu0 %v145
    %v190 = vpop.f32.mrf.mxu0
    %v191 = vadd.f32 %v126, %v190
    %v192 = vpop.f32.mrf.mxu0
    %v193 = vadd.f32 %v130, %v192
    %v194 = vpop.f32.mrf.mxu0
    %v195 = vadd.f32 %v126, %v194
    %v196 = vpop.f32.mrf.mxu0
    %v197 = vadd.f32 %v130, %v196
    %198 = vmatprep.mubr.bf16.mxu0 0
    %199 = vmatmul.mubr.bf16.gmra.mxu0 %v148
    %v200 = vpop.f32.mrf.mxu0
    %v201 = vadd.f32 %v126, %v200
    %v202 = vpop.f32.mrf.mxu0
    %v203 = vadd.f32 %v130, %v202
    %v204 = vpop.f32.mrf.mxu0
    %v205 = vadd.f32 %v126, %v204
    %v206 = vpop.f32.mrf.mxu0
    %v207 = vadd.f32 %v130, %v206
    %208 = vmatprep.mubr.bf16.mxu0 0
    %209 = vmatmul.mubr.bf16.gmra.mxu0 %v151
    %v210 = vpop.f32.mrf.mxu0
    %v211 = vadd.f32 %v126, %v210
    %v212 = vpop.f32.mrf.mxu0
    %v213 = vadd.f32 %v130, %v212
    %v214 = vpop.f32.mrf.mxu0
    %v215 = vadd.f32 %v126, %v214
    %v216 = vpop.f32.mrf.mxu0
    %v217 = vadd.f32 %v130, %v216
    %218 = vmatprep.mubr.bf16.mxu0 0
    %219 = vmatmul.mubr.bf16.gmra.mxu0 %v154
    %v220 = vpop.f32.mrf.mxu0
    %v221 = vadd.f32 %v126, %v220
    %v222 = vpop.f32.mrf.mxu0
    %v223 = vadd.f32 %v130, %v222
    %v224 = vpop.f32.mrf.mxu0
    %v225 = vadd.f32 %v126, %v224
    %v226 = vpop.f32.mrf.mxu0
    %v227 = vadd.f32 %v130, %v226
    %228 = vdwg.mxu0
    %229 = vst [vmem:[#allocation2] sm:$0xff] %v191
    %230 = vst [vmem:[#allocation2 + $0x8] sm:$0xff] %v193
    %231 = vst [vmem:[#allocation2 + $0x10] sm:$0xff] %v195
    %232 = vst [vmem:[#allocation2 + $0x18] sm:$0xff] %v197
    %233 = vst [vmem:[#allocation2 + $0x20] sm:$0xff] %v201
    %234 = vst [vmem:[#allocation2 + $0x28] sm:$0xff] %v203
    %235 = vst [vmem:[#allocation2 + $0x30] sm:$0xff] %v205
    %236 = vst [vmem:[#allocation2 + $0x38] sm:$0xff] %v207
    %237 = vst [vmem:[#allocation2 + $0x40] sm:$0xff] %v211
    %238 = vst [vmem:[#allocation2 + $0x48] sm:$0xff] %v213
    %239 = vst [vmem:[#allocation2 + $0x50] sm:$0xff] %v215
    %240 = vst [vmem:[#allocation2 + $0x58] sm:$0xff] %v217
    %241 = vst [vmem:[#allocation2 + $0x60] sm:$0xff] %v221
    %242 = vst [vmem:[#allocation2 + $0x68] sm:$0xff] %v223
    %243 = vst [vmem:[#allocation2 + $0x70] sm:$0xff] %v225
    %244 = vst [vmem:[#allocation2 + $0x78] sm:$0xff] %v227
    %s245 = smul.u32 0, 2
    %s246 = smul.addr %s245, 8
    %s247 = scalar_lea.vmem [#allocation2], %s246
    %v248 = vld [vmem:[%s247] sm:$0xff]
    %v249 = vld [vmem:[%s247 + $0x8] sm:$0xff]
    %v258 = vunpack.c.l.b16 %v78
    %v259 = vunpack.c.h.b16 %v78
    %v260 = vunpack.c.l.b16 %v79
    %v261 = vunpack.c.h.b16 %v79
    %v262 = vunpack.c.l.b16 %v80
    %v263 = vunpack.c.h.b16 %v80
    %v264 = vunpack.c.l.b16 %v81
    %v265 = vunpack.c.h.b16 %v81
    %v266 = vunpack.c.l.b16 %v82
    %v267 = vunpack.c.h.b16 %v82
    %v268 = vunpack.c.l.b16 %v83
    %v269 = vunpack.c.h.b16 %v83
    %v270 = vunpack.c.l.b16 %v84
    %v271 = vunpack.c.h.b16 %v84
    %v272 = vunpack.c.l.b16 %v85
    %v273 = vunpack.c.h.b16 %v85
    %v274 = vpack.c.b16 %v260, %v258
    %v275 = vpack.c.b16 %v261, %v259
    %v276 = vpack.c.b16 %v264, %v262
    %v277 = vpack.c.b16 %v265, %v263
    %v278 = vpack.c.b16 %v268, %v266
    %v279 = vpack.c.b16 %v269, %v267
    %v280 = vpack.c.b16 %v272, %v270
    %v281 = vpack.c.b16 %v273, %v271
    %vm290 = vcmask 523264
    %v292 = vsel %vm290, 0, 0
    %294 = vmatprep.subr.bf16.mxu0 0
    %295 = vmatpush1.bf16.msra.mxu0 0
    %296 = vmatprep.subr.bf16.mxu0 0
    %297 = vmatpush1.bf16.msra.mxu0 0
    %298 = vmatprep.subr.bf16.mxu0 0
    %299 = vmatpush1.bf16.msra.mxu0 0
    %300 = vmatprep.subr.bf16.mxu0 0
    %301 = vmatpush1.bf16.msra.mxu0 0
    %302 = vmatprep.subr.bf16.mxu0 %v281
    %303 = vmatpush1.bf16.msra.mxu0 %v280
    %304 = vmatprep.subr.bf16.mxu0 %v279
    %305 = vmatpush1.bf16.msra.mxu0 %v278
    %306 = vmatprep.subr.bf16.mxu0 %v277
    %307 = vmatpush1.bf16.msra.mxu0 %v276
    %308 = vmatprep.subr.bf16.mxu0 %v275
    %309 = vmatpush1.bf16.msra.mxu0 %v274
    %310 = vmatprep.subr.bf16.mxu0 0
    %311 = vmatpush2.bf16.msra.mxu0 0
    %312 = vmatprep.subr.bf16.mxu0 0
    %313 = vmatpush2.bf16.msra.mxu0 0
    %314 = vmatprep.subr.bf16.mxu0 0
    %315 = vmatpush2.bf16.msra.mxu0 0
    %316 = vmatprep.subr.bf16.mxu0 0
    %317 = vmatpush2.bf16.msra.mxu0 0
    %318 = vmatprep.subr.bf16.mxu0 0
    %319 = vmatpush2.bf16.msra.mxu0 0
    %320 = vmatprep.subr.bf16.mxu0 0
    %321 = vmatpush2.bf16.msra.mxu0 0
    %322 = vmatprep.subr.bf16.mxu0 0
    %323 = vmatpush2.bf16.msra.mxu0 0
    %324 = vmatprep.subr.bf16.mxu0 0
    %325 = vmatpush2.bf16.msra.mxu0 0
    %326 = vmatprep.mubr.bf16.mxu0 0
    %327 = vmatmul.mubr.bf16.gmra.mxu0 %v292
    %v328 = vpop.f32.mrf.mxu0
    %v329 = vadd.f32 0.0, %v328
    %v330 = vpop.f32.mrf.mxu0
    %v331 = vadd.f32 0.0, %v330
    %v332 = vpop.f32.mrf.mxu0
    %v333 = vpop.f32.mrf.mxu0
    %334 = vdwg.mxu0
    %v335 = vadd.f32 %v248, %v329
    %v336 = vadd.f32 %v249, %v331
    %v337 = vxor.u32 %v335, 2147483648
    %v338 = vxor.u32 %v336, 2147483648
    %v339 = vmul.f32 %v337, 1.442695
    %v340 = vpow.pop %v339
    %v341 = vmul.f32 %v338, 1.442695
    %v342 = vpow.pop %v341
    %v343 = vadd.f32 %v340, 1.0
    %v344 = vadd.f32 %v342, 1.0
    %v345 = vrcp.pop %v343
    %v346 = vmul.f32 1.0, %v345
    %v347 = vrcp.pop %v344
    %v348 = vmul.f32 1.0, %v347
    %v349 = vtanh.pop %v336
    %v350 = vmul.f32 %v346, 0.0
    %v351 = vmul.f32 %v346, %v349
    %353 = vrot.lane.b32.xlu0 %v351, 64
    %v354 = vpop.permute.xlu0 %353
    %v356 = vadd.f32 %v350, %v354
    %v357 = vtanh.pop %v356
    %v358 = vmul.f32 %v348, %v357
    %v359 = vld [vmem:[#allocation7] sm:$0xff]
    %vm360 = vcmp.ne.f32.partialorder %v359, 0.0
    %362 = vrot.lane.b32.xlu0 %v358, 64
    %v363 = vpop.permute.xlu0 %362
    %v365 = vsel %vm360, %v363, 0.0
    %367 = vrot.lane.b32.xlu0 %v356, 64
    %v368 = vpop.permute.xlu0 %367
    %v370 = vsel %vm360, %v368, 0.0
    %s371 = smul.u32 1, 2
    %s372 = smul.addr %s371, 8
    %s373 = scalar_lea.vmem [#allocation2], %s372
    %v374 = vld [vmem:[%s373] sm:$0xff]
    %v375 = vld [vmem:[%s373 + $0x8] sm:$0xff]
    %v376 = vpack.c.bf16 %v365, %v365
    %v378 = vsel %vm290, %v376, 0
    %380 = vmatprep.subr.bf16.mxu0 0
    %381 = vmatpush1.bf16.msra.mxu0 0
    %382 = vmatprep.subr.bf16.mxu0 0
    %383 = vmatpush1.bf16.msra.mxu0 0
    %384 = vmatprep.subr.bf16.mxu0 0
    %385 = vmatpush1.bf16.msra.mxu0 0
    %386 = vmatprep.subr.bf16.mxu0 0
    %387 = vmatpush1.bf16.msra.mxu0 0
    %388 = vmatprep.subr.bf16.mxu0 %v281
    %389 = vmatpush1.bf16.msra.mxu0 %v280
    %390 = vmatprep.subr.bf16.mxu0 %v279
    %391 = vmatpush1.bf16.msra.mxu0 %v278
    %392 = vmatprep.subr.bf16.mxu0 %v277
    %393 = vmatpush1.bf16.msra.mxu0 %v276
    %394 = vmatprep.subr.bf16.mxu0 %v275
    %395 = vmatpush1.bf16.msra.mxu0 %v274
    %396 = vmatprep.subr.bf16.mxu0 0
    %397 = vmatpush2.bf16.msra.mxu0 0
    %398 = vmatprep.subr.bf16.mxu0 0
    %399 = vmatpush2.bf16.msra.mxu0 0
    %400 = vmatprep.subr.bf16.mxu0 0
    %401 = vmatpush2.bf16.msra.mxu0 0
    %402 = vmatprep.subr.bf16.mxu0 0
    %403 = vmatpush2.bf16.msra.mxu0 0
    %404 = vmatprep.subr.bf16.mxu0 0
    %405 = vmatpush2.bf16.msra.mxu0 0
    %406 = vmatprep.subr.bf16.mxu0 0
    %407 = vmatpush2.bf16.msra.mxu0 0
    %408 = vmatprep.subr.bf16.mxu0 0
    %409 = vmatpush2.bf16.msra.mxu0 0
    %410 = vmatprep.subr.bf16.mxu0 0
    %411 = vmatpush2.bf16.msra.mxu0 0
    %412 = vmatprep.mubr.bf16.mxu0 0
    %413 = vmatmul.mubr.bf16.gmra.mxu0 %v378
    %v414 = vpop.f32.mrf.mxu0
    %v415 = vadd.f32 0.0, %v414
    %v416 = vpop.f32.mrf.mxu0
    %v417 = vadd.f32 0.0, %v416
    %v418 = vpop.f32.mrf.mxu0
    %v419 = vpop.f32.mrf.mxu0
    %420 = vdwg.mxu0
    %v421 = vadd.f32 %v374, %v415
    %v422 = vadd.f32 %v375, %v417
    %v423 = vxor.u32 %v421, 2147483648
    %v424 = vxor.u32 %v422, 2147483648
    %v425 = vmul.f32 %v423, 1.442695
    %v426 = vpow.pop %v425
    %v427 = vmul.f32 %v424, 1.442695
    %v428 = vpow.pop %v427
    %v429 = vadd.f32 %v426, 1.0
    %v430 = vadd.f32 %v428, 1.0
    %v431 = vrcp.pop %v429
    %v432 = vmul.f32 1.0, %v431
    %v433 = vrcp.pop %v430
    %v434 = vmul.f32 1.0, %v433
    %v435 = vtanh.pop %v422
    %437 = vrot.lane.b32.xlu0 %v370, 64
    %v438 = vpop.permute.xlu0 %437
    %v440 = vmul.f32 %v432, %v438
    %v441 = vmul.f32 %v432, %v435
    %443 = vrot.lane.b32.xlu0 %v441, 64
    %v444 = vpop.permute.xlu0 %443
    %v446 = vadd.f32 %v440, %v444
    %v447 = vtanh.pop %v446
    %v448 = vmul.f32 %v434, %v447
    %s449 = scalar_lea.vmem [#allocation7], 8
    %v450 = vld [vmem:[%s449] sm:$0xff]
    %vm451 = vcmp.ne.f32.partialorder %v450, 0.0
    %453 = vrot.lane.b32.xlu0 %v448, 64
    %v454 = vpop.permute.xlu0 %453
    %v456 = vsel %vm451, %v454, %v365
    %458 = vrot.lane.b32.xlu0 %v446, 64
    %v459 = vpop.permute.xlu0 %458
    %v461 = vsel %vm451, %v459, %v370
    %s462 = smul.u32 2, 2
    %s463 = smul.addr %s462, 8
    %s464 = scalar_lea.vmem [#allocation2], %s463
    %v465 = vld [vmem:[%s464] sm:$0xff]
    %v466 = vld [vmem:[%s464 + $0x8] sm:$0xff]
    %v467 = vpack.c.bf16 %v456, %v456
    %v469 = vsel %vm290, %v467, 0
    %471 = vmatprep.subr.bf16.mxu0 0
    %472 = vmatpush1.bf16.msra.mxu0 0
    %473 = vmatprep.subr.bf16.mxu0 0
    %474 = vmatpush1.bf16.msra.mxu0 0
    %475 = vmatprep.subr.bf16.mxu0 0
    %476 = vmatpush1.bf16.msra.mxu0 0
    %477 = vmatprep.subr.bf16.mxu0 0
    %478 = vmatpush1.bf16.msra.mxu0 0
    %479 = vmatprep.subr.bf16.mxu0 %v281
    %480 = vmatpush1.bf16.msra.mxu0 %v280
    %481 = vmatprep.subr.bf16.mxu0 %v279
    %482 = vmatpush1.bf16.msra.mxu0 %v278
    %483 = vmatprep.subr.bf16.mxu0 %v277
    %484 = vmatpush1.bf16.msra.mxu0 %v276
    %485 = vmatprep.subr.bf16.mxu0 %v275
    %486 = vmatpush1.bf16.msra.mxu0 %v274
    %487 = vmatprep.subr.bf16.mxu0 0
    %488 = vmatpush2.bf16.msra.mxu0 0
    %489 = vmatprep.subr.bf16.mxu0 0
    %490 = vmatpush2.bf16.msra.mxu0 0
    %491 = vmatprep.subr.bf16.mxu0 0
    %492 = vmatpush2.bf16.msra.mxu0 0
    %493 = vmatprep.subr.bf16.mxu0 0
    %494 = vmatpush2.bf16.msra.mxu0 0
    %495 = vmatprep.subr.bf16.mxu0 0
    %496 = vmatpush2.bf16.msra.mxu0 0
    %497 = vmatprep.subr.bf16.mxu0 0
    %498 = vmatpush2.bf16.msra.mxu0 0
    %499 = vmatprep.subr.bf16.mxu0 0
    %500 = vmatpush2.bf16.msra.mxu0 0
    %501 = vmatprep.subr.bf16.mxu0 0
    %502 = vmatpush2.bf16.msra.mxu0 0
    %503 = vmatprep.mubr.bf16.mxu0 0
    %504 = vmatmul.mubr.bf16.gmra.mxu0 %v469
    %v505 = vpop.f32.mrf.mxu0
    %v506 = vadd.f32 0.0, %v505
    %v507 = vpop.f32.mrf.mxu0
    %v508 = vadd.f32 0.0, %v507
    %v509 = vpop.f32.mrf.mxu0
    %v510 = vpop.f32.mrf.mxu0
    %511 = vdwg.mxu0
    %v512 = vadd.f32 %v465, %v506
    %v513 = vadd.f32 %v466, %v508
    %v514 = vxor.u32 %v512, 2147483648
    %v515 = vxor.u32 %v513, 2147483648
    %v516 = vmul.f32 %v514, 1.442695
    %v517 = vpow.pop %v516
    %v518 = vmul.f32 %v515, 1.442695
    %v519 = vpow.pop %v518
    %v520 = vadd.f32 %v517, 1.0
    %v521 = vadd.f32 %v519, 1.0
    %v522 = vrcp.pop %v520
    %v523 = vmul.f32 1.0, %v522
    %v524 = vrcp.pop %v521
    %v525 = vmul.f32 1.0, %v524
    %v526 = vtanh.pop %v513
    %528 = vrot.lane.b32.xlu0 %v461, 64
    %v529 = vpop.permute.xlu0 %528
    %v531 = vmul.f32 %v523, %v529
    %v532 = vmul.f32 %v523, %v526
    %534 = vrot.lane.b32.xlu0 %v532, 64
    %v535 = vpop.permute.xlu0 %534
    %v537 = vadd.f32 %v531, %v535
    %v538 = vtanh.pop %v537
    %v539 = vmul.f32 %v525, %v538
    %s540 = scalar_lea.vmem [#allocation7], 16
    %v541 = vld [vmem:[%s540] sm:$0xff]
    %vm542 = vcmp.ne.f32.partialorder %v541, 0.0
    %544 = vrot.lane.b32.xlu0 %v539, 64
    %v545 = vpop.permute.xlu0 %544
    %v547 = vsel %vm542, %v545, %v456
    %549 = vrot.lane.b32.xlu0 %v537, 64
    %v550 = vpop.permute.xlu0 %549
    %v552 = vsel %vm542, %v550, %v461
    %s553 = smul.u32 3, 2
    %s554 = smul.addr %s553, 8
    %s555 = scalar_lea.vmem [#allocation2], %s554
    %v556 = vld [vmem:[%s555] sm:$0xff]
    %v557 = vld [vmem:[%s555 + $0x8] sm:$0xff]
    %v558 = vpack.c.bf16 %v547, %v547
    %v560 = vsel %vm290, %v558, 0
    %562 = vmatprep.subr.bf16.mxu0 0
    %563 = vmatpush1.bf16.msra.mxu0 0
    %564 = vmatprep.subr.bf16.mxu0 0
    %565 = vmatpush1.bf16.msra.mxu0 0
    %566 = vmatprep.subr.bf16.mxu0 0
    %567 = vmatpush1.bf16.msra.mxu0 0
    %568 = vmatprep.subr.bf16.mxu0 0
    %569 = vmatpush1.bf16.msra.mxu0 0
    %570 = vmatprep.subr.bf16.mxu0 %v281
    %571 = vmatpush1.bf16.msra.mxu0 %v280
    %572 = vmatprep.subr.bf16.mxu0 %v279
    %573 = vmatpush1.bf16.msra.mxu0 %v278
    %574 = vmatprep.subr.bf16.mxu0 %v277
    %575 = vmatpush1.bf16.msra.mxu0 %v276
    %576 = vmatprep.subr.bf16.mxu0 %v275
    %577 = vmatpush1.bf16.msra.mxu0 %v274
    %578 = vmatprep.subr.bf16.mxu0 0
    %579 = vmatpush2.bf16.msra.mxu0 0
    %580 = vmatprep.subr.bf16.mxu0 0
    %581 = vmatpush2.bf16.msra.mxu0 0
    %582 = vmatprep.subr.bf16.mxu0 0
    %583 = vmatpush2.bf16.msra.mxu0 0
    %584 = vmatprep.subr.bf16.mxu0 0
    %585 = vmatpush2.bf16.msra.mxu0 0
    %586 = vmatprep.subr.bf16.mxu0 0
    %587 = vmatpush2.bf16.msra.mxu0 0
    %588 = vmatprep.subr.bf16.mxu0 0
    %589 = vmatpush2.bf16.msra.mxu0 0
    %590 = vmatprep.subr.bf16.mxu0 0
    %591 = vmatpush2.bf16.msra.mxu0 0
    %592 = vmatprep.subr.bf16.mxu0 0
    %593 = vmatpush2.bf16.msra.mxu0 0
    %594 = vmatprep.mubr.bf16.mxu0 0
    %595 = vmatmul.mubr.bf16.gmra.mxu0 %v560
    %v596 = vpop.f32.mrf.mxu0
    %v597 = vadd.f32 0.0, %v596
    %v598 = vpop.f32.mrf.mxu0
    %v599 = vadd.f32 0.0, %v598
    %v600 = vpop.f32.mrf.mxu0
    %v601 = vpop.f32.mrf.mxu0
    %602 = vdwg.mxu0
    %v603 = vadd.f32 %v556, %v597
    %v604 = vadd.f32 %v557, %v599
    %v605 = vxor.u32 %v603, 2147483648
    %v606 = vxor.u32 %v604, 2147483648
    %v607 = vmul.f32 %v605, 1.442695
    %v608 = vpow.pop %v607
    %v609 = vmul.f32 %v606, 1.442695
    %v610 = vpow.pop %v609
    %v611 = vadd.f32 %v608, 1.0
    %v612 = vadd.f32 %v610, 1.0
    %v613 = vrcp.pop %v611
    %v614 = vmul.f32 1.0, %v613
    %v615 = vrcp.pop %v612
    %v616 = vmul.f32 1.0, %v615
    %v617 = vtanh.pop %v604
    %619 = vrot.lane.b32.xlu0 %v552, 64
    %v620 = vpop.permute.xlu0 %619
    %v622 = vmul.f32 %v614, %v620
    %v623 = vmul.f32 %v614, %v617
    %625 = vrot.lane.b32.xlu0 %v623, 64
    %v626 = vpop.permute.xlu0 %625
    %v628 = vadd.f32 %v622, %v626
    %v629 = vtanh.pop %v628
    %v630 = vmul.f32 %v616, %v629
    %s631 = scalar_lea.vmem [#allocation7], 24
    %v632 = vld [vmem:[%s631] sm:$0xff]
    %vm633 = vcmp.ne.f32.partialorder %v632, 0.0
    %635 = vrot.lane.b32.xlu0 %v630, 64
    %v636 = vpop.permute.xlu0 %635
    %v638 = vsel %vm633, %v636, %v547
    %640 = vrot.lane.b32.xlu0 %v628, 64
    %v641 = vpop.permute.xlu0 %640
    %v643 = vsel %vm633, %v641, %v552
    %s644 = smul.u32 4, 2
    %s645 = smul.addr %s644, 8
    %s646 = scalar_lea.vmem [#allocation2], %s645
    %v647 = vld [vmem:[%s646] sm:$0xff]
    %v648 = vld [vmem:[%s646 + $0x8] sm:$0xff]
    %v649 = vpack.c.bf16 %v638, %v638
    %v651 = vsel %vm290, %v649, 0
    %653 = vmatprep.subr.bf16.mxu0 0
    %654 = vmatpush1.bf16.msra.mxu0 0
    %655 = vmatprep.subr.bf16.mxu0 0
    %656 = vmatpush1.bf16.msra.mxu0 0
    %657 = vmatprep.subr.bf16.mxu0 0
    %658 = vmatpush1.bf16.msra.mxu0 0
    %659 = vmatprep.subr.bf16.mxu0 0
    %660 = vmatpush1.bf16.msra.mxu0 0
    %661 = vmatprep.subr.bf16.mxu0 %v281
    %662 = vmatpush1.bf16.msra.mxu0 %v280
    %663 = vmatprep.subr.bf16.mxu0 %v279
    %664 = vmatpush1.bf16.msra.mxu0 %v278
    %665 = vmatprep.subr.bf16.mxu0 %v277
    %666 = vmatpush1.bf16.msra.mxu0 %v276
    %667 = vmatprep.subr.bf16.mxu0 %v275
    %668 = vmatpush1.bf16.msra.mxu0 %v274
    %669 = vmatprep.subr.bf16.mxu0 0
    %670 = vmatpush2.bf16.msra.mxu0 0
    %671 = vmatprep.subr.bf16.mxu0 0
    %672 = vmatpush2.bf16.msra.mxu0 0
    %673 = vmatprep.subr.bf16.mxu0 0
    %674 = vmatpush2.bf16.msra.mxu0 0
    %675 = vmatprep.subr.bf16.mxu0 0
    %676 = vmatpush2.bf16.msra.mxu0 0
    %677 = vmatprep.subr.bf16.mxu0 0
    %678 = vmatpush2.bf16.msra.mxu0 0
    %679 = vmatprep.subr.bf16.mxu0 0
    %680 = vmatpush2.bf16.msra.mxu0 0
    %681 = vmatprep.subr.bf16.mxu0 0
    %682 = vmatpush2.bf16.msra.mxu0 0
    %683 = vmatprep.subr.bf16.mxu0 0
    %684 = vmatpush2.bf16.msra.mxu0 0
    %685 = vmatprep.mubr.bf16.mxu0 0
    %686 = vmatmul.mubr.bf16.gmra.mxu0 %v651
    %v687 = vpop.f32.mrf.mxu0
    %v688 = vadd.f32 0.0, %v687
    %v689 = vpop.f32.mrf.mxu0
    %v690 = vadd.f32 0.0, %v689
    %v691 = vpop.f32.mrf.mxu0
    %v692 = vpop.f32.mrf.mxu0
    %693 = vdwg.mxu0
    %v694 = vadd.f32 %v647, %v688
    %v695 = vadd.f32 %v648, %v690
    %v696 = vxor.u32 %v694, 2147483648
    %v697 = vxor.u32 %v695, 2147483648
    %v698 = vmul.f32 %v696, 1.442695
    %v699 = vpow.pop %v698
    %v700 = vmul.f32 %v697, 1.442695
    %v701 = vpow.pop %v700
    %v702 = vadd.f32 %v699, 1.0
    %v703 = vadd.f32 %v701, 1.0
    %v704 = vrcp.pop %v702
    %v705 = vmul.f32 1.0, %v704
    %v706 = vrcp.pop %v703
    %v707 = vmul.f32 1.0, %v706
    %v708 = vtanh.pop %v695
    %710 = vrot.lane.b32.xlu0 %v643, 64
    %v711 = vpop.permute.xlu0 %710
    %v713 = vmul.f32 %v705, %v711
    %v714 = vmul.f32 %v705, %v708
    %716 = vrot.lane.b32.xlu0 %v714, 64
    %v717 = vpop.permute.xlu0 %716
    %v719 = vadd.f32 %v713, %v717
    %v720 = vtanh.pop %v719
    %v721 = vmul.f32 %v707, %v720
    %s722 = scalar_lea.vmem [#allocation7], 32
    %v723 = vld [vmem:[%s722] sm:$0xff]
    %vm724 = vcmp.ne.f32.partialorder %v723, 0.0
    %726 = vrot.lane.b32.xlu0 %v721, 64
    %v727 = vpop.permute.xlu0 %726
    %v729 = vsel %vm724, %v727, %v638
    %731 = vrot.lane.b32.xlu0 %v719, 64
    %v732 = vpop.permute.xlu0 %731
    %v734 = vsel %vm724, %v732, %v643
    %s735 = smul.u32 5, 2
    %s736 = smul.addr %s735, 8
    %s737 = scalar_lea.vmem [#allocation2], %s736
    %v738 = vld [vmem:[%s737] sm:$0xff]
    %v739 = vld [vmem:[%s737 + $0x8] sm:$0xff]
    %v740 = vpack.c.bf16 %v729, %v729
    %v742 = vsel %vm290, %v740, 0
    %744 = vmatprep.subr.bf16.mxu0 0
    %745 = vmatpush1.bf16.msra.mxu0 0
    %746 = vmatprep.subr.bf16.mxu0 0
    %747 = vmatpush1.bf16.msra.mxu0 0
    %748 = vmatprep.subr.bf16.mxu0 0
    %749 = vmatpush1.bf16.msra.mxu0 0
    %750 = vmatprep.subr.bf16.mxu0 0
    %751 = vmatpush1.bf16.msra.mxu0 0
    %752 = vmatprep.subr.bf16.mxu0 %v281
    %753 = vmatpush1.bf16.msra.mxu0 %v280
    %754 = vmatprep.subr.bf16.mxu0 %v279
    %755 = vmatpush1.bf16.msra.mxu0 %v278
    %756 = vmatprep.subr.bf16.mxu0 %v277
    %757 = vmatpush1.bf16.msra.mxu0 %v276
    %758 = vmatprep.subr.bf16.mxu0 %v275
    %759 = vmatpush1.bf16.msra.mxu0 %v274
    %760 = vmatprep.subr.bf16.mxu0 0
    %761 = vmatpush2.bf16.msra.mxu0 0
    %762 = vmatprep.subr.bf16.mxu0 0
    %763 = vmatpush2.bf16.msra.mxu0 0
    %764 = vmatprep.subr.bf16.mxu0 0
    %765 = vmatpush2.bf16.msra.mxu0 0
    %766 = vmatprep.subr.bf16.mxu0 0
    %767 = vmatpush2.bf16.msra.mxu0 0
    %768 = vmatprep.subr.bf16.mxu0 0
    %769 = vmatpush2.bf16.msra.mxu0 0
    %770 = vmatprep.subr.bf16.mxu0 0
    %771 = vmatpush2.bf16.msra.mxu0 0
    %772 = vmatprep.subr.bf16.mxu0 0
    %773 = vmatpush2.bf16.msra.mxu0 0
    %774 = vmatprep.subr.bf16.mxu0 0
    %775 = vmatpush2.bf16.msra.mxu0 0
    %776 = vmatprep.mubr.bf16.mxu0 0
    %777 = vmatmul.mubr.bf16.gmra.mxu0 %v742
    %v778 = vpop.f32.mrf.mxu0
    %v779 = vadd.f32 0.0, %v778
    %v780 = vpop.f32.mrf.mxu0
    %v781 = vadd.f32 0.0, %v780
    %v782 = vpop.f32.mrf.mxu0
    %v783 = vpop.f32.mrf.mxu0
    %784 = vdwg.mxu0
    %v785 = vadd.f32 %v738, %v779
    %v786 = vadd.f32 %v739, %v781
    %v787 = vxor.u32 %v785, 2147483648
    %v788 = vxor.u32 %v786, 2147483648
    %v789 = vmul.f32 %v787, 1.442695
    %v790 = vpow.pop %v789
    %v791 = vmul.f32 %v788, 1.442695
    %v792 = vpow.pop %v791
    %v793 = vadd.f32 %v790, 1.0
    %v794 = vadd.f32 %v792, 1.0
    %v795 = vrcp.pop %v793
    %v796 = vmul.f32 1.0, %v795
    %v797 = vrcp.pop %v794
    %v798 = vmul.f32 1.0, %v797
    %v799 = vtanh.pop %v786
    %801 = vrot.lane.b32.xlu0 %v734, 64
    %v802 = vpop.permute.xlu0 %801
    %v804 = vmul.f32 %v796, %v802
    %v805 = vmul.f32 %v796, %v799
    %807 = vrot.lane.b32.xlu0 %v805, 64
    %v808 = vpop.permute.xlu0 %807
    %v810 = vadd.f32 %v804, %v808
    %v811 = vtanh.pop %v810
    %v812 = vmul.f32 %v798, %v811
    %s813 = scalar_lea.vmem [#allocation7], 40
    %v814 = vld [vmem:[%s813] sm:$0xff]
    %vm815 = vcmp.ne.f32.partialorder %v814, 0.0
    %817 = vrot.lane.b32.xlu0 %v812, 64
    %v818 = vpop.permute.xlu0 %817
    %v820 = vsel %vm815, %v818, %v729
    %822 = vrot.lane.b32.xlu0 %v810, 64
    %v823 = vpop.permute.xlu0 %822
    %v825 = vsel %vm815, %v823, %v734
    %s826 = smul.u32 6, 2
    %s827 = smul.addr %s826, 8
    %s828 = scalar_lea.vmem [#allocation2], %s827
    %v829 = vld [vmem:[%s828] sm:$0xff]
    %v830 = vld [vmem:[%s828 + $0x8] sm:$0xff]
    %v831 = vpack.c.bf16 %v820, %v820
    %v833 = vsel %vm290, %v831, 0
    %835 = vmatprep.subr.bf16.mxu0 0
    %836 = vmatpush1.bf16.msra.mxu0 0
    %837 = vmatprep.subr.bf16.mxu0 0
    %838 = vmatpush1.bf16.msra.mxu0 0
    %839 = vmatprep.subr.bf16.mxu0 0
    %840 = vmatpush1.bf16.msra.mxu0 0
    %841 = vmatprep.subr.bf16.mxu0 0
    %842 = vmatpush1.bf16.msra.mxu0 0
    %843 = vmatprep.subr.bf16.mxu0 %v281
    %844 = vmatpush1.bf16.msra.mxu0 %v280
    %845 = vmatprep.subr.bf16.mxu0 %v279
    %846 = vmatpush1.bf16.msra.mxu0 %v278
    %847 = vmatprep.subr.bf16.mxu0 %v277
    %848 = vmatpush1.bf16.msra.mxu0 %v276
    %849 = vmatprep.subr.bf16.mxu0 %v275
    %850 = vmatpush1.bf16.msra.mxu0 %v274
    %851 = vmatprep.subr.bf16.mxu0 0
    %852 = vmatpush2.bf16.msra.mxu0 0
    %853 = vmatprep.subr.bf16.mxu0 0
    %854 = vmatpush2.bf16.msra.mxu0 0
    %855 = vmatprep.subr.bf16.mxu0 0
    %856 = vmatpush2.bf16.msra.mxu0 0
    %857 = vmatprep.subr.bf16.mxu0 0
    %858 = vmatpush2.bf16.msra.mxu0 0
    %859 = vmatprep.subr.bf16.mxu0 0
    %860 = vmatpush2.bf16.msra.mxu0 0
    %861 = vmatprep.subr.bf16.mxu0 0
    %862 = vmatpush2.bf16.msra.mxu0 0
    %863 = vmatprep.subr.bf16.mxu0 0
    %864 = vmatpush2.bf16.msra.mxu0 0
    %865 = vmatprep.subr.bf16.mxu0 0
    %866 = vmatpush2.bf16.msra.mxu0 0
    %867 = vmatprep.mubr.bf16.mxu0 0
    %868 = vmatmul.mubr.bf16.gmra.mxu0 %v833
    %v869 = vpop.f32.mrf.mxu0
    %v870 = vadd.f32 0.0, %v869
    %v871 = vpop.f32.mrf.mxu0
    %v872 = vadd.f32 0.0, %v871
    %v873 = vpop.f32.mrf.mxu0
    %v874 = vpop.f32.mrf.mxu0
    %875 = vdwg.mxu0
    %v876 = vadd.f32 %v829, %v870
    %v877 = vadd.f32 %v830, %v872
    %v878 = vxor.u32 %v876, 2147483648
    %v879 = vxor.u32 %v877, 2147483648
    %v880 = vmul.f32 %v878, 1.442695
    %v881 = vpow.pop %v880
    %v882 = vmul.f32 %v879, 1.442695
    %v883 = vpow.pop %v882
    %v884 = vadd.f32 %v881, 1.0
    %v885 = vadd.f32 %v883, 1.0
    %v886 = vrcp.pop %v884
    %v887 = vmul.f32 1.0, %v886
    %v888 = vrcp.pop %v885
    %v889 = vmul.f32 1.0, %v888
    %v890 = vtanh.pop %v877
    %892 = vrot.lane.b32.xlu0 %v825, 64
    %v893 = vpop.permute.xlu0 %892
    %v895 = vmul.f32 %v887, %v893
    %v896 = vmul.f32 %v887, %v890
    %898 = vrot.lane.b32.xlu0 %v896, 64
    %v899 = vpop.permute.xlu0 %898
    %v901 = vadd.f32 %v895, %v899
    %v902 = vtanh.pop %v901
    %v903 = vmul.f32 %v889, %v902
    %s904 = scalar_lea.vmem [#allocation7], 48
    %v905 = vld [vmem:[%s904] sm:$0xff]
    %vm906 = vcmp.ne.f32.partialorder %v905, 0.0
    %908 = vrot.lane.b32.xlu0 %v903, 64
    %v909 = vpop.permute.xlu0 %908
    %v911 = vsel %vm906, %v909, %v820
    %913 = vrot.lane.b32.xlu0 %v901, 64
    %v914 = vpop.permute.xlu0 %913
    %v916 = vsel %vm906, %v914, %v825
    %s917 = smul.u32 7, 2
    %s918 = smul.addr %s917, 8
    %s919 = scalar_lea.vmem [#allocation2], %s918
    %v920 = vld [vmem:[%s919] sm:$0xff]
    %v921 = vld [vmem:[%s919 + $0x8] sm:$0xff]
    %v922 = vpack.c.bf16 %v911, %v911
    %v924 = vsel %vm290, %v922, 0
    %926 = vmatprep.subr.bf16.mxu0 0
    %927 = vmatpush1.bf16.msra.mxu0 0
    %928 = vmatprep.subr.bf16.mxu0 0
    %929 = vmatpush1.bf16.msra.mxu0 0
    %930 = vmatprep.subr.bf16.mxu0 0
    %931 = vmatpush1.bf16.msra.mxu0 0
    %932 = vmatprep.subr.bf16.mxu0 0
    %933 = vmatpush1.bf16.msra.mxu0 0
    %934 = vmatprep.subr.bf16.mxu0 %v281
    %935 = vmatpush1.bf16.msra.mxu0 %v280
    %936 = vmatprep.subr.bf16.mxu0 %v279
    %937 = vmatpush1.bf16.msra.mxu0 %v278
    %938 = vmatprep.subr.bf16.mxu0 %v277
    %939 = vmatpush1.bf16.msra.mxu0 %v276
    %940 = vmatprep.subr.bf16.mxu0 %v275
    %941 = vmatpush1.bf16.msra.mxu0 %v274
    %942 = vmatprep.subr.bf16.mxu0 0
    %943 = vmatpush2.bf16.msra.mxu0 0
    %944 = vmatprep.subr.bf16.mxu0 0
    %945 = vmatpush2.bf16.msra.mxu0 0
    %946 = vmatprep.subr.bf16.mxu0 0
    %947 = vmatpush2.bf16.msra.mxu0 0
    %948 = vmatprep.subr.bf16.mxu0 0
    %949 = vmatpush2.bf16.msra.mxu0 0
    %950 = vmatprep.subr.bf16.mxu0 0
    %951 = vmatpush2.bf16.msra.mxu0 0
    %952 = vmatprep.subr.bf16.mxu0 0
    %953 = vmatpush2.bf16.msra.mxu0 0
    %954 = vmatprep.subr.bf16.mxu0 0
    %955 = vmatpush2.bf16.msra.mxu0 0
    %956 = vmatprep.subr.bf16.mxu0 0
    %957 = vmatpush2.bf16.msra.mxu0 0
    %958 = vmatprep.mubr.bf16.mxu0 0
    %959 = vmatmul.mubr.bf16.gmra.mxu0 %v924
    %v960 = vpop.f32.mrf.mxu0
    %v961 = vadd.f32 0.0, %v960
    %v962 = vpop.f32.mrf.mxu0
    %v963 = vadd.f32 0.0, %v962
    %v964 = vpop.f32.mrf.mxu0
    %v965 = vpop.f32.mrf.mxu0
    %966 = vdwg.mxu0
    %v967 = vadd.f32 %v920, %v961
    %v968 = vadd.f32 %v921, %v963
    %v969 = vxor.u32 %v967, 2147483648
    %v970 = vxor.u32 %v968, 2147483648
    %v971 = vmul.f32 %v969, 1.442695
    %v972 = vpow.pop %v971
    %v973 = vmul.f32 %v970, 1.442695
    %v974 = vpow.pop %v973
    %v975 = vadd.f32 %v972, 1.0
    %v976 = vadd.f32 %v974, 1.0
    %v977 = vrcp.pop %v975
    %v978 = vmul.f32 1.0, %v977
    %v979 = vrcp.pop %v976
    %v980 = vmul.f32 1.0, %v979
    %v981 = vtanh.pop %v968
    %983 = vrot.lane.b32.xlu0 %v916, 64
    %v984 = vpop.permute.xlu0 %983
    %v986 = vmul.f32 %v978, %v984
    %v987 = vmul.f32 %v978, %v981
    %989 = vrot.lane.b32.xlu0 %v987, 64
    %v990 = vpop.permute.xlu0 %989
    %v992 = vadd.f32 %v986, %v990
    %v993 = vtanh.pop %v992
    %v994 = vmul.f32 %v980, %v993
    %s995 = scalar_lea.vmem [#allocation7], 56
    %v996 = vld [vmem:[%s995] sm:$0xff]
    %vm997 = vcmp.ne.f32.partialorder %v996, 0.0
    %999 = vrot.lane.b32.xlu0 %v994, 64
    %v1000 = vpop.permute.xlu0 %999
    %v1002 = vsel %vm997, %v1000, %v911
    %v1003 = vpack.c.bf16 %v1002, %v1002
    %v1004 = vlaneseq
    %v1005 = vshrl.u32 %v1004, 7
    %v1006 = vsub.s32 0, %v1005
    %v1007 = vrot.slane %v107, %v1006
    %v1016 = vunpack.c.l.b16 %v86
    %v1017 = vunpack.c.l.b16 %v87
    %v1018 = vunpack.c.l.b16 %v88
    %v1019 = vunpack.c.l.b16 %v89
    %v1020 = vunpack.c.l.b16 %v90
    %v1021 = vunpack.c.l.b16 %v91
    %v1022 = vunpack.c.l.b16 %v92
    %v1023 = vunpack.c.l.b16 %v93
    %v1024 = vpack.c.b16 %v1017, %v1016
    %v1025 = vpack.c.b16 %v1019, %v1018
    %v1026 = vpack.c.b16 %v1021, %v1020
    %v1027 = vpack.c.b16 %v1023, %v1022
    %v1033 = vsel %vm290, %v1003, 0
    %1035 = vmatprep.subr.bf16.mxu0 0
    %1036 = vmatpush1.bf16.msra.mxu0 0
    %1037 = vmatprep.subr.bf16.mxu0 0
    %1038 = vmatpush1.bf16.msra.mxu0 0
    %1039 = vmatprep.subr.bf16.mxu0 0
    %1040 = vmatpush1.bf16.msra.mxu0 0
    %1041 = vmatprep.subr.bf16.mxu0 0
    %1042 = vmatpush1.bf16.msra.mxu0 0
    %1043 = vmatprep.subr.bf16.mxu0 0
    %1044 = vmatpush1.bf16.msra.mxu0 %v1027
    %1045 = vmatprep.subr.bf16.mxu0 0
    %1046 = vmatpush1.bf16.msra.mxu0 %v1026
    %1047 = vmatprep.subr.bf16.mxu0 0
    %1048 = vmatpush1.bf16.msra.mxu0 %v1025
    %1049 = vmatprep.subr.bf16.mxu0 0
    %1050 = vmatpush1.bf16.msra.mxu0 %v1024
    %1051 = vmatprep.subr.bf16.mxu0 0
    %1052 = vmatpush2.bf16.msra.mxu0 0
    %1053 = vmatprep.subr.bf16.mxu0 0
    %1054 = vmatpush2.bf16.msra.mxu0 0
    %1055 = vmatprep.subr.bf16.mxu0 0
    %1056 = vmatpush2.bf16.msra.mxu0 0
    %1057 = vmatprep.subr.bf16.mxu0 0
    %1058 = vmatpush2.bf16.msra.mxu0 0
    %1059 = vmatprep.subr.bf16.mxu0 0
    %1060 = vmatpush2.bf16.msra.mxu0 0
    %1061 = vmatprep.subr.bf16.mxu0 0
    %1062 = vmatpush2.bf16.msra.mxu0 0
    %1063 = vmatprep.subr.bf16.mxu0 0
    %1064 = vmatpush2.bf16.msra.mxu0 0
    %1065 = vmatprep.subr.bf16.mxu0 0
    %1066 = vmatpush2.bf16.msra.mxu0 0
    %1067 = vmatprep.mubr.bf16.mxu0 0
    %1068 = vmatmul.mubr.bf16.gmra.mxu0 %v1033
    %v1069 = vpop.f32.mrf.mxu0
    %v1070 = vadd.f32 %v1007, %v1069
    %v1071 = vpop.f32.mrf.mxu0
    %v1072 = vpop.f32.mrf.mxu0
    %v1073 = vpop.f32.mrf.mxu0
    %1074 = vdwg.mxu0
    %vm1075 = vcmask 261120
    %1076 = vst.msk [vmem:[#allocation11] sm:$0xff] %vm1075, %v1070
    %v1077 = vpack.c.bf16 %v1070, %v1070
    %v1078 = vlaneseq
    %v1079 = vshrl.u32 %v1078, 7
    %v1080 = vsub.s32 0, %v1079
    %v1081 = vrot.slane %v108, %v1080
    %v1086 = vunpack.c.l.b16 %v94
    %v1087 = vunpack.c.l.b16 %v95
    %v1088 = vunpack.c.l.b16 %v96
    %v1089 = vunpack.c.l.b16 %v97
    %v1090 = vpack.c.b16 %v1087, %v1086
    %v1091 = vpack.c.b16 %v1089, %v1088
    %v1095 = vsel %vm1075, %v1077, 0
    %1097 = vmatprep.subr.bf16.mxu0 0
    %1098 = vmatpush1.bf16.msra.mxu0 0
    %1099 = vmatprep.subr.bf16.mxu0 0
    %1100 = vmatpush1.bf16.msra.mxu0 0
    %1101 = vmatprep.subr.bf16.mxu0 0
    %1102 = vmatpush1.bf16.msra.mxu0 0
    %1103 = vmatprep.subr.bf16.mxu0 0
    %1104 = vmatpush1.bf16.msra.mxu0 0
    %1105 = vmatprep.subr.bf16.mxu0 0
    %1106 = vmatpush1.bf16.msra.mxu0 0
    %1107 = vmatprep.subr.bf16.mxu0 0
    %1108 = vmatpush1.bf16.msra.mxu0 0
    %1109 = vmatprep.subr.bf16.mxu0 0
    %1110 = vmatpush1.bf16.msra.mxu0 %v1091
    %1111 = vmatprep.subr.bf16.mxu0 0
    %1112 = vmatpush1.bf16.msra.mxu0 %v1090
    %1113 = vmatprep.subr.bf16.mxu0 0
    %1114 = vmatpush2.bf16.msra.mxu0 0
    %1115 = vmatprep.subr.bf16.mxu0 0
    %1116 = vmatpush2.bf16.msra.mxu0 0
    %1117 = vmatprep.subr.bf16.mxu0 0
    %1118 = vmatpush2.bf16.msra.mxu0 0
    %1119 = vmatprep.subr.bf16.mxu0 0
    %1120 = vmatpush2.bf16.msra.mxu0 0
    %1121 = vmatprep.subr.bf16.mxu0 0
    %1122 = vmatpush2.bf16.msra.mxu0 0
    %1123 = vmatprep.subr.bf16.mxu0 0
    %1124 = vmatpush2.bf16.msra.mxu0 0
    %1125 = vmatprep.subr.bf16.mxu0 0
    %1126 = vmatpush2.bf16.msra.mxu0 0
    %1127 = vmatprep.subr.bf16.mxu0 0
    %1128 = vmatpush2.bf16.msra.mxu0 0
    %1129 = vmatprep.mubr.bf16.mxu0 0
    %1130 = vmatmul.mubr.bf16.gmra.mxu0 %v1095
    %v1131 = vpop.f32.mrf.mxu0
    %v1132 = vadd.f32 %v1081, %v1131
    %v1133 = vpop.f32.mrf.mxu0
    %v1134 = vpop.f32.mrf.mxu0
    %v1135 = vpop.f32.mrf.mxu0
    %1136 = vdwg.mxu0
    %v1141 = vunpack.c.l.b16 %v98
    %v1142 = vunpack.c.l.b16 %v99
    %v1143 = vunpack.c.l.b16 %v100
    %v1144 = vunpack.c.l.b16 %v101
    %v1145 = vpack.c.b16 %v1142, %v1141
    %v1146 = vpack.c.b16 %v1144, %v1143
    %1149 = vmatprep.subr.bf16.mxu0 0
    %1150 = vmatpush1.bf16.msra.mxu0 0
    %1151 = vmatprep.subr.bf16.mxu0 0
    %1152 = vmatpush1.bf16.msra.mxu0 0
    %1153 = vmatprep.subr.bf16.mxu0 0
    %1154 = vmatpush1.bf16.msra.mxu0 0
    %1155 = vmatprep.subr.bf16.mxu0 0
    %1156 = vmatpush1.bf16.msra.mxu0 0
    %1157 = vmatprep.subr.bf16.mxu0 0
    %1158 = vmatpush1.bf16.msra.mxu0 0
    %1159 = vmatprep.subr.bf16.mxu0 0
    %1160 = vmatpush1.bf16.msra.mxu0 0
    %1161 = vmatprep.subr.bf16.mxu0 0
    %1162 = vmatpush1.bf16.msra.mxu0 %v1146
    %1163 = vmatprep.subr.bf16.mxu0 0
    %1164 = vmatpush1.bf16.msra.mxu0 %v1145
    %1165 = vmatprep.subr.bf16.mxu0 0
    %1166 = vmatpush2.bf16.msra.mxu0 0
    %1167 = vmatprep.subr.bf16.mxu0 0
    %1168 = vmatpush2.bf16.msra.mxu0 0
    %1169 = vmatprep.subr.bf16.mxu0 0
    %1170 = vmatpush2.bf16.msra.mxu0 0
    %1171 = vmatprep.subr.bf16.mxu0 0
    %1172 = vmatpush2.bf16.msra.mxu0 0
    %1173 = vmatprep.subr.bf16.mxu0 0
    %1174 = vmatpush2.bf16.msra.mxu0 0
    %1175 = vmatprep.subr.bf16.mxu0 0
    %1176 = vmatpush2.bf16.msra.mxu0 0
    %1177 = vmatprep.subr.bf16.mxu0 0
    %1178 = vmatpush2.bf16.msra.mxu0 0
    %1179 = vmatprep.subr.bf16.mxu0 0
    %1180 = vmatpush2.bf16.msra.mxu0 0
    %1181 = vmatprep.mubr.bf16.mxu0 0
    %1182 = vmatmul.mubr.bf16.gmra.mxu0 %v1095
    %v1183 = vpop.f32.mrf.mxu0
    %v1184 = vadd.f32 0.0, %v1183
    %v1185 = vpop.f32.mrf.mxu0
    %v1186 = vpop.f32.mrf.mxu0
    %v1187 = vpop.f32.mrf.mxu0
    %1188 = vdwg.mxu0
    %v1189 = vadd.f32 %v1132, %v1184
    %v1190 = vxor.u32 %v1189, 2147483648
    %v1191 = vmul.f32 %v1190, 1.442695
    %v1192 = vpow.pop %v1191
    %v1193 = vadd.f32 %v1192, 1.0
    %v1194 = vrcp.pop %v1193
    %v1195 = vmul.f32 1.0, %v1194
    %v1196 = vtanh.pop %v1189
    %v1197 = vmul.f32 %v1195, 0.0
    %1199 = vrot.lane.b32.xlu0 %v1196, 64
    %v1200 = vpop.permute.xlu0 %1199
    %v1202 = vmul.f32 %v1195, %v1200
    %1204 = vrot.lane.b32.xlu0 %v1202, 32
    %v1205 = vpop.permute.xlu0 %1204
    %v1207 = vadd.f32 %v1197, %v1205
    %v1208 = vtanh.pop %v1207
    %1210 = vrot.lane.b32.xlu0 %v1208, 64
    %v1211 = vpop.permute.xlu0 %1210
    %v1213 = vmul.f32 %v1195, %v1211
    %v1214 = vld [vmem:[#allocation4] sm:$0xff]
    %vm1215 = vcmp.ne.f32.partialorder %v1214, 0.0
    %1217 = vrot.lane.b32.xlu0 %v1213, 32
    %v1218 = vpop.permute.xlu0 %1217
    %v1220 = vsel %vm1215, %v1218, 0.0
    %1221 = vst.msk [vmem:[#allocation3] sm:$0xff] %vm1075, %v1220
    %v1222 = vsel %vm1215, %v1218, %v1070
    %1224 = vrot.lane.b32.xlu0 %v1207, 96
    %v1225 = vpop.permute.xlu0 %1224
    %v1227 = vsel %vm1215, %v1225, 0.0
    %v1228 = vpack.c.bf16 %v1222, %v1222
    %v1230 = vsel %vm1075, %v1228, 0
    %1232 = vmatprep.subr.bf16.mxu0 0
    %1233 = vmatpush1.bf16.msra.mxu0 0
    %1234 = vmatprep.subr.bf16.mxu0 0
    %1235 = vmatpush1.bf16.msra.mxu0 0
    %1236 = vmatprep.subr.bf16.mxu0 0
    %1237 = vmatpush1.bf16.msra.mxu0 0
    %1238 = vmatprep.subr.bf16.mxu0 0
    %1239 = vmatpush1.bf16.msra.mxu0 0
    %1240 = vmatprep.subr.bf16.mxu0 0
    %1241 = vmatpush1.bf16.msra.mxu0 0
    %1242 = vmatprep.subr.bf16.mxu0 0
    %1243 = vmatpush1.bf16.msra.mxu0 0
    %1244 = vmatprep.subr.bf16.mxu0 0
    %1245 = vmatpush1.bf16.msra.mxu0 %v1146
    %1246 = vmatprep.subr.bf16.mxu0 0
    %1247 = vmatpush1.bf16.msra.mxu0 %v1145
    %1248 = vmatprep.subr.bf16.mxu0 0
    %1249 = vmatpush2.bf16.msra.mxu0 0
    %1250 = vmatprep.subr.bf16.mxu0 0
    %1251 = vmatpush2.bf16.msra.mxu0 0
    %1252 = vmatprep.subr.bf16.mxu0 0
    %1253 = vmatpush2.bf16.msra.mxu0 0
    %1254 = vmatprep.subr.bf16.mxu0 0
    %1255 = vmatpush2.bf16.msra.mxu0 0
    %1256 = vmatprep.subr.bf16.mxu0 0
    %1257 = vmatpush2.bf16.msra.mxu0 0
    %1258 = vmatprep.subr.bf16.mxu0 0
    %1259 = vmatpush2.bf16.msra.mxu0 0
    %1260 = vmatprep.subr.bf16.mxu0 0
    %1261 = vmatpush2.bf16.msra.mxu0 0
    %1262 = vmatprep.subr.bf16.mxu0 0
    %1263 = vmatpush2.bf16.msra.mxu0 0
    %1264 = vmatprep.mubr.bf16.mxu0 0
    %1265 = vmatmul.mubr.bf16.gmra.mxu0 %v1230
    %v1266 = vpop.f32.mrf.mxu0
    %v1267 = vadd.f32 0.0, %v1266
    %v1268 = vpop.f32.mrf.mxu0
    %v1269 = vpop.f32.mrf.mxu0
    %v1270 = vpop.f32.mrf.mxu0
    %1271 = vdwg.mxu0
    %v1272 = vadd.f32 %v1132, %v1267
    %v1273 = vxor.u32 %v1272, 2147483648
    %v1274 = vmul.f32 %v1273, 1.442695
    %v1275 = vpow.pop %v1274
    %v1276 = vadd.f32 %v1275, 1.0
    %v1277 = vrcp.pop %v1276
    %v1278 = vmul.f32 1.0, %v1277
    %v1279 = vtanh.pop %v1272
    %1281 = vrot.lane.b32.xlu0 %v1227, 32
    %v1282 = vpop.permute.xlu0 %1281
    %v1284 = vmul.f32 %v1278, %v1282
    %1286 = vrot.lane.b32.xlu0 %v1279, 64
    %v1287 = vpop.permute.xlu0 %1286
    %v1289 = vmul.f32 %v1278, %v1287
    %1291 = vrot.lane.b32.xlu0 %v1289, 32
    %v1292 = vpop.permute.xlu0 %1291
    %v1294 = vadd.f32 %v1284, %v1292
    %v1295 = vtanh.pop %v1294
    %1297 = vrot.lane.b32.xlu0 %v1295, 64
    %v1298 = vpop.permute.xlu0 %1297
    %v1300 = vmul.f32 %v1278, %v1298
    %s1301 = scalar_lea.vmem [#allocation4], 8
    %v1302 = vld [vmem:[%s1301] sm:$0xff]
    %vm1303 = vcmp.ne.f32.partialorder %v1302, 0.0
    %1305 = vrot.lane.b32.xlu0 %v1300, 32
    %v1306 = vpop.permute.xlu0 %1305
    %v1308 = vsel %vm1303, %v1306, 0.0
    %1309 = vst.msk [vmem:[#allocation3 + $0x8] sm:$0xff] %vm1075, %v1308
    %v1310 = vsel %vm1303, %v1306, %v1222
    %1312 = vrot.lane.b32.xlu0 %v1294, 96
    %v1313 = vpop.permute.xlu0 %1312
    %v1315 = vsel %vm1303, %v1313, %v1227
    %v1316 = vpack.c.bf16 %v1310, %v1310
    %v1318 = vsel %vm1075, %v1316, 0
    %1320 = vmatprep.subr.bf16.mxu0 0
    %1321 = vmatpush1.bf16.msra.mxu0 0
    %1322 = vmatprep.subr.bf16.mxu0 0
    %1323 = vmatpush1.bf16.msra.mxu0 0
    %1324 = vmatprep.subr.bf16.mxu0 0
    %1325 = vmatpush1.bf16.msra.mxu0 0
    %1326 = vmatprep.subr.bf16.mxu0 0
    %1327 = vmatpush1.bf16.msra.mxu0 0
    %1328 = vmatprep.subr.bf16.mxu0 0
    %1329 = vmatpush1.bf16.msra.mxu0 0
    %1330 = vmatprep.subr.bf16.mxu0 0
    %1331 = vmatpush1.bf16.msra.mxu0 0
    %1332 = vmatprep.subr.bf16.mxu0 0
    %1333 = vmatpush1.bf16.msra.mxu0 %v1146
    %1334 = vmatprep.subr.bf16.mxu0 0
    %1335 = vmatpush1.bf16.msra.mxu0 %v1145
    %1336 = vmatprep.subr.bf16.mxu0 0
    %1337 = vmatpush2.bf16.msra.mxu0 0
    %1338 = vmatprep.subr.bf16.mxu0 0
    %1339 = vmatpush2.bf16.msra.mxu0 0
    %1340 = vmatprep.subr.bf16.mxu0 0
    %1341 = vmatpush2.bf16.msra.mxu0 0
    %1342 = vmatprep.subr.bf16.mxu0 0
    %1343 = vmatpush2.bf16.msra.mxu0 0
    %1344 = vmatprep.subr.bf16.mxu0 0
    %1345 = vmatpush2.bf16.msra.mxu0 0
    %1346 = vmatprep.subr.bf16.mxu0 0
    %1347 = vmatpush2.bf16.msra.mxu0 0
    %1348 = vmatprep.subr.bf16.mxu0 0
    %1349 = vmatpush2.bf16.msra.mxu0 0
    %1350 = vmatprep.subr.bf16.mxu0 0
    %1351 = vmatpush2.bf16.msra.mxu0 0
    %1352 = vmatprep.mubr.bf16.mxu0 0
    %1353 = vmatmul.mubr.bf16.gmra.mxu0 %v1318
    %v1354 = vpop.f32.mrf.mxu0
    %v1355 = vadd.f32 0.0, %v1354
    %v1356 = vpop.f32.mrf.mxu0
    %v1357 = vpop.f32.mrf.mxu0
    %v1358 = vpop.f32.mrf.mxu0
    %1359 = vdwg.mxu0
    %v1360 = vadd.f32 %v1132, %v1355
    %v1361 = vxor.u32 %v1360, 2147483648
    %v1362 = vmul.f32 %v1361, 1.442695
    %v1363 = vpow.pop %v1362
    %v1364 = vadd.f32 %v1363, 1.0
    %v1365 = vrcp.pop %v1364
    %v1366 = vmul.f32 1.0, %v1365
    %v1367 = vtanh.pop %v1360
    %1369 = vrot.lane.b32.xlu0 %v1315, 32
    %v1370 = vpop.permute.xlu0 %1369
    %v1372 = vmul.f32 %v1366, %v1370
    %1374 = vrot.lane.b32.xlu0 %v1367, 64
    %v1375 = vpop.permute.xlu0 %1374
    %v1377 = vmul.f32 %v1366, %v1375
    %1379 = vrot.lane.b32.xlu0 %v1377, 32
    %v1380 = vpop.permute.xlu0 %1379
    %v1382 = vadd.f32 %v1372, %v1380
    %v1383 = vtanh.pop %v1382
    %1385 = vrot.lane.b32.xlu0 %v1383, 64
    %v1386 = vpop.permute.xlu0 %1385
    %v1388 = vmul.f32 %v1366, %v1386
    %s1389 = scalar_lea.vmem [#allocation4], 16
    %v1390 = vld [vmem:[%s1389] sm:$0xff]
    %vm1391 = vcmp.ne.f32.partialorder %v1390, 0.0
    %1393 = vrot.lane.b32.xlu0 %v1388, 32
    %v1394 = vpop.permute.xlu0 %1393
    %v1396 = vsel %vm1391, %v1394, 0.0
    %1397 = vst.msk [vmem:[#allocation3 + $0x10] sm:$0xff] %vm1075, %v1396
    %v1398 = vsel %vm1391, %v1394, %v1310
    %1400 = vrot.lane.b32.xlu0 %v1382, 96
    %v1401 = vpop.permute.xlu0 %1400
    %v1403 = vsel %vm1391, %v1401, %v1315
    %v1404 = vpack.c.bf16 %v1398, %v1398
    %v1406 = vsel %vm1075, %v1404, 0
    %1408 = vmatprep.subr.bf16.mxu0 0
    %1409 = vmatpush1.bf16.msra.mxu0 0
    %1410 = vmatprep.subr.bf16.mxu0 0
    %1411 = vmatpush1.bf16.msra.mxu0 0
    %1412 = vmatprep.subr.bf16.mxu0 0
    %1413 = vmatpush1.bf16.msra.mxu0 0
    %1414 = vmatprep.subr.bf16.mxu0 0
    %1415 = vmatpush1.bf16.msra.mxu0 0
    %1416 = vmatprep.subr.bf16.mxu0 0
    %1417 = vmatpush1.bf16.msra.mxu0 0
    %1418 = vmatprep.subr.bf16.mxu0 0
    %1419 = vmatpush1.bf16.msra.mxu0 0
    %1420 = vmatprep.subr.bf16.mxu0 0
    %1421 = vmatpush1.bf16.msra.mxu0 %v1146
    %1422 = vmatprep.subr.bf16.mxu0 0
    %1423 = vmatpush1.bf16.msra.mxu0 %v1145
    %1424 = vmatprep.subr.bf16.mxu0 0
    %1425 = vmatpush2.bf16.msra.mxu0 0
    %1426 = vmatprep.subr.bf16.mxu0 0
    %1427 = vmatpush2.bf16.msra.mxu0 0
    %1428 = vmatprep.subr.bf16.mxu0 0
    %1429 = vmatpush2.bf16.msra.mxu0 0
    %1430 = vmatprep.subr.bf16.mxu0 0
    %1431 = vmatpush2.bf16.msra.mxu0 0
    %1432 = vmatprep.subr.bf16.mxu0 0
    %1433 = vmatpush2.bf16.msra.mxu0 0
    %1434 = vmatprep.subr.bf16.mxu0 0
    %1435 = vmatpush2.bf16.msra.mxu0 0
    %1436 = vmatprep.subr.bf16.mxu0 0
    %1437 = vmatpush2.bf16.msra.mxu0 0
    %1438 = vmatprep.subr.bf16.mxu0 0
    %1439 = vmatpush2.bf16.msra.mxu0 0
    %1440 = vmatprep.mubr.bf16.mxu0 0
    %1441 = vmatmul.mubr.bf16.gmra.mxu0 %v1406
    %v1442 = vpop.f32.mrf.mxu0
    %v1443 = vadd.f32 0.0, %v1442
    %v1444 = vpop.f32.mrf.mxu0
    %v1445 = vpop.f32.mrf.mxu0
    %v1446 = vpop.f32.mrf.mxu0
    %1447 = vdwg.mxu0
    %v1448 = vadd.f32 %v1132, %v1443
    %v1449 = vxor.u32 %v1448, 2147483648
    %v1450 = vmul.f32 %v1449, 1.442695
    %v1451 = vpow.pop %v1450
    %v1452 = vadd.f32 %v1451, 1.0
    %v1453 = vrcp.pop %v1452
    %v1454 = vmul.f32 1.0, %v1453
    %v1455 = vtanh.pop %v1448
    %1457 = vrot.lane.b32.xlu0 %v1403, 32
    %v1458 = vpop.permute.xlu0 %1457
    %v1460 = vmul.f32 %v1454, %v1458
    %1462 = vrot.lane.b32.xlu0 %v1455, 64
    %v1463 = vpop.permute.xlu0 %1462
    %v1465 = vmul.f32 %v1454, %v1463
    %1467 = vrot.lane.b32.xlu0 %v1465, 32
    %v1468 = vpop.permute.xlu0 %1467
    %v1470 = vadd.f32 %v1460, %v1468
    %v1471 = vtanh.pop %v1470
    %1473 = vrot.lane.b32.xlu0 %v1471, 64
    %v1474 = vpop.permute.xlu0 %1473
    %v1476 = vmul.f32 %v1454, %v1474
    %s1477 = scalar_lea.vmem [#allocation4], 24
    %v1478 = vld [vmem:[%s1477] sm:$0xff]
    %vm1479 = vcmp.ne.f32.partialorder %v1478, 0.0
    %1481 = vrot.lane.b32.xlu0 %v1476, 32
    %v1482 = vpop.permute.xlu0 %1481
    %v1484 = vsel %vm1479, %v1482, 0.0
    %1485 = vst.msk [vmem:[#allocation3 + $0x18] sm:$0xff] %vm1075, %v1484
    %v1486 = vsel %vm1479, %v1482, %v1398
    %1488 = vrot.lane.b32.xlu0 %v1470, 96
    %v1489 = vpop.permute.xlu0 %1488
    %v1491 = vsel %vm1479, %v1489, %v1403
    %v1492 = vpack.c.bf16 %v1486, %v1486
    %v1494 = vsel %vm1075, %v1492, 0
    %1496 = vmatprep.subr.bf16.mxu0 0
    %1497 = vmatpush1.bf16.msra.mxu0 0
    %1498 = vmatprep.subr.bf16.mxu0 0
    %1499 = vmatpush1.bf16.msra.mxu0 0
    %1500 = vmatprep.subr.bf16.mxu0 0
    %1501 = vmatpush1.bf16.msra.mxu0 0
    %1502 = vmatprep.subr.bf16.mxu0 0
    %1503 = vmatpush1.bf16.msra.mxu0 0
    %1504 = vmatprep.subr.bf16.mxu0 0
    %1505 = vmatpush1.bf16.msra.mxu0 0
    %1506 = vmatprep.subr.bf16.mxu0 0
    %1507 = vmatpush1.bf16.msra.mxu0 0
    %1508 = vmatprep.subr.bf16.mxu0 0
    %1509 = vmatpush1.bf16.msra.mxu0 %v1146
    %1510 = vmatprep.subr.bf16.mxu0 0
    %1511 = vmatpush1.bf16.msra.mxu0 %v1145
    %1512 = vmatprep.subr.bf16.mxu0 0
    %1513 = vmatpush2.bf16.msra.mxu0 0
    %1514 = vmatprep.subr.bf16.mxu0 0
    %1515 = vmatpush2.bf16.msra.mxu0 0
    %1516 = vmatprep.subr.bf16.mxu0 0
    %1517 = vmatpush2.bf16.msra.mxu0 0
    %1518 = vmatprep.subr.bf16.mxu0 0
    %1519 = vmatpush2.bf16.msra.mxu0 0
    %1520 = vmatprep.subr.bf16.mxu0 0
    %1521 = vmatpush2.bf16.msra.mxu0 0
    %1522 = vmatprep.subr.bf16.mxu0 0
    %1523 = vmatpush2.bf16.msra.mxu0 0
    %1524 = vmatprep.subr.bf16.mxu0 0
    %1525 = vmatpush2.bf16.msra.mxu0 0
    %1526 = vmatprep.subr.bf16.mxu0 0
    %1527 = vmatpush2.bf16.msra.mxu0 0
    %1528 = vmatprep.mubr.bf16.mxu0 0
    %1529 = vmatmul.mubr.bf16.gmra.mxu0 %v1494
    %v1530 = vpop.f32.mrf.mxu0
    %v1531 = vadd.f32 0.0, %v1530
    %v1532 = vpop.f32.mrf.mxu0
    %v1533 = vpop.f32.mrf.mxu0
    %v1534 = vpop.f32.mrf.mxu0
    %1535 = vdwg.mxu0
    %v1536 = vadd.f32 %v1132, %v1531
    %v1537 = vxor.u32 %v1536, 2147483648
    %v1538 = vmul.f32 %v1537, 1.442695
    %v1539 = vpow.pop %v1538
    %v1540 = vadd.f32 %v1539, 1.0
    %v1541 = vrcp.pop %v1540
    %v1542 = vmul.f32 1.0, %v1541
    %v1543 = vtanh.pop %v1536
    %1545 = vrot.lane.b32.xlu0 %v1491, 32
    %v1546 = vpop.permute.xlu0 %1545
    %v1548 = vmul.f32 %v1542, %v1546
    %1550 = vrot.lane.b32.xlu0 %v1543, 64
    %v1551 = vpop.permute.xlu0 %1550
    %v1553 = vmul.f32 %v1542, %v1551
    %1555 = vrot.lane.b32.xlu0 %v1553, 32
    %v1556 = vpop.permute.xlu0 %1555
    %v1558 = vadd.f32 %v1548, %v1556
    %v1559 = vtanh.pop %v1558
    %1561 = vrot.lane.b32.xlu0 %v1559, 64
    %v1562 = vpop.permute.xlu0 %1561
    %v1564 = vmul.f32 %v1542, %v1562
    %s1565 = scalar_lea.vmem [#allocation4], 32
    %v1566 = vld [vmem:[%s1565] sm:$0xff]
    %vm1567 = vcmp.ne.f32.partialorder %v1566, 0.0
    %1569 = vrot.lane.b32.xlu0 %v1564, 32
    %v1570 = vpop.permute.xlu0 %1569
    %v1572 = vsel %vm1567, %v1570, 0.0
    %1573 = vst.msk [vmem:[#allocation3 + $0x20] sm:$0xff] %vm1075, %v1572
    %v1574 = vsel %vm1567, %v1570, %v1486
    %1576 = vrot.lane.b32.xlu0 %v1558, 96
    %v1577 = vpop.permute.xlu0 %1576
    %v1579 = vsel %vm1567, %v1577, %v1491
    %v1580 = vpack.c.bf16 %v1574, %v1574
    %v1582 = vsel %vm1075, %v1580, 0
    %1584 = vmatprep.subr.bf16.mxu0 0
    %1585 = vmatpush1.bf16.msra.mxu0 0
    %1586 = vmatprep.subr.bf16.mxu0 0
    %1587 = vmatpush1.bf16.msra.mxu0 0
    %1588 = vmatprep.subr.bf16.mxu0 0
    %1589 = vmatpush1.bf16.msra.mxu0 0
    %1590 = vmatprep.subr.bf16.mxu0 0
    %1591 = vmatpush1.bf16.msra.mxu0 0
    %1592 = vmatprep.subr.bf16.mxu0 0
    %1593 = vmatpush1.bf16.msra.mxu0 0
    %1594 = vmatprep.subr.bf16.mxu0 0
    %1595 = vmatpush1.bf16.msra.mxu0 0
    %1596 = vmatprep.subr.bf16.mxu0 0
    %1597 = vmatpush1.bf16.msra.mxu0 %v1146
    %1598 = vmatprep.subr.bf16.mxu0 0
    %1599 = vmatpush1.bf16.msra.mxu0 %v1145
    %1600 = vmatprep.subr.bf16.mxu0 0
    %1601 = vmatpush2.bf16.msra.mxu0 0
    %1602 = vmatprep.subr.bf16.mxu0 0
    %1603 = vmatpush2.bf16.msra.mxu0 0
    %1604 = vmatprep.subr.bf16.mxu0 0
    %1605 = vmatpush2.bf16.msra.mxu0 0
    %1606 = vmatprep.subr.bf16.mxu0 0
    %1607 = vmatpush2.bf16.msra.mxu0 0
    %1608 = vmatprep.subr.bf16.mxu0 0
    %1609 = vmatpush2.bf16.msra.mxu0 0
    %1610 = vmatprep.subr.bf16.mxu0 0
    %1611 = vmatpush2.bf16.msra.mxu0 0
    %1612 = vmatprep.subr.bf16.mxu0 0
    %1613 = vmatpush2.bf16.msra.mxu0 0
    %1614 = vmatprep.subr.bf16.mxu0 0
    %1615 = vmatpush2.bf16.msra.mxu0 0
    %1616 = vmatprep.mubr.bf16.mxu0 0
    %1617 = vmatmul.mubr.bf16.gmra.mxu0 %v1582
    %v1618 = vpop.f32.mrf.mxu0
    %v1619 = vadd.f32 0.0, %v1618
    %v1620 = vpop.f32.mrf.mxu0
    %v1621 = vpop.f32.mrf.mxu0
    %v1622 = vpop.f32.mrf.mxu0
    %1623 = vdwg.mxu0
    %v1624 = vadd.f32 %v1132, %v1619
    %v1625 = vxor.u32 %v1624, 2147483648
    %v1626 = vmul.f32 %v1625, 1.442695
    %v1627 = vpow.pop %v1626
    %v1628 = vadd.f32 %v1627, 1.0
    %v1629 = vrcp.pop %v1628
    %v1630 = vmul.f32 1.0, %v1629
    %v1631 = vtanh.pop %v1624
    %1633 = vrot.lane.b32.xlu0 %v1579, 32
    %v1634 = vpop.permute.xlu0 %1633
    %v1636 = vmul.f32 %v1630, %v1634
    %1638 = vrot.lane.b32.xlu0 %v1631, 64
    %v1639 = vpop.permute.xlu0 %1638
    %v1641 = vmul.f32 %v1630, %v1639
    %1643 = vrot.lane.b32.xlu0 %v1641, 32
    %v1644 = vpop.permute.xlu0 %1643
    %v1646 = vadd.f32 %v1636, %v1644
    %v1647 = vtanh.pop %v1646
    %1649 = vrot.lane.b32.xlu0 %v1647, 64
    %v1650 = vpop.permute.xlu0 %1649
    %v1652 = vmul.f32 %v1630, %v1650
    %s1653 = scalar_lea.vmem [#allocation4], 40
    %v1654 = vld [vmem:[%s1653] sm:$0xff]
    %vm1655 = vcmp.ne.f32.partialorder %v1654, 0.0
    %1657 = vrot.lane.b32.xlu0 %v1652, 32
    %v1658 = vpop.permute.xlu0 %1657
    %v1660 = vsel %vm1655, %v1658, 0.0
    %1661 = vst.msk [vmem:[#allocation3 + $0x28] sm:$0xff] %vm1075, %v1660
    %v1662 = vsel %vm1655, %v1658, %v1574
    %1664 = vrot.lane.b32.xlu0 %v1646, 96
    %v1665 = vpop.permute.xlu0 %1664
    %v1667 = vsel %vm1655, %v1665, %v1579
    %v1668 = vpack.c.bf16 %v1662, %v1662
    %v1670 = vsel %vm1075, %v1668, 0
    %1672 = vmatprep.subr.bf16.mxu0 0
    %1673 = vmatpush1.bf16.msra.mxu0 0
    %1674 = vmatprep.subr.bf16.mxu0 0
    %1675 = vmatpush1.bf16.msra.mxu0 0
    %1676 = vmatprep.subr.bf16.mxu0 0
    %1677 = vmatpush1.bf16.msra.mxu0 0
    %1678 = vmatprep.subr.bf16.mxu0 0
    %1679 = vmatpush1.bf16.msra.mxu0 0
    %1680 = vmatprep.subr.bf16.mxu0 0
    %1681 = vmatpush1.bf16.msra.mxu0 0
    %1682 = vmatprep.subr.bf16.mxu0 0
    %1683 = vmatpush1.bf16.msra.mxu0 0
    %1684 = vmatprep.subr.bf16.mxu0 0
    %1685 = vmatpush1.bf16.msra.mxu0 %v1146
    %1686 = vmatprep.subr.bf16.mxu0 0
    %1687 = vmatpush1.bf16.msra.mxu0 %v1145
    %1688 = vmatprep.subr.bf16.mxu0 0
    %1689 = vmatpush2.bf16.msra.mxu0 0
    %1690 = vmatprep.subr.bf16.mxu0 0
    %1691 = vmatpush2.bf16.msra.mxu0 0
    %1692 = vmatprep.subr.bf16.mxu0 0
    %1693 = vmatpush2.bf16.msra.mxu0 0
    %1694 = vmatprep.subr.bf16.mxu0 0
    %1695 = vmatpush2.bf16.msra.mxu0 0
    %1696 = vmatprep.subr.bf16.mxu0 0
    %1697 = vmatpush2.bf16.msra.mxu0 0
    %1698 = vmatprep.subr.bf16.mxu0 0
    %1699 = vmatpush2.bf16.msra.mxu0 0
    %1700 = vmatprep.subr.bf16.mxu0 0
    %1701 = vmatpush2.bf16.msra.mxu0 0
    %1702 = vmatprep.subr.bf16.mxu0 0
    %1703 = vmatpush2.bf16.msra.mxu0 0
    %1704 = vmatprep.mubr.bf16.mxu0 0
    %1705 = vmatmul.mubr.bf16.gmra.mxu0 %v1670
    %v1706 = vpop.f32.mrf.mxu0
    %v1707 = vadd.f32 0.0, %v1706
    %v1708 = vpop.f32.mrf.mxu0
    %v1709 = vpop.f32.mrf.mxu0
    %v1710 = vpop.f32.mrf.mxu0
    %1711 = vdwg.mxu0
    %v1712 = vadd.f32 %v1132, %v1707
    %v1713 = vxor.u32 %v1712, 2147483648
    %v1714 = vmul.f32 %v1713, 1.442695
    %v1715 = vpow.pop %v1714
    %v1716 = vadd.f32 %v1715, 1.0
    %v1717 = vrcp.pop %v1716
    %v1718 = vmul.f32 1.0, %v1717
    %v1719 = vtanh.pop %v1712
    %1721 = vrot.lane.b32.xlu0 %v1667, 32
    %v1722 = vpop.permute.xlu0 %1721
    %v1724 = vmul.f32 %v1718, %v1722
    %1726 = vrot.lane.b32.xlu0 %v1719, 64
    %v1727 = vpop.permute.xlu0 %1726
    %v1729 = vmul.f32 %v1718, %v1727
    %1731 = vrot.lane.b32.xlu0 %v1729, 32
    %v1732 = vpop.permute.xlu0 %1731
    %v1734 = vadd.f32 %v1724, %v1732
    %v1735 = vtanh.pop %v1734
    %1737 = vrot.lane.b32.xlu0 %v1735, 64
    %v1738 = vpop.permute.xlu0 %1737
    %v1740 = vmul.f32 %v1718, %v1738
    %s1741 = scalar_lea.vmem [#allocation4], 48
    %v1742 = vld [vmem:[%s1741] sm:$0xff]
    %vm1743 = vcmp.ne.f32.partialorder %v1742, 0.0
    %1745 = vrot.lane.b32.xlu0 %v1740, 32
    %v1746 = vpop.permute.xlu0 %1745
    %v1748 = vsel %vm1743, %v1746, 0.0
    %1749 = vst.msk [vmem:[#allocation3 + $0x30] sm:$0xff] %vm1075, %v1748
    %v1750 = vsel %vm1743, %v1746, %v1662
    %1752 = vrot.lane.b32.xlu0 %v1734, 96
    %v1753 = vpop.permute.xlu0 %1752
    %v1755 = vsel %vm1743, %v1753, %v1667
    %v1756 = vpack.c.bf16 %v1750, %v1750
    %v1758 = vsel %vm1075, %v1756, 0
    %1760 = vmatprep.subr.bf16.mxu0 0
    %1761 = vmatpush1.bf16.msra.mxu0 0
    %1762 = vmatprep.subr.bf16.mxu0 0
    %1763 = vmatpush1.bf16.msra.mxu0 0
    %1764 = vmatprep.subr.bf16.mxu0 0
    %1765 = vmatpush1.bf16.msra.mxu0 0
    %1766 = vmatprep.subr.bf16.mxu0 0
    %1767 = vmatpush1.bf16.msra.mxu0 0
    %1768 = vmatprep.subr.bf16.mxu0 0
    %1769 = vmatpush1.bf16.msra.mxu0 0
    %1770 = vmatprep.subr.bf16.mxu0 0
    %1771 = vmatpush1.bf16.msra.mxu0 0
    %1772 = vmatprep.subr.bf16.mxu0 0
    %1773 = vmatpush1.bf16.msra.mxu0 %v1146
    %1774 = vmatprep.subr.bf16.mxu0 0
    %1775 = vmatpush1.bf16.msra.mxu0 %v1145
    %1776 = vmatprep.subr.bf16.mxu0 0
    %1777 = vmatpush2.bf16.msra.mxu0 0
    %1778 = vmatprep.subr.bf16.mxu0 0
    %1779 = vmatpush2.bf16.msra.mxu0 0
    %1780 = vmatprep.subr.bf16.mxu0 0
    %1781 = vmatpush2.bf16.msra.mxu0 0
    %1782 = vmatprep.subr.bf16.mxu0 0
    %1783 = vmatpush2.bf16.msra.mxu0 0
    %1784 = vmatprep.subr.bf16.mxu0 0
    %1785 = vmatpush2.bf16.msra.mxu0 0
    %1786 = vmatprep.subr.bf16.mxu0 0
    %1787 = vmatpush2.bf16.msra.mxu0 0
    %1788 = vmatprep.subr.bf16.mxu0 0
    %1789 = vmatpush2.bf16.msra.mxu0 0
    %1790 = vmatprep.subr.bf16.mxu0 0
    %1791 = vmatpush2.bf16.msra.mxu0 0
    %1792 = vmatprep.mubr.bf16.mxu0 0
    %1793 = vmatmul.mubr.bf16.gmra.mxu0 %v1758
    %v1794 = vpop.f32.mrf.mxu0
    %v1795 = vadd.f32 0.0, %v1794
    %v1796 = vpop.f32.mrf.mxu0
    %v1797 = vpop.f32.mrf.mxu0
    %v1798 = vpop.f32.mrf.mxu0
    %1799 = vdwg.mxu0
    %v1800 = vadd.f32 %v1132, %v1795
    %v1801 = vxor.u32 %v1800, 2147483648
    %v1802 = vmul.f32 %v1801, 1.442695
    %v1803 = vpow.pop %v1802
    %v1804 = vadd.f32 %v1803, 1.0
    %v1805 = vrcp.pop %v1804
    %v1806 = vmul.f32 1.0, %v1805
    %v1807 = vtanh.pop %v1800
    %1809 = vrot.lane.b32.xlu0 %v1755, 32
    %v1810 = vpop.permute.xlu0 %1809
    %v1812 = vmul.f32 %v1806, %v1810
    %1814 = vrot.lane.b32.xlu0 %v1807, 64
    %v1815 = vpop.permute.xlu0 %1814
    %v1817 = vmul.f32 %v1806, %v1815
    %1819 = vrot.lane.b32.xlu0 %v1817, 32
    %v1820 = vpop.permute.xlu0 %1819
    %v1822 = vadd.f32 %v1812, %v1820
    %v1823 = vtanh.pop %v1822
    %1825 = vrot.lane.b32.xlu0 %v1823, 64
    %v1826 = vpop.permute.xlu0 %1825
    %v1828 = vmul.f32 %v1806, %v1826
    %s1829 = scalar_lea.vmem [#allocation4], 56
    %v1830 = vld [vmem:[%s1829] sm:$0xff]
    %vm1831 = vcmp.ne.f32.partialorder %v1830, 0.0
    %1833 = vrot.lane.b32.xlu0 %v1828, 32
    %v1834 = vpop.permute.xlu0 %1833
    %v1836 = vsel %vm1831, %v1834, 0.0
    %1837 = vst.msk [vmem:[#allocation3 + $0x38] sm:$0xff] %vm1075, %v1836
    %v1838 = vld [vmem:[#allocation3] sm:$0xff]
    %v1839 = vld [vmem:[#allocation3 + $0x8] sm:$0xff]
    %v1840 = vld [vmem:[#allocation3 + $0x10] sm:$0xff]
    %v1841 = vld [vmem:[#allocation3 + $0x18] sm:$0xff]
    %v1842 = vld [vmem:[#allocation3 + $0x20] sm:$0xff]
    %v1843 = vld [vmem:[#allocation3 + $0x28] sm:$0xff]
    %v1844 = vld [vmem:[#allocation3 + $0x30] sm:$0xff]
    %v1845 = vld [vmem:[#allocation3 + $0x38] sm:$0xff]
    %v1846 = vpack.c.bf16 %v1839, %v1838
    %v1847 = vpack.c.bf16 %v1841, %v1840
    %v1848 = vpack.c.bf16 %v1843, %v1842
    %v1849 = vpack.c.bf16 %v1845, %v1844
    %v1850 = vlaneseq
    %v1851 = vshrl.u32 %v1850, 7
    %v1852 = vsub.s32 0, %v1851
    %v1853 = vrot.slane %v109, %v1852
    %v1858 = vunpack.c.l.b16 %v102
    %v1859 = vunpack.c.l.b16 %v103
    %v1860 = vunpack.c.l.b16 %v104
    %v1861 = vunpack.c.l.b16 %v105
    %v1862 = vpack.c.b16 %v1859, %v1858
    %v1863 = vpack.c.b16 %v1861, %v1860
    %v1867 = vsel %vm1075, %v1846, 0
    %v1870 = vsel %vm1075, %v1847, 0
    %v1873 = vsel %vm1075, %v1848, 0
    %v1876 = vsel %vm1075, %v1849, 0
    %1878 = vmatprep.subr.bf16.mxu0 0
    %1879 = vmatpush1.bf16.msra.mxu0 0
    %1880 = vmatprep.subr.bf16.mxu0 0
    %1881 = vmatpush1.bf16.msra.mxu0 0
    %1882 = vmatprep.subr.bf16.mxu0 0
    %1883 = vmatpush1.bf16.msra.mxu0 0
    %1884 = vmatprep.subr.bf16.mxu0 0
    %1885 = vmatpush1.bf16.msra.mxu0 0
    %1886 = vmatprep.subr.bf16.mxu0 0
    %1887 = vmatpush1.bf16.msra.mxu0 0
    %1888 = vmatprep.subr.bf16.mxu0 0
    %1889 = vmatpush1.bf16.msra.mxu0 0
    %1890 = vmatprep.subr.bf16.mxu0 0
    %1891 = vmatpush1.bf16.msra.mxu0 %v1863
    %1892 = vmatprep.subr.bf16.mxu0 0
    %1893 = vmatpush1.bf16.msra.mxu0 %v1862
    %1894 = vmatprep.subr.bf16.mxu0 0
    %1895 = vmatpush2.bf16.msra.mxu0 0
    %1896 = vmatprep.subr.bf16.mxu0 0
    %1897 = vmatpush2.bf16.msra.mxu0 0
    %1898 = vmatprep.subr.bf16.mxu0 0
    %1899 = vmatpush2.bf16.msra.mxu0 0
    %1900 = vmatprep.subr.bf16.mxu0 0
    %1901 = vmatpush2.bf16.msra.mxu0 0
    %1902 = vmatprep.subr.bf16.mxu0 0
    %1903 = vmatpush2.bf16.msra.mxu0 0
    %1904 = vmatprep.subr.bf16.mxu0 0
    %1905 = vmatpush2.bf16.msra.mxu0 0
    %1906 = vmatprep.subr.bf16.mxu0 0
    %1907 = vmatpush2.bf16.msra.mxu0 0
    %1908 = vmatprep.subr.bf16.mxu0 0
    %1909 = vmatpush2.bf16.msra.mxu0 0
    %1910 = vmatprep.mubr.bf16.mxu0 0
    %1911 = vmatmul.mubr.bf16.gmra.mxu0 %v1867
    %v1912 = vpop.f32.mrf.mxu0
    %v1913 = vadd.f32 %v1853, %v1912
    %v1914 = vpop.f32.mrf.mxu0
    %v1915 = vpop.f32.mrf.mxu0
    %v1916 = vadd.f32 %v1853, %v1915
    %v1917 = vpop.f32.mrf.mxu0
    %1918 = vmatprep.mubr.bf16.mxu0 0
    %1919 = vmatmul.mubr.bf16.gmra.mxu0 %v1870
    %v1920 = vpop.f32.mrf.mxu0
    %v1921 = vadd.f32 %v1853, %v1920
    %v1922 = vpop.f32.mrf.mxu0
    %v1923 = vpop.f32.mrf.mxu0
    %v1924 = vadd.f32 %v1853, %v1923
    %v1925 = vpop.f32.mrf.mxu0
    %1926 = vmatprep.mubr.bf16.mxu0 0
    %1927 = vmatmul.mubr.bf16.gmra.mxu0 %v1873
    %v1928 = vpop.f32.mrf.mxu0
    %v1929 = vadd.f32 %v1853, %v1928
    %v1930 = vpop.f32.mrf.mxu0
    %v1931 = vpop.f32.mrf.mxu0
    %v1932 = vadd.f32 %v1853, %v1931
    %v1933 = vpop.f32.mrf.mxu0
    %1934 = vmatprep.mubr.bf16.mxu0 0
    %1935 = vmatmul.mubr.bf16.gmra.mxu0 %v1876
    %v1936 = vpop.f32.mrf.mxu0
    %v1937 = vadd.f32 %v1853, %v1936
    %v1938 = vpop.f32.mrf.mxu0
    %v1939 = vpop.f32.mrf.mxu0
    %v1940 = vadd.f32 %v1853, %v1939
    %v1941 = vpop.f32.mrf.mxu0
    %1942 = vdwg.mxu0
    %1943 = vst [vmem:[#allocation13] sm:$0xff] %v1913
    %1944 = vst [vmem:[#allocation13 + $0x8] sm:$0xff] %v1916
    %1945 = vst [vmem:[#allocation13 + $0x10] sm:$0xff] %v1921
    %1946 = vst [vmem:[#allocation13 + $0x18] sm:$0xff] %v1924
    %1947 = vst [vmem:[#allocation13 + $0x20] sm:$0xff] %v1929
    %1948 = vst [vmem:[#allocation13 + $0x28] sm:$0xff] %v1932
    %1949 = vst [vmem:[#allocation13 + $0x30] sm:$0xff] %v1937
    %1950 = vst [vmem:[#allocation13 + $0x38] sm:$0xff] %v1940
    %v1951 = vld [vmem:[%s2] sm:$0xff]
    %v1952 = vld [vmem:[%s2 + $0x8] sm:$0xff]
    %v1953 = vld [vmem:[%s2 + $0x10] sm:$0xff]
    %v1954 = vld [vmem:[%s2 + $0x18] sm:$0xff]
    %v1955 = vld [vmem:[%s2 + $0x20] sm:$0xff]
    %v1956 = vld [vmem:[%s2 + $0x28] sm:$0xff]
    %v1957 = vld [vmem:[%s2 + $0x30] sm:$0xff]
    %v1958 = vld [vmem:[%s2 + $0x38] sm:$0xff]
    %v1959 = vld [vmem:[%s1] sm:$0xff]
    %v1960 = vld [vmem:[%s1 + $0x8] sm:$0xff]
    %v1961 = vld [vmem:[%s1 + $0x10] sm:$0xff]
    %v1962 = vld [vmem:[%s1 + $0x18] sm:$0xff]
    %v1963 = vld [vmem:[%s1 + $0x20] sm:$0xff]
    %v1964 = vld [vmem:[%s1 + $0x28] sm:$0xff]
    %v1965 = vld [vmem:[%s1 + $0x30] sm:$0xff]
    %v1966 = vld [vmem:[%s1 + $0x38] sm:$0xff]
    %v1967 = vsub.f32 %v1913, %v1959
    %v1968 = vsub.f32 %v1916, %v1960
    %v1969 = vsub.f32 %v1921, %v1961
    %v1970 = vsub.f32 %v1924, %v1962
    %v1971 = vsub.f32 %v1929, %v1963
    %v1972 = vsub.f32 %v1932, %v1964
    %v1973 = vsub.f32 %v1937, %v1965
    %v1974 = vsub.f32 %v1940, %v1966
    %v1975 = vmul.f32 %v1967, %v1967
    %v1976 = vmul.f32 %v1968, %v1968
    %v1977 = vmul.f32 %v1969, %v1969
    %v1978 = vmul.f32 %v1970, %v1970
    %v1979 = vmul.f32 %v1971, %v1971
    %v1980 = vmul.f32 %v1972, %v1972
    %v1981 = vmul.f32 %v1973, %v1973
    %v1982 = vmul.f32 %v1974, %v1974
    %1984 = vset.pattern.permute.xlu0 0
    %1985 = vperm.xlu0 %1984, %v1951
    %v1986 = vpop.permute.xlu0 %1985
    %1989 = vset.pattern.permute.xlu0 0
    %1990 = vperm.xlu0 %1989, %v1952
    %v1991 = vpop.permute.xlu0 %1990
    %1994 = vset.pattern.permute.xlu0 0
    %1995 = vperm.xlu0 %1994, %v1953
    %v1996 = vpop.permute.xlu0 %1995
    %1999 = vset.pattern.permute.xlu0 0
    %2000 = vperm.xlu0 %1999, %v1954
    %v2001 = vpop.permute.xlu0 %2000
    %2004 = vset.pattern.permute.xlu0 0
    %2005 = vperm.xlu0 %2004, %v1955
    %v2006 = vpop.permute.xlu0 %2005
    %2009 = vset.pattern.permute.xlu0 0
    %2010 = vperm.xlu0 %2009, %v1956
    %v2011 = vpop.permute.xlu0 %2010
    %2014 = vset.pattern.permute.xlu0 0
    %2015 = vperm.xlu0 %2014, %v1957
    %v2016 = vpop.permute.xlu0 %2015
    %2019 = vset.pattern.permute.xlu0 0
    %2020 = vperm.xlu0 %2019, %v1958
    %v2021 = vpop.permute.xlu0 %2020
    %v2023 = vmul.f32 %v1975, %v1986
    %v2024 = vmul.f32 %v1976, %v1991
    %v2025 = vmul.f32 %v1977, %v1996
    %v2026 = vmul.f32 %v1978, %v2001
    %v2027 = vmul.f32 %v1979, %v2006
    %v2028 = vmul.f32 %v1980, %v2011
    %v2029 = vmul.f32 %v1981, %v2016
    %v2030 = vmul.f32 %v1982, %v2021
    %v2031 = vadd.f32 %v2023, 0.0
    %v2032 = vadd.f32 %v1951, 0.0
    %v2033 = vadd.f32 %v2031, %v2024
    %v2034 = vadd.f32 %v2032, %v1952
    %v2035 = vadd.f32 %v2033, %v2025
    %v2036 = vadd.f32 %v2034, %v1953
    %v2037 = vadd.f32 %v2035, %v2026
    %v2038 = vadd.f32 %v2036, %v1954
    %v2039 = vadd.f32 %v2037, %v2027
    %v2040 = vadd.f32 %v2038, %v1955
    %v2041 = vadd.f32 %v2039, %v2028
    %v2042 = vadd.f32 %v2040, %v1956
    %v2043 = vadd.f32 %v2041, %v2029
    %v2044 = vadd.f32 %v2042, %v1957
    %v2045 = vadd.f32 %v2043, %v2030
    %v2046 = vadd.f32 %v2044, %v1958
    %vm2047 = vcmp.gt.f32.partialorder %v2046, 0.0
    %v2048 = vsel %vm2047, %v2046, 1.0
    %2050 = vset.pattern.permute.xlu0 0
    %2051 = vperm.xlu0 %2050, %v2048
    %v2052 = vpop.permute.xlu0 %2051
    %v2054 = vrcp.pop %v2052
    %v2055 = vmul.f32 %v2045, %v2054
    %2056 = vadd.xlane.f32.xlu0 %v2055
    %v2057 = vpop.xlane.xlu0 %2056
    %v2058 = vrot.slane %v2057, 4
    %v2059 = vadd.f32 %v2057, %v2058
    %v2060 = vrot.slane %v2059, 2
    %v2061 = vadd.f32 %v2059, %v2060
    %v2062 = vrot.slane %v2061, 1
    %v2063 = vadd.f32 %v2061, %v2062
    %s2064 = vtos %v2063
    %v2065 = vstv %s2064
    %v2066 = vrcp.pop 16.0
    %v2067 = vmul.f32 %v2065, %v2066
    %vm2068 = vcmask 0
    %2069 = vst.msk [vmem:[#allocation10] sm:$0x1] %vm2068, %v2067
    // Predicated region
    $region46: #{tpu_custom_call.1} parent=1 // pred_check
      _
    $region47: #{tpu_custom_call.1} parent=1 // pred_check_branch
      %2071 = sbr.rel (0) target = $region49
    $region48: #{tpu_custom_call.1} parent=1 // pred_region
      %s2073 = ssub.s32 16, 16
      %2074 = vsyncadd [#allocation6], %s2073
      %s2076 = sshll.u32 [#allocation10], 4
      %s2077 = int_to_ptr.vmem [resolvable:$true] %s2076
      %2079 = dma.vmem_to_hbm [thread:$0]  %s2077, 16, %s8, [#allocation6]
    $region49: #{tpu_custom_call.1} parent=1 // pred_fallthru
      _
    // Predicated region
    $region50: #{tpu_custom_call.1} parent=1 // pred_check
      _
    $region51: #{tpu_custom_call.1} parent=1 // pred_check_branch
      %2081 = sbr.rel (0) target = $region53
    $region52: #{tpu_custom_call.1} parent=1 // pred_region
      %s2083 = ssub.s32 128, 128
      %2084 = vsyncadd [#allocation12], %s2083
      %s2086 = sshll.u32 [#allocation11], 4
      %s2087 = int_to_ptr.vmem [resolvable:$true] %s2086
      %2089 = dma.vmem_to_hbm [thread:$0]  %s2087, 128, %s9, [#allocation12]
    $region53: #{tpu_custom_call.1} parent=1 // pred_fallthru
      _
    // Predicated region
    $region54: #{tpu_custom_call.1} parent=1 // pred_check
      _
    $region55: #{tpu_custom_call.1} parent=1 // pred_check_branch
      %2091 = sbr.rel (0) target = $region57
    $region56: #{tpu_custom_call.1} parent=1 // pred_region
      %s2093 = ssub.s32 1024, 1024
      %2094 = vsyncadd [#allocation12], %s2093
      %s2095 = sshll.u32 [#allocation13], 4
      %s2096 = int_to_ptr.vmem [resolvable:$true] %s2095
      %2101 = dma.vmem_to_hbm [thread:$0]  %s2096, 1024, %s10, [#allocation12], 128, 128, 8
    $region57: #{tpu_custom_call.1} parent=1 // pred_fallthru
      _
    // Predicated region
    $region58: #{tpu_custom_call.1} parent=1 // pred_check
      _
    $region59: #{tpu_custom_call.1} parent=1 // pred_check_branch
      %2103 = sbr.rel (0) target = $region61
    $region60: #{tpu_custom_call.1} parent=1 // pred_region
      %2104 = dma.done [#allocation6], 16
    $region61: #{tpu_custom_call.1} parent=1 // pred_fallthru
      _
    // Predicated region
    $region62: #{tpu_custom_call.1} parent=1 // pred_check
      _
    $region63: #{tpu_custom_call.1} parent=1 // pred_check_branch
      %2106 = sbr.rel (0) target = $region65
    $region64: #{tpu_custom_call.1} parent=1 // pred_region
      %2107 = dma.done [#allocation12], 128
    $region65: #{tpu_custom_call.1} parent=1 // pred_fallthru
      _
    // Predicated region
    $region66: #{tpu_custom_call.1} parent=1 // pred_check
      _
    $region67: #{tpu_custom_call.1} parent=1 // pred_check_branch
      %2109 = sbr.rel (0) target = $region69
    $region68: #{tpu_custom_call.1} parent=1 // pred_region
      %2110 = dma.done [#allocation12], 1024
    $region69: #{tpu_custom_call.1} parent=1 // pred_fallthru
      _
    %2111 = vsyncpa [#allocation5], 1
    %2112 = vsyncpa [#allocation8], 1
    %2113 = vsyncpa [#allocation6], 1
    %2114 = vsyncpa [#allocation12], 1

</llo_original>
